<compile_context>
chip_gen: v6e
topology: v6e:2x2x1
jax: 0.10.0
libtpu: 0.0.40
codegen_flags: <defaults>
</compile_context>

<pallas_src>
import math

import jax
import jax.numpy as jnp
from jax.experimental import pallas as pl
from jax.experimental.pallas import tpu as pltpu

F32 = jnp.float32
EPS = 1e-5


def _vmem_limit_bytes():
    # Per-generation VMEM budget (v7x only has 64 MiB / TensorCore).
    try:
        cap = pltpu.get_tpu_info().vmem_capacity_bytes
        return int(min(cap * 3 // 4, 96 * 1024 * 1024))
    except Exception:
        return 48 * 1024 * 1024


VMEM_LIMIT = _vmem_limit_bytes()


# --------------------------------------------------------------------------- #
# Pallas kernels
# --------------------------------------------------------------------------- #
def conv3x3x3_bn_relu(x, w9, bias, in_scale, in_shift, *, fuse_relu, out_dtype,
                      H, W, max_chunk_lanes=8192):
    """ConvTranspose3d(Cin, Cout, 3, stride=1, padding=1) == 'same' conv with the
    spatially flipped kernel.  The previous layer's BatchNorm(+ReLU) is fused on
    the input side as a per-channel scale/shift.  Emits per-(b, d) partial
    (sum, sumsq) of the outputs for this layer's training-mode BatchNorm.

    x:  (B, D, Cin, H*W)               w9: (9, Cout, 3*Cin)   rows = kd*3 + kh
    y:  (B, D, Cout, H*W) out_dtype    sums: (B, D, Cout, 2)  f32
    """
    B, D, Cin, L = x.shape
    assert L == H * W
    Cout = w9.shape[1]

    # rows per in-kernel chunk: bounds the (3*Cin, R*W) tap temporaries so the
    # same kernel also fits VMEM for production-size planes.
    R = H
    if H * W > max_chunk_lanes:
        for cand in range(H, 0, -1):
            if H % cand == 0 and cand * W <= max_chunk_lanes:
                R = cand
                break
    n_chunks = H // R
    CL = R * W

    def kernel(xm_ref, x0_ref, xp_ref, w_ref, b_ref, sc_ref, sh_ref,
               y_ref, sums_ref):
        d = pl.program_id(1)
        nd = pl.num_programs(1)
        sc = sc_ref[...]
        sh = sh_ref[...]

        wi = jax.lax.broadcasted_iota(jnp.int32, (1, W), 1)
        m_left = jnp.tile((wi > 0).astype(F32), (1, R))       # kw=0 reads w-1
        m_right = jnp.tile((wi < W - 1).astype(F32), (1, R))  # kw=2 reads w+1
        zpad = jnp.zeros((Cin, W + 1), F32)

        # Activate (fused previous BN/ReLU) + zero-pad the three depth planes.
        planes = []
        for kd, ref in enumerate((xm_ref, x0_ref, xp_ref)):
            p = ref[0, 0].astype(F32) * sc + sh
            if fuse_relu:
                p = jnp.maximum(p, 0.0)
            dd = d + (kd - 1)
            p = p * ((dd >= 0) & (dd < nd)).astype(F32)   # zero depth-halo pad
            planes.append(jnp.concatenate([zpad, p, zpad], axis=1))  # (Cin, L+2W+2)

        s1 = jnp.zeros((Cout, 1), F32)
        s2 = jnp.zeros((Cout, 1), F32)
        for c in range(n_chunks):          # static unroll; 1 chunk for small planes
            off = c * CL
            acc = jnp.zeros((Cout, CL), F32)
            for kd in range(3):
                pp = planes[kd]
                for kh in range(3):
                    j0 = (W + 1) + (kh - 1) * W + off
                    t0 = pp[:, j0 - 1: j0 - 1 + CL] * m_left
                    t1 = pp[:, j0: j0 + CL]
                    t2 = pp[:, j0 + 1: j0 + 1 + CL] * m_right
                    tap = jnp.concatenate([t0, t1, t2], axis=0)   # (3*Cin, CL)
                    acc = acc + jnp.dot(w_ref[kd * 3 + kh], tap,
                                        preferred_element_type=F32)
            val = acc + b_ref[...]                                # (Cout, CL)
            y_ref[0, 0, :, off: off + CL] = val.astype(y_ref.dtype)
            s1 = s1 + jnp.sum(val, axis=1, keepdims=True)
            s2 = s2 + jnp.sum(val * val, axis=1, keepdims=True)
        sums_ref[0, 0] = jnp.concatenate([s1, s2], axis=1)

    grid = (B, D)
    x_block = (1, 1, Cin, L)
    in_specs = [
        pl.BlockSpec(x_block, lambda b, d: (b, jnp.maximum(d - 1, 0), 0, 0)),
        pl.BlockSpec(x_block, lambda b, d: (b, d, 0, 0)),
        pl.BlockSpec(x_block, lambda b, d: (b, jnp.minimum(d + 1, D - 1), 0, 0)),
        pl.BlockSpec((9, Cout, 3 * Cin), lambda b, d: (0, 0, 0)),
        pl.BlockSpec((Cout, 1), lambda b, d: (0, 0)),
        pl.BlockSpec((Cin, 1), lambda b, d: (0, 0)),
        pl.BlockSpec((Cin, 1), lambda b, d: (0, 0)),
    ]
    out_specs = (
        pl.BlockSpec((1, 1, Cout, L), lambda b, d: (b, d, 0, 0)),
        pl.BlockSpec((1, 1, Cout, 2), lambda b, d: (b, d, 0, 0)),
    )
    out_shape = (jax.ShapeDtypeStruct((B, D, Cout, L), out_dtype),
                 jax.ShapeDtypeStruct((B, D, Cout, 2), F32))
    return pl.pallas_call(
        kernel, grid=grid, in_specs=in_specs, out_specs=out_specs,
        out_shape=out_shape,
        compiler_params=pltpu.CompilerParams(
            dimension_semantics=("parallel", "parallel"),
            vmem_limit_bytes=VMEM_LIMIT),
    )(x, x, x, w9, bias, in_scale, in_shift)


def upsample_convT(x, w2, bias_exp, in_scale, in_shift, *, out_dtype):
    """ConvTranspose3d(Cin, Cout, kernel=s, stride=s): every input voxel owns a
    disjoint s^3 output block -> one (J, Cin) x (Cin, H*W) matmul per depth plane,
    J = s^3 * Cout (row j = (kd, kh, kw, co)).  Previous BN+ReLU fused on the
    input; per-(b, d) partial (sum, sumsq) emitted for the following BatchNorm.

    x: (B, D, Cin, H*W), w2: (J, Cin) -> y: (B, D, J, H*W), sums: (B, D, J, 2)
    """
    B, D, Cin, L = x.shape
    J = w2.shape[0]

    def kernel(x_ref, w_ref, b_ref, sc_ref, sh_ref, y_ref, sums_ref):
        xin = jnp.maximum(x_ref[0, 0].astype(F32) * sc_ref[...] + sh_ref[...], 0.0)
        y = jnp.dot(w_ref[...], xin, preferred_element_type=F32) + b_ref[...]
        y_ref[0, 0] = y.astype(y_ref.dtype)
        s1 = jnp.sum(y, axis=1, keepdims=True)
        s2 = jnp.sum(y * y, axis=1, keepdims=True)
        sums_ref[0, 0] = jnp.concatenate([s1, s2], axis=1)

    grid = (B, D)
    in_specs = [
        pl.BlockSpec((1, 1, Cin, L), lambda b, d: (b, d, 0, 0)),
        pl.BlockSpec((J, Cin), lambda b, d: (0, 0)),
        pl.BlockSpec((J, 1), lambda b, d: (0, 0)),
        pl.BlockSpec((Cin, 1), lambda b, d: (0, 0)),
        pl.BlockSpec((Cin, 1), lambda b, d: (0, 0)),
    ]
    out_specs = (
        pl.BlockSpec((1, 1, J, L), lambda b, d: (b, d, 0, 0)),
        pl.BlockSpec((1, 1, J, 2), lambda b, d: (b, d, 0, 0)),
    )
    out_shape = (jax.ShapeDtypeStruct((B, D, J, L), out_dtype),
                 jax.ShapeDtypeStruct((B, D, J, 2), F32))
    return pl.pallas_call(
        kernel, grid=grid, in_specs=in_specs, out_specs=out_specs,
        out_shape=out_shape,
        compiler_params=pltpu.CompilerParams(
            dimension_semantics=("parallel", "parallel"),
            vmem_limit_bytes=VMEM_LIMIT),
    )(x, w2, bias_exp, in_scale, in_shift)


def final_conv_sigmoid(x, w_row, bias11, in_scale, in_shift):
    """ConvTranspose3d(Cin, 1, 1) + sigmoid, stage4's BatchNorm+ReLU fused on the
    input side.  One full (b, d) plane per grid step (lane-dense (1, H*W) store).

    x: (B, D, Cin, H*W) -> (B, D, 1, H*W) f32.
    """
    B, D, Cin, L = x.shape

    def kernel(x_ref, w_ref, b_ref, sc_ref, sh_ref, y_ref):
        xin = jnp.maximum(x_ref[0, 0].astype(F32) * sc_ref[...] + sh_ref[...], 0.0)
        out = jnp.dot(w_ref[...], xin, preferred_element_type=F32) + b_ref[...]
        y_ref[0, 0] = jax.nn.sigmoid(out)

    grid = (B, D)
    in_specs = [
        pl.BlockSpec((1, 1, Cin, L), lambda b, d: (b, d, 0, 0)),
        pl.BlockSpec((1, Cin), lambda b, d: (0, 0)),
        pl.BlockSpec((1, 1), lambda b, d: (0, 0)),
        pl.BlockSpec((Cin, 1), lambda b, d: (0, 0)),
        pl.BlockSpec((Cin, 1), lambda b, d: (0, 0)),
    ]
    out_specs = pl.BlockSpec((1, 1, 1, L), lambda b, d: (b, d, 0, 0))
    return pl.pallas_call(
        kernel, grid=grid, in_specs=in_specs, out_specs=out_specs,
        out_shape=jax.ShapeDtypeStruct((B, D, 1, L), F32),
        compiler_params=pltpu.CompilerParams(
            dimension_semantics=("parallel", "parallel"),
            vmem_limit_bytes=VMEM_LIMIT),
    )(x, w_row, bias11, in_scale, in_shift)


# --------------------------------------------------------------------------- #
# JAX glue (BN finalization + inter-stage layout plumbing)
# --------------------------------------------------------------------------- #
def bn_affine(sums, count, gamma, beta):
    """Training-mode BatchNorm affine from (C, 2) [sum, sumsq]."""
    mean = sums[:, 0] / count
    var = jnp.maximum(sums[:, 1] / count - mean * mean, 0.0)   # clamp: cancellation
    scale = gamma / jnp.sqrt(var + EPS)
    shift = beta - mean * scale
    return scale.reshape(-1, 1), shift.reshape(-1, 1)


def shuffle_to_layout(y2, s, Cout, H, W):
    """(B, D, s^3*Cout, H*W) -> next-stage layout (B, D*s, Cout, (H*s)*(W*s))."""
    B, D, J, L = y2.shape
    y = y2.reshape(B, D, s, s, s, Cout, H, W)        # b, d, kd, kh, kw, co, h, w
    y = jnp.transpose(y, (0, 1, 2, 5, 6, 3, 7, 4))   # b, d, kd, co, h, kh, w, kw
    return y.reshape(B, D * s, Cout, (H * s) * (W * s))


# --------------------------------------------------------------------------- #
# Parameters / forward
# --------------------------------------------------------------------------- #
def init_decoder_params(key, cfg):
    chans, strides = cfg["channels"], cfg["strides"]
    p = {}
    keys = jax.random.split(key, 8)

    def convt(k, cin, cout, ksz):
        k1, k2 = jax.random.split(k)
        w = jax.random.normal(k1, (cin, cout, ksz, ksz, ksz), F32) / math.sqrt(cin * ksz ** 3)
        b = 0.1 * jax.random.normal(k2, (cout,), F32)
        return w, b

    # stage0..stage3: ConvTranspose3d(C, C, 3, padding=1)
    for i in range(4):
        C = chans[i]
        w, b = convt(keys[i], C, C, 3)
        w_flip = jnp.transpose(jnp.flip(w, axis=(2, 3, 4)), (2, 3, 4, 1, 0))  # (3,3,3,Co,Ci)
        p[f"s{i}_w"] = jnp.transpose(w_flip, (0, 1, 3, 2, 4)).reshape(9, C, 3 * C)
        p[f"s{i}_b"] = b.reshape(-1, 1)
        p[f"s{i}_gamma"] = jnp.ones((C,), F32)
        p[f"s{i}_beta"] = jnp.zeros((C,), F32)
    # downch0..2: ConvTranspose3d(C, C_next, kernel=stride=s)
    for i in range(3):
        Cin, Cout, s = chans[i], chans[i + 1], strides[i]
        w, b = convt(keys[4 + i], Cin, Cout, s)
        p[f"d{i}_w"] = jnp.transpose(w, (2, 3, 4, 1, 0)).reshape(s ** 3 * Cout, Cin)
        p[f"d{i}_b"] = jnp.tile(b, s ** 3).reshape(-1, 1)
        p[f"d{i}_gamma"] = jnp.ones((Cout,), F32)
        p[f"d{i}_beta"] = jnp.zeros((Cout,), F32)
    # last: ConvTranspose3d(C_last, 1, 1)
    w, b = convt(keys[7], chans[3], 1, 1)
    p["last_w"] = w.reshape(1, chans[3])
    p["last_b"] = b.reshape(1, 1)
    return p


def decoder_forward(z, params, cfg):
    chans = cfg["channels"]
    strides = cfg["strides"]
    act_dt = cfg["act_dtypes"]
    n0 = cfg["base_spatial"]
    B = z.shape[0]
    D = H = W = n0

    # x.view(-1, C, 1, 1, 1) -> nearest upsample x n0 -> (B, D, C, H*W) layout.
    x = jnp.broadcast_to(z[:, None, :, None], (B, D, chans[0], H * W)).astype(act_dt[0])

    sc = jnp.ones((chans[0], 1), F32)
    sh = jnp.zeros((chans[0], 1), F32)
    fuse_relu = False
    for i in range(4):
        y, sums = conv3x3x3_bn_relu(
            x, params[f"s{i}_w"], params[f"s{i}_b"], sc, sh,
            fuse_relu=fuse_relu, out_dtype=act_dt[i], H=H, W=W)
        sc, sh = bn_affine(sums.sum(axis=(0, 1)), float(B * D * H * W),
                           params[f"s{i}_gamma"], params[f"s{i}_beta"])
        fuse_relu = True
        if i < 3:
            s, Cout = strides[i], chans[i + 1]
            y2, sums2 = upsample_convT(y, params[f"d{i}_w"], params[f"d{i}_b"],
                                       sc, sh, out_dtype=act_dt[i + 1])
            sums_co = sums2.sum(axis=(0, 1)).reshape(s ** 3, Cout, 2).sum(axis=0)
            D2, H2, W2 = D * s, H * s, W * s
            sc, sh = bn_affine(sums_co, float(B * D2 * H2 * W2),
                               params[f"d{i}_gamma"], params[f"d{i}_beta"])
            x = shuffle_to_layout(y2, s, Cout, H, W)
            D, H, W = D2, H2, W2
        else:
            x = y

    out = final_conv_sigmoid(x, params["last_w"], params["last_b"], sc, sh)
    out = out.reshape(B, D, 1, H, W)
    return jnp.transpose(out, (0, 2, 1, 3, 4))        # NCDHW


if __name__ == "__main__":
    # Scaled-down config (same structure as the real module, which would be
    # channels=(256,128,64,32), strides=(2,4,4), base_spatial=8 -> 256^3 output).
    cfg = dict(
        channels=(64, 32, 16, 8),
        strides=(2, 2, 2),
        base_spatial=2,
        act_dtypes=(jnp.float32, jnp.float32, jnp.bfloat16, jnp.bfloat16),
    )
    key = jax.random.PRNGKey(0)
    pkey, zkey = jax.random.split(key)
    params = init_decoder_params(pkey, cfg)

    B = 2
    z = jax.random.normal(zkey, (B, cfg["channels"][0]), F32)

    out = decoder_forward(z, params, cfg)
    out = jax.block_until_ready(out)

    n = cfg["base_spatial"]
    for s in cfg["strides"]:
        n *= s
    assert out.shape == (B, 1, n, n, n), out.shape
    assert out.dtype == jnp.float32
    assert bool(jnp.isfinite(out).all())
    assert bool(((out >= 0.0) & (out <= 1.0)).all())
    print("KERNEL_OK")
</pallas_src>

<mosaic_0001>
module attributes {stable_mosaic.version = 11 : i64} {
  func.func @kernel(%arg0: i32, %arg1: i32, %arg2: memref<1x1x64x4xf32, #tpu.memory_space<vmem>>, %arg3: memref<1x1x64x4xf32, #tpu.memory_space<vmem>>, %arg4: memref<1x1x64x4xf32, #tpu.memory_space<vmem>>, %arg5: memref<9x64x192xf32, #tpu.memory_space<vmem>>, %arg6: memref<64x1xf32, #tpu.memory_space<vmem>>, %arg7: memref<64x1xf32, #tpu.memory_space<vmem>>, %arg8: memref<64x1xf32, #tpu.memory_space<vmem>>, %arg9: memref<1x1x64x4xf32, #tpu.memory_space<vmem>>, %arg10: memref<1x1x64x2xf32, #tpu.memory_space<vmem>>) attributes {dimension_semantics = [#tpu.dimension_semantics<parallel>, #tpu.dimension_semantics<parallel>], iteration_bounds = array<i64: 2, 2>, scalar_prefetch = 0 : i64, scratch_operands = 0 : i64, tpu.core_type = #tpu.core_type<tc>, window_params = [{transform_indices = @transform_0, window_bounds = array<i64: 1, 1, 64, 4>}, {transform_indices = @transform_1, window_bounds = array<i64: 1, 1, 64, 4>}, {transform_indices = @transform_2, window_bounds = array<i64: 1, 1, 64, 4>}, {pipeline_mode = #tpu.pipeline_mode<synchronous>, transform_indices = @transform_3, window_bounds = array<i64: 9, 64, 192>}, {pipeline_mode = #tpu.pipeline_mode<synchronous>, transform_indices = @transform_4, window_bounds = array<i64: 64, 1>}, {pipeline_mode = #tpu.pipeline_mode<synchronous>, transform_indices = @transform_5, window_bounds = array<i64: 64, 1>}, {pipeline_mode = #tpu.pipeline_mode<synchronous>, transform_indices = @transform_6, window_bounds = array<i64: 64, 1>}, {transform_indices = @transform_7, window_bounds = array<i64: 1, 1, 64, 4>}, {transform_indices = @transform_8, window_bounds = array<i64: 1, 1, 64, 2>}]} {
    %c0 = arith.constant 0 : index
    %c0_0 = arith.constant 0 : index
    %0 = vector.load %arg7[%c0, %c0_0] : memref<64x1xf32, #tpu.memory_space<vmem>>, vector<64x1xf32>
    %c0_1 = arith.constant 0 : index
    %c0_2 = arith.constant 0 : index
    %1 = vector.load %arg8[%c0_1, %c0_2] : memref<64x1xf32, #tpu.memory_space<vmem>>, vector<64x1xf32>
    %2 = tpu.iota {dimensions = array<i32: 1>} : vector<1x2xi32>
    %c0_i32 = arith.constant 0 : i32
    %3 = vector.broadcast %c0_i32 : i32 to vector<1x2xi32>
    %4 = arith.cmpi sgt, %2, %3 : vector<1x2xi32>
    %5 = arith.extui %4 : vector<1x2xi1> to vector<1x2xi32>
    %6 = arith.sitofp %5 : vector<1x2xi32> to vector<1x2xf32>
    %7 = tpu.concatenate %6, %6 in 1 : vector<1x2xf32>, vector<1x2xf32> -> vector<1x4xf32>
    %c1_i32 = arith.constant 1 : i32
    %8 = vector.broadcast %c1_i32 : i32 to vector<1x2xi32>
    %9 = arith.cmpi slt, %2, %8 : vector<1x2xi32>
    %10 = arith.extui %9 : vector<1x2xi1> to vector<1x2xi32>
    %11 = arith.sitofp %10 : vector<1x2xi32> to vector<1x2xf32>
    %12 = tpu.concatenate %11, %11 in 1 : vector<1x2xf32>, vector<1x2xf32> -> vector<1x4xf32>
    %cst = arith.constant 0.000000e+00 : f32
    %13 = vector.broadcast %cst : f32 to vector<64x3xf32>
    %c0_3 = arith.constant 0 : index
    %c0_4 = arith.constant 0 : index
    %c0_5 = arith.constant 0 : index
    %c0_6 = arith.constant 0 : index
    %14 = vector.load %arg2[%c0_3, %c0_4, %c0_5, %c0_6] : memref<1x1x64x4xf32, #tpu.memory_space<vmem>>, vector<1x1x64x4xf32>
    %15 = vector.shape_cast %14 : vector<1x1x64x4xf32> to vector<64x4xf32>
    %16 = vector.broadcast %0 : vector<64x1xf32> to vector<64x4xf32>
    %17 = arith.mulf %15, %16 : vector<64x4xf32>
    %18 = vector.broadcast %1 : vector<64x1xf32> to vector<64x4xf32>
    %19 = arith.addf %17, %18 : vector<64x4xf32>
    %c-1_i32 = arith.constant -1 : i32
    %20 = arith.addi %arg1, %c-1_i32 : i32
    %c0_i32_7 = arith.constant 0 : i32
    %21 = arith.cmpi sge, %20, %c0_i32_7 : i32
    %c2_i32 = arith.constant 2 : i32
    %22 = arith.cmpi slt, %20, %c2_i32 : i32
    %23 = arith.andi %21, %22 : i1
    %24 = arith.extui %23 : i1 to i32
    %25 = arith.sitofp %24 : i32 to f32
    %26 = vector.broadcast %25 : f32 to vector<64x4xf32>
    %27 = arith.mulf %19, %26 : vector<64x4xf32>
    %28 = tpu.concatenate %13, %27, %13 in 1 : vector<64x3xf32>, vector<64x4xf32>, vector<64x3xf32> -> vector<64x10xf32>
    %c0_8 = arith.constant 0 : index
    %c0_9 = arith.constant 0 : index
    %c0_10 = arith.constant 0 : index
    %c0_11 = arith.constant 0 : index
    %29 = vector.load %arg3[%c0_8, %c0_9, %c0_10, %c0_11] : memref<1x1x64x4xf32, #tpu.memory_space<vmem>>, vector<1x1x64x4xf32>
    %30 = vector.shape_cast %29 : vector<1x1x64x4xf32> to vector<64x4xf32>
    %31 = vector.broadcast %0 : vector<64x1xf32> to vector<64x4xf32>
    %32 = arith.mulf %30, %31 : vector<64x4xf32>
    %33 = vector.broadcast %1 : vector<64x1xf32> to vector<64x4xf32>
    %34 = arith.addf %32, %33 : vector<64x4xf32>
    %c0_i32_12 = arith.constant 0 : i32
    %35 = arith.addi %arg1, %c0_i32_12 : i32
    %c0_i32_13 = arith.constant 0 : i32
    %36 = arith.cmpi sge, %35, %c0_i32_13 : i32
    %c2_i32_14 = arith.constant 2 : i32
    %37 = arith.cmpi slt, %35, %c2_i32_14 : i32
    %38 = arith.andi %36, %37 : i1
    %39 = arith.extui %38 : i1 to i32
    %40 = arith.sitofp %39 : i32 to f32
    %41 = vector.broadcast %40 : f32 to vector<64x4xf32>
    %42 = arith.mulf %34, %41 : vector<64x4xf32>
    %43 = tpu.concatenate %13, %42, %13 in 1 : vector<64x3xf32>, vector<64x4xf32>, vector<64x3xf32> -> vector<64x10xf32>
    %c0_15 = arith.constant 0 : index
    %c0_16 = arith.constant 0 : index
    %c0_17 = arith.constant 0 : index
    %c0_18 = arith.constant 0 : index
    %44 = vector.load %arg4[%c0_15, %c0_16, %c0_17, %c0_18] : memref<1x1x64x4xf32, #tpu.memory_space<vmem>>, vector<1x1x64x4xf32>
    %45 = vector.shape_cast %44 : vector<1x1x64x4xf32> to vector<64x4xf32>
    %46 = vector.broadcast %0 : vector<64x1xf32> to vector<64x4xf32>
    %47 = arith.mulf %45, %46 : vector<64x4xf32>
    %48 = vector.broadcast %1 : vector<64x1xf32> to vector<64x4xf32>
    %49 = arith.addf %47, %48 : vector<64x4xf32>
    %c1_i32_19 = arith.constant 1 : i32
    %50 = arith.addi %arg1, %c1_i32_19 : i32
    %c0_i32_20 = arith.constant 0 : i32
    %51 = arith.cmpi sge, %50, %c0_i32_20 : i32
    %c2_i32_21 = arith.constant 2 : i32
    %52 = arith.cmpi slt, %50, %c2_i32_21 : i32
    %53 = arith.andi %51, %52 : i1
    %54 = arith.extui %53 : i1 to i32
    %55 = arith.sitofp %54 : i32 to f32
    %56 = vector.broadcast %55 : f32 to vector<64x4xf32>
    %57 = arith.mulf %49, %56 : vector<64x4xf32>
    %58 = tpu.concatenate %13, %57, %13 in 1 : vector<64x3xf32>, vector<64x4xf32>, vector<64x3xf32> -> vector<64x10xf32>
    %cst_22 = arith.constant 0.000000e+00 : f32
    %59 = vector.broadcast %cst_22 : f32 to vector<64x1xf32>
    %cst_23 = arith.constant 0.000000e+00 : f32
    %60 = vector.broadcast %cst_23 : f32 to vector<64x1xf32>
    %cst_24 = arith.constant 0.000000e+00 : f32
    %61 = vector.broadcast %cst_24 : f32 to vector<64x4xf32>
    %62 = vector.extract_strided_slice %28 {offsets = [0, 0], sizes = [64, 4], strides = [1, 1]} : vector<64x10xf32> to vector<64x4xf32>
    %63 = vector.broadcast %7 : vector<1x4xf32> to vector<64x4xf32>
    %64 = arith.mulf %62, %63 : vector<64x4xf32>
    %65 = vector.extract_strided_slice %28 {offsets = [0, 1], sizes = [64, 4], strides = [1, 1]} : vector<64x10xf32> to vector<64x4xf32>
    %66 = vector.extract_strided_slice %28 {offsets = [0, 2], sizes = [64, 4], strides = [1, 1]} : vector<64x10xf32> to vector<64x4xf32>
    %67 = vector.broadcast %12 : vector<1x4xf32> to vector<64x4xf32>
    %68 = arith.mulf %66, %67 : vector<64x4xf32>
    %69 = tpu.concatenate %64, %65, %68 in 0 : vector<64x4xf32>, vector<64x4xf32>, vector<64x4xf32> -> vector<192x4xf32>
    %c0_25 = arith.constant 0 : index
    %c0_26 = arith.constant 0 : index
    %c0_27 = arith.constant 0 : index
    %70 = vector.load %arg5[%c0_25, %c0_26, %c0_27] : memref<9x64x192xf32, #tpu.memory_space<vmem>>, vector<1x64x192xf32>
    %71 = vector.shape_cast %70 : vector<1x64x192xf32> to vector<64x192xf32>
    %cst_28 = arith.constant dense<0.000000e+00> : vector<64x4xf32>
    %72 = tpu.matmul %71, %69, %cst_28 {dimension_numbers = #tpu.dot_dimension_numbers<[1], [0], [0], [1], [0, 0, 1, 1], [], []>} : vector<64x192xf32>, vector<192x4xf32>, vector<64x4xf32> -> vector<64x4xf32>
    %73 = arith.addf %61, %72 : vector<64x4xf32>
    %74 = vector.extract_strided_slice %28 {offsets = [0, 2], sizes = [64, 4], strides = [1, 1]} : vector<64x10xf32> to vector<64x4xf32>
    %75 = vector.broadcast %7 : vector<1x4xf32> to vector<64x4xf32>
    %76 = arith.mulf %74, %75 : vector<64x4xf32>
    %77 = vector.extract_strided_slice %28 {offsets = [0, 3], sizes = [64, 4], strides = [1, 1]} : vector<64x10xf32> to vector<64x4xf32>
    %78 = vector.extract_strided_slice %28 {offsets = [0, 4], sizes = [64, 4], strides = [1, 1]} : vector<64x10xf32> to vector<64x4xf32>
    %79 = vector.broadcast %12 : vector<1x4xf32> to vector<64x4xf32>
    %80 = arith.mulf %78, %79 : vector<64x4xf32>
    %81 = tpu.concatenate %76, %77, %80 in 0 : vector<64x4xf32>, vector<64x4xf32>, vector<64x4xf32> -> vector<192x4xf32>
    %c1 = arith.constant 1 : index
    %c0_29 = arith.constant 0 : index
    %c0_30 = arith.constant 0 : index
    %82 = vector.load %arg5[%c1, %c0_29, %c0_30] : memref<9x64x192xf32, #tpu.memory_space<vmem>>, vector<1x64x192xf32>
    %83 = vector.shape_cast %82 : vector<1x64x192xf32> to vector<64x192xf32>
    %cst_31 = arith.constant dense<0.000000e+00> : vector<64x4xf32>
    %84 = tpu.matmul %83, %81, %cst_31 {dimension_numbers = #tpu.dot_dimension_numbers<[1], [0], [0], [1], [0, 0, 1, 1], [], []>} : vector<64x192xf32>, vector<192x4xf32>, vector<64x4xf32> -> vector<64x4xf32>
    %85 = arith.addf %73, %84 : vector<64x4xf32>
    %86 = vector.extract_strided_slice %28 {offsets = [0, 4], sizes = [64, 4], strides = [1, 1]} : vector<64x10xf32> to vector<64x4xf32>
    %87 = vector.broadcast %7 : vector<1x4xf32> to vector<64x4xf32>
    %88 = arith.mulf %86, %87 : vector<64x4xf32>
    %89 = vector.extract_strided_slice %28 {offsets = [0, 5], sizes = [64, 4], strides = [1, 1]} : vector<64x10xf32> to vector<64x4xf32>
    %90 = vector.extract_strided_slice %28 {offsets = [0, 6], sizes = [64, 4], strides = [1, 1]} : vector<64x10xf32> to vector<64x4xf32>
    %91 = vector.broadcast %12 : vector<1x4xf32> to vector<64x4xf32>
    %92 = arith.mulf %90, %91 : vector<64x4xf32>
    %93 = tpu.concatenate %88, %89, %92 in 0 : vector<64x4xf32>, vector<64x4xf32>, vector<64x4xf32> -> vector<192x4xf32>
    %c2 = arith.constant 2 : index
    %c0_32 = arith.constant 0 : index
    %c0_33 = arith.constant 0 : index
    %94 = vector.load %arg5[%c2, %c0_32, %c0_33] : memref<9x64x192xf32, #tpu.memory_space<vmem>>, vector<1x64x192xf32>
    %95 = vector.shape_cast %94 : vector<1x64x192xf32> to vector<64x192xf32>
    %cst_34 = arith.constant dense<0.000000e+00> : vector<64x4xf32>
    %96 = tpu.matmul %95, %93, %cst_34 {dimension_numbers = #tpu.dot_dimension_numbers<[1], [0], [0], [1], [0, 0, 1, 1], [], []>} : vector<64x192xf32>, vector<192x4xf32>, vector<64x4xf32> -> vector<64x4xf32>
    %97 = arith.addf %85, %96 : vector<64x4xf32>
    %98 = vector.extract_strided_slice %43 {offsets = [0, 0], sizes = [64, 4], strides = [1, 1]} : vector<64x10xf32> to vector<64x4xf32>
    %99 = vector.broadcast %7 : vector<1x4xf32> to vector<64x4xf32>
    %100 = arith.mulf %98, %99 : vector<64x4xf32>
    %101 = vector.extract_strided_slice %43 {offsets = [0, 1], sizes = [64, 4], strides = [1, 1]} : vector<64x10xf32> to vector<64x4xf32>
    %102 = vector.extract_strided_slice %43 {offsets = [0, 2], sizes = [64, 4], strides = [1, 1]} : vector<64x10xf32> to vector<64x4xf32>
    %103 = vector.broadcast %12 : vector<1x4xf32> to vector<64x4xf32>
    %104 = arith.mulf %102, %103 : vector<64x4xf32>
    %105 = tpu.concatenate %100, %101, %104 in 0 : vector<64x4xf32>, vector<64x4xf32>, vector<64x4xf32> -> vector<192x4xf32>
    %c3 = arith.constant 3 : index
    %c0_35 = arith.constant 0 : index
    %c0_36 = arith.constant 0 : index
    %106 = vector.load %arg5[%c3, %c0_35, %c0_36] : memref<9x64x192xf32, #tpu.memory_space<vmem>>, vector<1x64x192xf32>
    %107 = vector.shape_cast %106 : vector<1x64x192xf32> to vector<64x192xf32>
    %cst_37 = arith.constant dense<0.000000e+00> : vector<64x4xf32>
    %108 = tpu.matmul %107, %105, %cst_37 {dimension_numbers = #tpu.dot_dimension_numbers<[1], [0], [0], [1], [0, 0, 1, 1], [], []>} : vector<64x192xf32>, vector<192x4xf32>, vector<64x4xf32> -> vector<64x4xf32>
    %109 = arith.addf %97, %108 : vector<64x4xf32>
    %110 = vector.extract_strided_slice %43 {offsets = [0, 2], sizes = [64, 4], strides = [1, 1]} : vector<64x10xf32> to vector<64x4xf32>
    %111 = vector.broadcast %7 : vector<1x4xf32> to vector<64x4xf32>
    %112 = arith.mulf %110, %111 : vector<64x4xf32>
    %113 = vector.extract_strided_slice %43 {offsets = [0, 3], sizes = [64, 4], strides = [1, 1]} : vector<64x10xf32> to vector<64x4xf32>
    %114 = vector.extract_strided_slice %43 {offsets = [0, 4], sizes = [64, 4], strides = [1, 1]} : vector<64x10xf32> to vector<64x4xf32>
    %115 = vector.broadcast %12 : vector<1x4xf32> to vector<64x4xf32>
    %116 = arith.mulf %114, %115 : vector<64x4xf32>
    %117 = tpu.concatenate %112, %113, %116 in 0 : vector<64x4xf32>, vector<64x4xf32>, vector<64x4xf32> -> vector<192x4xf32>
    %c4 = arith.constant 4 : index
    %c0_38 = arith.constant 0 : index
    %c0_39 = arith.constant 0 : index
    %118 = vector.load %arg5[%c4, %c0_38, %c0_39] : memref<9x64x192xf32, #tpu.memory_space<vmem>>, vector<1x64x192xf32>
    %119 = vector.shape_cast %118 : vector<1x64x192xf32> to vector<64x192xf32>
    %cst_40 = arith.constant dense<0.000000e+00> : vector<64x4xf32>
    %120 = tpu.matmul %119, %117, %cst_40 {dimension_numbers = #tpu.dot_dimension_numbers<[1], [0], [0], [1], [0, 0, 1, 1], [], []>} : vector<64x192xf32>, vector<192x4xf32>, vector<64x4xf32> -> vector<64x4xf32>
    %121 = arith.addf %109, %120 : vector<64x4xf32>
    %122 = vector.extract_strided_slice %43 {offsets = [0, 4], sizes = [64, 4], strides = [1, 1]} : vector<64x10xf32> to vector<64x4xf32>
    %123 = vector.broadcast %7 : vector<1x4xf32> to vector<64x4xf32>
    %124 = arith.mulf %122, %123 : vector<64x4xf32>
    %125 = vector.extract_strided_slice %43 {offsets = [0, 5], sizes = [64, 4], strides = [1, 1]} : vector<64x10xf32> to vector<64x4xf32>
    %126 = vector.extract_strided_slice %43 {offsets = [0, 6], sizes = [64, 4], strides = [1, 1]} : vector<64x10xf32> to vector<64x4xf32>
    %127 = vector.broadcast %12 : vector<1x4xf32> to vector<64x4xf32>
    %128 = arith.mulf %126, %127 : vector<64x4xf32>
    %129 = tpu.concatenate %124, %125, %128 in 0 : vector<64x4xf32>, vector<64x4xf32>, vector<64x4xf32> -> vector<192x4xf32>
    %c5 = arith.constant 5 : index
    %c0_41 = arith.constant 0 : index
    %c0_42 = arith.constant 0 : index
    %130 = vector.load %arg5[%c5, %c0_41, %c0_42] : memref<9x64x192xf32, #tpu.memory_space<vmem>>, vector<1x64x192xf32>
    %131 = vector.shape_cast %130 : vector<1x64x192xf32> to vector<64x192xf32>
    %cst_43 = arith.constant dense<0.000000e+00> : vector<64x4xf32>
    %132 = tpu.matmul %131, %129, %cst_43 {dimension_numbers = #tpu.dot_dimension_numbers<[1], [0], [0], [1], [0, 0, 1, 1], [], []>} : vector<64x192xf32>, vector<192x4xf32>, vector<64x4xf32> -> vector<64x4xf32>
    %133 = arith.addf %121, %132 : vector<64x4xf32>
    %134 = vector.extract_strided_slice %58 {offsets = [0, 0], sizes = [64, 4], strides = [1, 1]} : vector<64x10xf32> to vector<64x4xf32>
    %135 = vector.broadcast %7 : vector<1x4xf32> to vector<64x4xf32>
    %136 = arith.mulf %134, %135 : vector<64x4xf32>
    %137 = vector.extract_strided_slice %58 {offsets = [0, 1], sizes = [64, 4], strides = [1, 1]} : vector<64x10xf32> to vector<64x4xf32>
    %138 = vector.extract_strided_slice %58 {offsets = [0, 2], sizes = [64, 4], strides = [1, 1]} : vector<64x10xf32> to vector<64x4xf32>
    %139 = vector.broadcast %12 : vector<1x4xf32> to vector<64x4xf32>
    %140 = arith.mulf %138, %139 : vector<64x4xf32>
    %141 = tpu.concatenate %136, %137, %140 in 0 : vector<64x4xf32>, vector<64x4xf32>, vector<64x4xf32> -> vector<192x4xf32>
    %c6 = arith.constant 6 : index
    %c0_44 = arith.constant 0 : index
    %c0_45 = arith.constant 0 : index
    %142 = vector.load %arg5[%c6, %c0_44, %c0_45] : memref<9x64x192xf32, #tpu.memory_space<vmem>>, vector<1x64x192xf32>
    %143 = vector.shape_cast %142 : vector<1x64x192xf32> to vector<64x192xf32>
    %cst_46 = arith.constant dense<0.000000e+00> : vector<64x4xf32>
    %144 = tpu.matmul %143, %141, %cst_46 {dimension_numbers = #tpu.dot_dimension_numbers<[1], [0], [0], [1], [0, 0, 1, 1], [], []>} : vector<64x192xf32>, vector<192x4xf32>, vector<64x4xf32> -> vector<64x4xf32>
    %145 = arith.addf %133, %144 : vector<64x4xf32>
    %146 = vector.extract_strided_slice %58 {offsets = [0, 2], sizes = [64, 4], strides = [1, 1]} : vector<64x10xf32> to vector<64x4xf32>
    %147 = vector.broadcast %7 : vector<1x4xf32> to vector<64x4xf32>
    %148 = arith.mulf %146, %147 : vector<64x4xf32>
    %149 = vector.extract_strided_slice %58 {offsets = [0, 3], sizes = [64, 4], strides = [1, 1]} : vector<64x10xf32> to vector<64x4xf32>
    %150 = vector.extract_strided_slice %58 {offsets = [0, 4], sizes = [64, 4], strides = [1, 1]} : vector<64x10xf32> to vector<64x4xf32>
    %151 = vector.broadcast %12 : vector<1x4xf32> to vector<64x4xf32>
    %152 = arith.mulf %150, %151 : vector<64x4xf32>
    %153 = tpu.concatenate %148, %149, %152 in 0 : vector<64x4xf32>, vector<64x4xf32>, vector<64x4xf32> -> vector<192x4xf32>
    %c7 = arith.constant 7 : index
    %c0_47 = arith.constant 0 : index
    %c0_48 = arith.constant 0 : index
    %154 = vector.load %arg5[%c7, %c0_47, %c0_48] : memref<9x64x192xf32, #tpu.memory_space<vmem>>, vector<1x64x192xf32>
    %155 = vector.shape_cast %154 : vector<1x64x192xf32> to vector<64x192xf32>
    %cst_49 = arith.constant dense<0.000000e+00> : vector<64x4xf32>
    %156 = tpu.matmul %155, %153, %cst_49 {dimension_numbers = #tpu.dot_dimension_numbers<[1], [0], [0], [1], [0, 0, 1, 1], [], []>} : vector<64x192xf32>, vector<192x4xf32>, vector<64x4xf32> -> vector<64x4xf32>
    %157 = arith.addf %145, %156 : vector<64x4xf32>
    %158 = vector.extract_strided_slice %58 {offsets = [0, 4], sizes = [64, 4], strides = [1, 1]} : vector<64x10xf32> to vector<64x4xf32>
    %159 = vector.broadcast %7 : vector<1x4xf32> to vector<64x4xf32>
    %160 = arith.mulf %158, %159 : vector<64x4xf32>
    %161 = vector.extract_strided_slice %58 {offsets = [0, 5], sizes = [64, 4], strides = [1, 1]} : vector<64x10xf32> to vector<64x4xf32>
    %162 = vector.extract_strided_slice %58 {offsets = [0, 6], sizes = [64, 4], strides = [1, 1]} : vector<64x10xf32> to vector<64x4xf32>
    %163 = vector.broadcast %12 : vector<1x4xf32> to vector<64x4xf32>
    %164 = arith.mulf %162, %163 : vector<64x4xf32>
    %165 = tpu.concatenate %160, %161, %164 in 0 : vector<64x4xf32>, vector<64x4xf32>, vector<64x4xf32> -> vector<192x4xf32>
    %c8 = arith.constant 8 : index
    %c0_50 = arith.constant 0 : index
    %c0_51 = arith.constant 0 : index
    %166 = vector.load %arg5[%c8, %c0_50, %c0_51] : memref<9x64x192xf32, #tpu.memory_space<vmem>>, vector<1x64x192xf32>
    %167 = vector.shape_cast %166 : vector<1x64x192xf32> to vector<64x192xf32>
    %cst_52 = arith.constant dense<0.000000e+00> : vector<64x4xf32>
    %168 = tpu.matmul %167, %165, %cst_52 {dimension_numbers = #tpu.dot_dimension_numbers<[1], [0], [0], [1], [0, 0, 1, 1], [], []>} : vector<64x192xf32>, vector<192x4xf32>, vector<64x4xf32> -> vector<64x4xf32>
    %169 = arith.addf %157, %168 : vector<64x4xf32>
    %c0_53 = arith.constant 0 : index
    %c0_54 = arith.constant 0 : index
    %170 = vector.load %arg6[%c0_53, %c0_54] : memref<64x1xf32, #tpu.memory_space<vmem>>, vector<64x1xf32>
    %171 = vector.broadcast %170 : vector<64x1xf32> to vector<64x4xf32>
    %172 = arith.addf %169, %171 : vector<64x4xf32>
    %c0_55 = arith.constant 0 : index
    %c0_56 = arith.constant 0 : index
    %c0_57 = arith.constant 0 : index
    %c0_58 = arith.constant 0 : index
    %173 = vector.load %arg9[%c0_55, %c0_56, %c0_57, %c0_58] : memref<1x1x64x4xf32, #tpu.memory_space<vmem>>, vector<1x1x64x4xf32>
    %174 = vector.shape_cast %173 : vector<1x1x64x4xf32> to vector<64x4xf32>
    %175 = vector.shape_cast %172 : vector<64x4xf32> to vector<1x1x64x4xf32>
    tpu.vector_store %arg9[%c0_55, %c0_56, %c0_57, %c0_58], %175 {strides = array<i32>} : memref<1x1x64x4xf32, #tpu.memory_space<vmem>>, vector<1x1x64x4xf32>,
    %cst_59 = arith.constant dense<0.000000e+00> : vector<64xf32>
    %176 = vector.multi_reduction <add>, %172, %cst_59 [1] : vector<64x4xf32> to vector<64xf32>
    %177 = vector.shape_cast %176 : vector<64xf32> to vector<64x1xf32>
    %178 = arith.addf %59, %177 : vector<64x1xf32>
    %179 = arith.mulf %172, %172 : vector<64x4xf32>
    %cst_60 = arith.constant dense<0.000000e+00> : vector<64xf32>
    %180 = vector.multi_reduction <add>, %179, %cst_60 [1] : vector<64x4xf32> to vector<64xf32>
    %181 = vector.shape_cast %180 : vector<64xf32> to vector<64x1xf32>
    %182 = arith.addf %60, %181 : vector<64x1xf32>
    %183 = tpu.concatenate %178, %182 in 1 : vector<64x1xf32>, vector<64x1xf32> -> vector<64x2xf32>
    %c0_61 = arith.constant 0 : index
    %c0_62 = arith.constant 0 : index
    %c0_63 = arith.constant 0 : index
    %c0_64 = arith.constant 0 : index
    %184 = vector.load %arg10[%c0_61, %c0_62, %c0_63, %c0_64] : memref<1x1x64x2xf32, #tpu.memory_space<vmem>>, vector<1x1x64x2xf32>
    %185 = vector.shape_cast %184 : vector<1x1x64x2xf32> to vector<64x2xf32>
    %186 = vector.shape_cast %183 : vector<64x2xf32> to vector<1x1x64x2xf32>
    tpu.vector_store %arg10[%c0_61, %c0_62, %c0_63, %c0_64], %186 {strides = array<i32>} : memref<1x1x64x2xf32, #tpu.memory_space<vmem>>, vector<1x1x64x2xf32>,
    return
  }
  func.func @transform_0(%arg0: i32, %arg1: i32) -> (i32, i32, i32, i32) {
    %c1_i32 = arith.constant 1 : i32
    %0 = arith.subi %arg1, %c1_i32 : i32
    %c0_i32 = arith.constant 0 : i32
    %1 = arith.maxsi %0, %c0_i32 : i32
    %c0_i32_0 = arith.constant 0 : i32
    %c0_i32_1 = arith.constant 0 : i32
    %c0_i32_2 = arith.constant 0 : i32
    return %arg0, %1, %c0_i32_0, %c0_i32_1 : i32, i32, i32, i32
  }
  func.func @transform_1(%arg0: i32, %arg1: i32) -> (i32, i32, i32, i32) {
    %c0_i32 = arith.constant 0 : i32
    %c0_i32_0 = arith.constant 0 : i32
    %c0_i32_1 = arith.constant 0 : i32
    return %arg0, %arg1, %c0_i32, %c0_i32_0 : i32, i32, i32, i32
  }
  func.func @transform_2(%arg0: i32, %arg1: i32) -> (i32, i32, i32, i32) {
    %c1_i32 = arith.constant 1 : i32
    %0 = arith.addi %arg1, %c1_i32 : i32
    %c1_i32_0 = arith.constant 1 : i32
    %1 = arith.minsi %0, %c1_i32_0 : i32
    %c0_i32 = arith.constant 0 : i32
    %c0_i32_1 = arith.constant 0 : i32
    %c0_i32_2 = arith.constant 0 : i32
    return %arg0, %1, %c0_i32, %c0_i32_1 : i32, i32, i32, i32
  }
  func.func @transform_3(%arg0: i32, %arg1: i32) -> (i32, i32, i32) {
    %c0_i32 = arith.constant 0 : i32
    %c0_i32_0 = arith.constant 0 : i32
    %c0_i32_1 = arith.constant 0 : i32
    %c0_i32_2 = arith.constant 0 : i32
    return %c0_i32, %c0_i32_0, %c0_i32_1 : i32, i32, i32
  }
  func.func @transform_4(%arg0: i32, %arg1: i32) -> (i32, i32) {
    %c0_i32 = arith.constant 0 : i32
    %c0_i32_0 = arith.constant 0 : i32
    %c0_i32_1 = arith.constant 0 : i32
    return %c0_i32, %c0_i32_0 : i32, i32
  }
  func.func @transform_5(%arg0: i32, %arg1: i32) -> (i32, i32) {
    %c0_i32 = arith.constant 0 : i32
    %c0_i32_0 = arith.constant 0 : i32
    %c0_i32_1 = arith.constant 0 : i32
    return %c0_i32, %c0_i32_0 : i32, i32
  }
  func.func @transform_6(%arg0: i32, %arg1: i32) -> (i32, i32) {
    %c0_i32 = arith.constant 0 : i32
    %c0_i32_0 = arith.constant 0 : i32
    %c0_i32_1 = arith.constant 0 : i32
    return %c0_i32, %c0_i32_0 : i32, i32
  }
  func.func @transform_7(%arg0: i32, %arg1: i32) -> (i32, i32, i32, i32) {
    %c0_i32 = arith.constant 0 : i32
    %c0_i32_0 = arith.constant 0 : i32
    %c0_i32_1 = arith.constant 0 : i32
    return %arg0, %arg1, %c0_i32, %c0_i32_0 : i32, i32, i32, i32
  }
  func.func @transform_8(%arg0: i32, %arg1: i32) -> (i32, i32, i32, i32) {
    %c0_i32 = arith.constant 0 : i32
    %c0_i32_0 = arith.constant 0 : i32
    %c0_i32_1 = arith.constant 0 : i32
    return %arg0, %arg1, %c0_i32, %c0_i32_0 : i32, i32, i32, i32
  }
}

</mosaic_0001>

<llo_original>
// kernel: tpu_custom_call.1
$region0: #{tpu_custom_call.1}
  #allocation0 [shape = 'u32[]', space=smem, size = 0x4, offset = 0x4, fixed_abs, tag = 'smem constant byte address 0x4 - core index']
  #allocation1 [shape = 'u32[144,128]{1,0:T(1,128)}', space=vmem, size = 0x12000, scoped, tag = 'internal scratch']
  %s0 = inlined_call_operand.vmem [shape: f32[2,2,64,4], index: 0, kind: input, shape index: {}]
  %s1 = inlined_call_operand.vmem [shape: f32[2,2,64,4], index: 1, kind: input, shape index: {}]
  %s2 = inlined_call_operand.vmem [shape: f32[2,2,64,4], index: 2, kind: input, shape index: {}]
  %s3 = inlined_call_operand.hbm [shape: f32[9,64,192], index: 3, kind: input, shape index: {}]
  %s4 = inlined_call_operand.vmem [shape: f32[64,1], index: 4, kind: input, shape index: {}]
  %s5 = inlined_call_operand.vmem [shape: f32[64,1], index: 5, kind: input, shape index: {}]
  %s6 = inlined_call_operand.vmem [shape: f32[64,1], index: 6, kind: input, shape index: {}]
  %s7 = inlined_call_operand.vmem [shape: f32[2,2,64,4], index: 7, kind: output, shape index: {0}]
  %s8 = inlined_call_operand.vmem [shape: f32[2,2,64,2], index: 8, kind: output, shape index: {1}]
  %9 = xla_tuple %s7, %s8
  %s10 = sld [smem:[#allocation0]]
  $region73: #{tpu_custom_call.1} parent=0
    _
  %s12 = ssub.s32 1, %s10
  %s13 = scalar_select 0, %s12, %s10
  $region1: #{tpu_custom_call.1} parent=0
    #allocation2 [shape = 'u8[589824]{0}', space=vmem, size = 0x90000, scoped, tag = 'input window, operand 3, single buffered']
    #allocation3 [shape = 's32[2]{0}', space=sflag, size = 0x8, scoped, tag = 'scoped memory for tpu_custom_call.1']
    %14 = vsyncpa [#allocation3], 0
    loop: start=0, step=1, limit=6
    $region2: #{tpu_custom_call.1} parent=1 // loop_pre_header
      _
    $region3: #{tpu_custom_call.1} parent=1 // loop_header
      %s16 = sphi 0, %s20
      %p17 = scmp.ge.s32.totalorder %s16, 6
      %s23 = sphi 0, %s35
      %s24 = sphi 0, %s31
      %s25 = sphi 0, %s23
      %s26 = sphi 0, %s24
      %s27 = sphi 0, %s25
      %s28 = sphi 0, %s26
      %s46 = sphi 0, %s48
      %s49 = sphi 0, %s46
      %s50 = sphi 0, %s49
      %s66 = sphi 0, %s50
      %s74 = sphi 0, %s76
      %s77 = sphi 0, %s74
      %s78 = sphi 0, %s77
      %s94 = sphi 0, %s78
      %s108 = sphi 0, %s110
      %s111 = sphi 0, %s108
      %s112 = sphi 0, %s111
      %s128 = sphi 0, %s112
      %s132 = sphi 0, %s132
      %s134 = sphi 0, %s132
      %s135 = sphi 0, %s134
      %s149 = sphi 0, %s135
      %s153 = sphi 0, %s153
      %s155 = sphi 0, %s153
      %s156 = sphi 0, %s155
      %s170 = sphi 0, %s156
      %s174 = sphi 0, %s174
      %s176 = sphi 0, %s174
      %s177 = sphi 0, %s176
      %s191 = sphi 0, %s177
      %s195 = sphi 0, %s195
      %s197 = sphi 0, %s195
      %s198 = sphi 0, %s197
      %s212 = sphi 0, %s198
      %s220 = sphi 0, %s222
      %s223 = sphi 0, %s220
      %s224 = sphi 0, %s223
      %s240 = sphi 0, %s224
      %s248 = sphi 0, %s250
      %s251 = sphi 0, %s248
      %s252 = sphi 0, %s251
      %s268 = sphi 0, %s252
    $region4: #{tpu_custom_call.1} parent=1 // loop_header_branch
      %19 = sbr.rel (%p17) target = $region8
    $region5: #{tpu_custom_call.1} parent=1 // loop_body
      %s21 = ssub.s32 %s16, 1
      %s22 = ssub.s32 %s16, 2
      %s29 = sadd.s32 1, %s24
      %p30 = scmp.ge.s32.totalorder %s29, 2
      %s31 = scalar_select %p30, 0, %s29
      %s32 = sadd.s32 1, %s23
      %s33 = scalar_select %p30, %s32, %s23
      %p34 = scmp.ge.s32.totalorder %s33, 2
      %s35 = scalar_select %p34, 0, %s33
      %s36 = ssub.s32 %s24, 1
      %p37 = scmp.gt.s32.totalorder %s36, 0
      %s38 = scalar_select %p37, %s36, 0
      %s39 = ssub.s32 %s31, 1
      %p40 = scmp.gt.s32.totalorder %s39, 0
      %s41 = scalar_select %p40, %s39, 0
      %s42 = ssub.s32 %s23, %s35
      %s43 = ssub.s32 %s38, %s41
      %s44 = sor.u32 %s42, %s43
      %p45 = scmp.eq.s32.totalorder %s44, 0
      %s47 = sadd.s32 %s46, 1
      %s48 = scalar_select %p45, %s46, %s47
      %p51 = pneg %p45
      %p52 = scmp.eq.s32.totalorder %s16, 3
      %p53 = por %p51, %p52
      %p54 = scmp.ne.s32.totalorder %s46, %s49
      %p55 = scmp.eq.s32.totalorder %s16, 0
      %p56 = por %p54, %p55
      %p57 = scmp.ne.s32.totalorder %s46, %s49
      %p58 = scmp.eq.s32.totalorder %s21, 3
      %p59 = por %p57, %p58
      %p60 = scmp.ne.s32.totalorder %s49, %s50
      %p61 = scmp.eq.s32.totalorder %s21, 0
      %p62 = por %p60, %p61
      %p63 = scmp.ne.s32.totalorder %s49, %s50
      %p64 = scmp.eq.s32.totalorder %s22, 3
      %p65 = por %p63, %p64
      %p67 = scmp.ne.s32.totalorder %s50, %s66
      %p68 = scmp.eq.s32.totalorder %s22, 0
      %p69 = por %p67, %p68
      %s70 = ssub.s32 %s23, %s35
      %s71 = ssub.s32 %s24, %s31
      %s72 = sor.u32 %s70, %s71
      %p73 = scmp.eq.s32.totalorder %s72, 0
      %s75 = sadd.s32 %s74, 1
      %s76 = scalar_select %p73, %s74, %s75
      %p79 = pneg %p73
      %p80 = scmp.eq.s32.totalorder %s16, 3
      %p81 = por %p79, %p80
      %p82 = scmp.ne.s32.totalorder %s74, %s77
      %p83 = scmp.eq.s32.totalorder %s16, 0
      %p84 = por %p82, %p83
      %p85 = scmp.ne.s32.totalorder %s74, %s77
      %p86 = scmp.eq.s32.totalorder %s21, 3
      %p87 = por %p85, %p86
      %p88 = scmp.ne.s32.totalorder %s77, %s78
      %p89 = scmp.eq.s32.totalorder %s21, 0
      %p90 = por %p88, %p89
      %p91 = scmp.ne.s32.totalorder %s77, %s78
      %p92 = scmp.eq.s32.totalorder %s22, 3
      %p93 = por %p91, %p92
      %p95 = scmp.ne.s32.totalorder %s78, %s94
      %p96 = scmp.eq.s32.totalorder %s22, 0
      %p97 = por %p95, %p96
      %s98 = sadd.s32 %s24, 1
      %p99 = scmp.lt.s32.totalorder %s98, 1
      %s100 = scalar_select %p99, %s98, 1
      %s101 = sadd.s32 %s31, 1
      %p102 = scmp.lt.s32.totalorder %s101, 1
      %s103 = scalar_select %p102, %s101, 1
      %s104 = ssub.s32 %s23, %s35
      %s105 = ssub.s32 %s100, %s103
      %s106 = sor.u32 %s104, %s105
      %p107 = scmp.eq.s32.totalorder %s106, 0
      %s109 = sadd.s32 %s108, 1
      %s110 = scalar_select %p107, %s108, %s109
      %p113 = pneg %p107
      %p114 = scmp.eq.s32.totalorder %s16, 3
      %p115 = por %p113, %p114
      %p116 = scmp.ne.s32.totalorder %s108, %s111
      %p117 = scmp.eq.s32.totalorder %s16, 0
      %p118 = por %p116, %p117
      %p119 = scmp.ne.s32.totalorder %s108, %s111
      %p120 = scmp.eq.s32.totalorder %s21, 3
      %p121 = por %p119, %p120
      %p122 = scmp.ne.s32.totalorder %s111, %s112
      %p123 = scmp.eq.s32.totalorder %s21, 0
      %p124 = por %p122, %p123
      %p125 = scmp.ne.s32.totalorder %s111, %s112
      %p126 = scmp.eq.s32.totalorder %s22, 3
      %p127 = por %p125, %p126
      %p129 = scmp.ne.s32.totalorder %s112, %s128
      %p130 = scmp.eq.s32.totalorder %s22, 0
      %p131 = por %p129, %p130
      %s133 = sadd.s32 %s132, 1
      %p136 = scmp.eq.s32.totalorder %s16, 3
      %p137 = scmp.ne.s32.totalorder %s132, %s134
      %p138 = scmp.eq.s32.totalorder %s16, 0
      %p139 = por %p137, %p138
      %p140 = scmp.ne.s32.totalorder %s132, %s134
      %p141 = scmp.eq.s32.totalorder %s21, 3
      %p142 = por %p140, %p141
      %p143 = scmp.ne.s32.totalorder %s134, %s135
      %p144 = scmp.eq.s32.totalorder %s21, 0
      %p145 = por %p143, %p144
      %p146 = scmp.ne.s32.totalorder %s134, %s135
      %p147 = scmp.eq.s32.totalorder %s22, 3
      %p148 = por %p146, %p147
      %p150 = scmp.ne.s32.totalorder %s135, %s149
      %p151 = scmp.eq.s32.totalorder %s22, 0
      %p152 = por %p150, %p151
      %s154 = sadd.s32 %s153, 1
      %p157 = scmp.eq.s32.totalorder %s16, 3
      %p158 = scmp.ne.s32.totalorder %s153, %s155
      %p159 = scmp.eq.s32.totalorder %s16, 0
      %p160 = por %p158, %p159
      %p161 = scmp.ne.s32.totalorder %s153, %s155
      %p162 = scmp.eq.s32.totalorder %s21, 3
      %p163 = por %p161, %p162
      %p164 = scmp.ne.s32.totalorder %s155, %s156
      %p165 = scmp.eq.s32.totalorder %s21, 0
      %p166 = por %p164, %p165
      %p167 = scmp.ne.s32.totalorder %s155, %s156
      %p168 = scmp.eq.s32.totalorder %s22, 3
      %p169 = por %p167, %p168
      %p171 = scmp.ne.s32.totalorder %s156, %s170
      %p172 = scmp.eq.s32.totalorder %s22, 0
      %p173 = por %p171, %p172
      %s175 = sadd.s32 %s174, 1
      %p178 = scmp.eq.s32.totalorder %s16, 3
      %p179 = scmp.ne.s32.totalorder %s174, %s176
      %p180 = scmp.eq.s32.totalorder %s16, 0
      %p181 = por %p179, %p180
      %p182 = scmp.ne.s32.totalorder %s174, %s176
      %p183 = scmp.eq.s32.totalorder %s21, 3
      %p184 = por %p182, %p183
      %p185 = scmp.ne.s32.totalorder %s176, %s177
      %p186 = scmp.eq.s32.totalorder %s21, 0
      %p187 = por %p185, %p186
      %p188 = scmp.ne.s32.totalorder %s176, %s177
      %p189 = scmp.eq.s32.totalorder %s22, 3
      %p190 = por %p188, %p189
      %p192 = scmp.ne.s32.totalorder %s177, %s191
      %p193 = scmp.eq.s32.totalorder %s22, 0
      %p194 = por %p192, %p193
      %s196 = sadd.s32 %s195, 1
      %p199 = scmp.eq.s32.totalorder %s16, 3
      %p200 = scmp.ne.s32.totalorder %s195, %s197
      %p201 = scmp.eq.s32.totalorder %s16, 0
      %p202 = por %p200, %p201
      %p203 = scmp.ne.s32.totalorder %s195, %s197
      %p204 = scmp.eq.s32.totalorder %s21, 3
      %p205 = por %p203, %p204
      %p206 = scmp.ne.s32.totalorder %s197, %s198
      %p207 = scmp.eq.s32.totalorder %s21, 0
      %p208 = por %p206, %p207
      %p209 = scmp.ne.s32.totalorder %s197, %s198
      %p210 = scmp.eq.s32.totalorder %s22, 3
      %p211 = por %p209, %p210
      %p213 = scmp.ne.s32.totalorder %s198, %s212
      %p214 = scmp.eq.s32.totalorder %s22, 0
      %p215 = por %p213, %p214
      %s216 = ssub.s32 %s23, %s35
      %s217 = ssub.s32 %s24, %s31
      %s218 = sor.u32 %s216, %s217
      %p219 = scmp.eq.s32.totalorder %s218, 0
      %s221 = sadd.s32 %s220, 1
      %s222 = scalar_select %p219, %s220, %s221
      %p225 = pneg %p219
      %p226 = scmp.eq.s32.totalorder %s16, 3
      %p227 = por %p225, %p226
      %p228 = scmp.ne.s32.totalorder %s220, %s223
      %p229 = scmp.eq.s32.totalorder %s16, 0
      %p230 = por %p228, %p229
      %p231 = scmp.ne.s32.totalorder %s220, %s223
      %p232 = scmp.eq.s32.totalorder %s21, 3
      %p233 = por %p231, %p232
      %p234 = scmp.ne.s32.totalorder %s223, %s224
      %p235 = scmp.eq.s32.totalorder %s21, 0
      %p236 = por %p234, %p235
      %p237 = scmp.ne.s32.totalorder %s223, %s224
      %p238 = scmp.eq.s32.totalorder %s22, 3
      %p239 = por %p237, %p238
      %p241 = scmp.ne.s32.totalorder %s224, %s240
      %p242 = scmp.eq.s32.totalorder %s22, 0
      %p243 = por %p241, %p242
      %s244 = ssub.s32 %s23, %s35
      %s245 = ssub.s32 %s24, %s31
      %s246 = sor.u32 %s244, %s245
      %p247 = scmp.eq.s32.totalorder %s246, 0
      %s249 = sadd.s32 %s248, 1
      %s250 = scalar_select %p247, %s248, %s249
      %p253 = pneg %p247
      %p254 = scmp.eq.s32.totalorder %s16, 3
      %p255 = por %p253, %p254
      %p256 = scmp.ne.s32.totalorder %s248, %s251
      %p257 = scmp.eq.s32.totalorder %s16, 0
      %p258 = por %p256, %p257
      %p259 = scmp.ne.s32.totalorder %s248, %s251
      %p260 = scmp.eq.s32.totalorder %s21, 3
      %p261 = por %p259, %p260
      %p262 = scmp.ne.s32.totalorder %s251, %s252
      %p263 = scmp.eq.s32.totalorder %s21, 0
      %p264 = por %p262, %p263
      %p265 = scmp.ne.s32.totalorder %s251, %s252
      %p266 = scmp.eq.s32.totalorder %s22, 3
      %p267 = por %p265, %p266
      %p269 = scmp.ne.s32.totalorder %s252, %s268
      %p270 = scmp.eq.s32.totalorder %s22, 0
      %p271 = por %p269, %p270
      %p272 = scmp.le.s32.totalorder 1, %s16
      %p273 = scmp.lt.s32.totalorder %s16, 5
      %p274 = pnand %p272, %p273
      %p275 = pneg %p274
      // Predicated region
      $region9: #{tpu_custom_call.1} parent=5 // pred_check
        _
      $region10: #{tpu_custom_call.1} parent=5 // pred_check_branch
        %277 = sbr.rel (%p274) target = $region12
      $region11: #{tpu_custom_call.1} parent=5 // pred_region
        %s278 = ssub.s32 %s16, 1
        // Predicated region
        $region13: #{tpu_custom_call.1} parent=11 // pred_check
          %p279 = pneg %p145
        $region14: #{tpu_custom_call.1} parent=11 // pred_check_branch
          %281 = sbr.rel (%p279) target = $region16
        $region15: #{tpu_custom_call.1} parent=11 // pred_region
          %s283 = ssub.s32 18432, 18432
          %284 = vsyncadd [#allocation3], %s283
          %s285 = sshll.u32 [#allocation2], 4
          %s286 = int_to_ptr.vmem [resolvable:$true] %s285
          %291 = dma.hbm_to_vmem [thread:$0]  %s3, 18432, %s286, [#allocation3], 256, 256, 16
        $region16: #{tpu_custom_call.1} parent=11 // pred_fallthru
          _
        // Predicated region
        $region17: #{tpu_custom_call.1} parent=11 // pred_check
          %p292 = pneg %p166
        $region18: #{tpu_custom_call.1} parent=11 // pred_check_branch
          %294 = sbr.rel (%p292) target = $region20
        $region19: #{tpu_custom_call.1} parent=11 // pred_region
          _
        $region20: #{tpu_custom_call.1} parent=11 // pred_fallthru
          _
        // Predicated region
        $region21: #{tpu_custom_call.1} parent=11 // pred_check
          %p295 = pneg %p187
        $region22: #{tpu_custom_call.1} parent=11 // pred_check_branch
          %297 = sbr.rel (%p295) target = $region24
        $region23: #{tpu_custom_call.1} parent=11 // pred_region
          _
        $region24: #{tpu_custom_call.1} parent=11 // pred_fallthru
          _
        // Predicated region
        $region25: #{tpu_custom_call.1} parent=11 // pred_check
          %p298 = pneg %p208
        $region26: #{tpu_custom_call.1} parent=11 // pred_check_branch
          %300 = sbr.rel (%p298) target = $region28
        $region27: #{tpu_custom_call.1} parent=11 // pred_region
          _
        $region28: #{tpu_custom_call.1} parent=11 // pred_fallthru
          _
      $region12: #{tpu_custom_call.1} parent=5 // pred_fallthru
        _
      %p301 = scmp.lt.s32.totalorder %s16, 4
      // Predicated region
      $region29: #{tpu_custom_call.1} parent=5 // pred_check
        %p302 = pneg %p301
      $region30: #{tpu_custom_call.1} parent=5 // pred_check_branch
        %304 = sbr.rel (%p302) target = $region32
      $region31: #{tpu_custom_call.1} parent=5 // pred_region
        // Predicated region
        $region33: #{tpu_custom_call.1} parent=31 // pred_check
          %p305 = pneg %p56
        $region34: #{tpu_custom_call.1} parent=31 // pred_check_branch
          %307 = sbr.rel (%p305) target = $region36
        $region35: #{tpu_custom_call.1} parent=31 // pred_region
          %s308 = ssub.s32 %s24, 1
          %p309 = scmp.gt.s32.totalorder %s308, 0
          %s310 = scalar_select %p309, %s308, 0
          %p311 = scmp.lt.s32.totalorder %s23, 1
          %s312 = scalar_select %p311, %s23, 1
          %p313 = scmp.lt.s32.totalorder %s310, 1
          %s314 = scalar_select %p313, %s310, 1
          %s315 = smul.addr %s314, 8
          %s316 = smul.addr %s312, 16
          %s317 = sadd.s32 %s315, %s316
          %s318 = smul.addr %s317, 8
          %s319 = scalar_lea.vmem %s0, %s318
          %s320 = ssub.s32 %s24, 1
          %p321 = scmp.gt.s32.totalorder %s320, 0
          %s322 = scalar_select %p321, %s320, 0
        $region36: #{tpu_custom_call.1} parent=31 // pred_fallthru
          _
        // Predicated region
        $region37: #{tpu_custom_call.1} parent=31 // pred_check
          %p323 = pneg %p84
        $region38: #{tpu_custom_call.1} parent=31 // pred_check_branch
          %325 = sbr.rel (%p323) target = $region40
        $region39: #{tpu_custom_call.1} parent=31 // pred_region
          %p326 = scmp.lt.s32.totalorder %s23, 1
          %s327 = scalar_select %p326, %s23, 1
          %p328 = scmp.lt.s32.totalorder %s24, 1
          %s329 = scalar_select %p328, %s24, 1
          %s330 = smul.addr %s329, 8
          %s331 = smul.addr %s327, 16
          %s332 = sadd.s32 %s330, %s331
          %s333 = smul.addr %s332, 8
          %s334 = scalar_lea.vmem %s1, %s333
        $region40: #{tpu_custom_call.1} parent=31 // pred_fallthru
          _
        // Predicated region
        $region41: #{tpu_custom_call.1} parent=31 // pred_check
          %p335 = pneg %p118
        $region42: #{tpu_custom_call.1} parent=31 // pred_check_branch
          %337 = sbr.rel (%p335) target = $region44
        $region43: #{tpu_custom_call.1} parent=31 // pred_region
          %s338 = sadd.s32 %s24, 1
          %p339 = scmp.lt.s32.totalorder %s338, 1
          %s340 = scalar_select %p339, %s338, 1
          %p341 = scmp.lt.s32.totalorder %s23, 1
          %s342 = scalar_select %p341, %s23, 1
          %p343 = scmp.lt.s32.totalorder %s340, 1
          %s344 = scalar_select %p343, %s340, 1
          %s345 = smul.addr %s344, 8
          %s346 = smul.addr %s342, 16
          %s347 = sadd.s32 %s345, %s346
          %s348 = smul.addr %s347, 8
          %s349 = scalar_lea.vmem %s2, %s348
          %s350 = sadd.s32 %s24, 1
          %p351 = scmp.lt.s32.totalorder %s350, 1
          %s352 = scalar_select %p351, %s350, 1
        $region44: #{tpu_custom_call.1} parent=31 // pred_fallthru
          _
      $region32: #{tpu_custom_call.1} parent=5 // pred_fallthru
        _
      %p353 = scmp.le.s32.totalorder 1, %s16
      %p354 = scmp.lt.s32.totalorder %s16, 5
      %p355 = pnand %p353, %p354
      %p356 = pneg %p355
      // Predicated region
      $region45: #{tpu_custom_call.1} parent=5 // pred_check
        _
      $region46: #{tpu_custom_call.1} parent=5 // pred_check_branch
        %358 = sbr.rel (%p355) target = $region48
      $region47: #{tpu_custom_call.1} parent=5 // pred_region
        %s359 = ssub.s32 %s16, 1
        // Predicated region
        $region49: #{tpu_custom_call.1} parent=47 // pred_check
          %p360 = pneg %p145
        $region50: #{tpu_custom_call.1} parent=47 // pred_check_branch
          %362 = sbr.rel (%p360) target = $region52
        $region51: #{tpu_custom_call.1} parent=47 // pred_region
          %363 = dma.done [#allocation3], 18432
        $region52: #{tpu_custom_call.1} parent=47 // pred_fallthru
          _
        %s364 = ssub.s32 %s26, 1
        %p365 = scmp.gt.s32.totalorder %s364, 0
        %s366 = scalar_select %p365, %s364, 0
        %p367 = scmp.lt.s32.totalorder %s25, 1
        %s368 = scalar_select %p367, %s25, 1
        %p369 = scmp.lt.s32.totalorder %s366, 1
        %s370 = scalar_select %p369, %s366, 1
        %s371 = smul.addr %s370, 8
        %s372 = smul.addr %s368, 16
        %s373 = sadd.s32 %s371, %s372
        %s374 = smul.addr %s373, 8
        %s375 = scalar_lea.vmem %s0, %s374
        %p376 = pneg %p62
        %p377 = pneg %p59
        %p378 = scmp.lt.s32.totalorder %s25, 1
        %s379 = scalar_select %p378, %s25, 1
        %p380 = scmp.lt.s32.totalorder %s26, 1
        %s381 = scalar_select %p380, %s26, 1
        %s382 = smul.addr %s381, 8
        %s383 = smul.addr %s379, 16
        %s384 = sadd.s32 %s382, %s383
        %s385 = smul.addr %s384, 8
        %s386 = scalar_lea.vmem %s1, %s385
        %p387 = pneg %p90
        %p388 = pneg %p87
        %s389 = sadd.s32 %s26, 1
        %p390 = scmp.lt.s32.totalorder %s389, 1
        %s391 = scalar_select %p390, %s389, 1
        %p392 = scmp.lt.s32.totalorder %s25, 1
        %s393 = scalar_select %p392, %s25, 1
        %p394 = scmp.lt.s32.totalorder %s391, 1
        %s395 = scalar_select %p394, %s391, 1
        %s396 = smul.addr %s395, 8
        %s397 = smul.addr %s393, 16
        %s398 = sadd.s32 %s396, %s397
        %s399 = smul.addr %s398, 8
        %s400 = scalar_lea.vmem %s2, %s399
        %p401 = pneg %p124
        %p402 = pneg %p121
        %p403 = pneg %p145
        %p404 = pneg %p142
        %p405 = pneg %p166
        %p406 = pneg %p163
        %p407 = pneg %p187
        %p408 = pneg %p184
        %p409 = pneg %p208
        %p410 = pneg %p205
        %p411 = pneg %p236
        %p412 = pneg %p233
        %p413 = scmp.lt.s32.totalorder %s25, 1
        %s414 = scalar_select %p413, %s25, 1
        %p415 = scmp.lt.s32.totalorder %s26, 1
        %s416 = scalar_select %p415, %s26, 1
        %s417 = smul.addr %s416, 8
        %s418 = smul.addr %s414, 16
        %s419 = sadd.s32 %s417, %s418
        %s420 = smul.addr %s419, 8
        %s421 = scalar_lea.vmem %s7, %s420
        %p422 = pneg %p264
        %p423 = pneg %p261
        %p424 = scmp.lt.s32.totalorder %s25, 1
        %s425 = scalar_select %p424, %s25, 1
        %p426 = scmp.lt.s32.totalorder %s26, 1
        %s427 = scalar_select %p426, %s26, 1
        %s428 = smul.addr %s427, 8
        %s429 = smul.addr %s425, 16
        %s430 = sadd.s32 %s428, %s429
        %s431 = smul.addr %s430, 8
        %s432 = scalar_lea.vmem %s8, %s431
        %s433 = ssub.s32 %s26, 1
        %p434 = scmp.gt.s32.totalorder %s433, 0
        %s435 = scalar_select %p434, %s433, 0
        %p436 = scmp.lt.s32.totalorder %s25, 1
        %s437 = scalar_select %p436, %s25, 1
        %p438 = scmp.lt.s32.totalorder %s435, 1
        %s439 = scalar_select %p438, %s435, 1
        %s440 = smul.addr %s439, 8
        %s441 = smul.addr %s437, 16
        %s442 = sadd.s32 %s440, %s441
        %s443 = smul.addr %s442, 8
        %s444 = scalar_lea.vmem %s0, %s443
        %s445 = ssub.s32 %s26, 1
        %p446 = scmp.gt.s32.totalorder %s445, 0
        %s447 = scalar_select %p446, %s445, 0
        %p448 = scmp.lt.s32.totalorder %s25, 1
        %s449 = scalar_select %p448, %s25, 1
        %p450 = scmp.lt.s32.totalorder %s26, 1
        %s451 = scalar_select %p450, %s26, 1
        %s452 = smul.addr %s451, 8
        %s453 = smul.addr %s449, 16
        %s454 = sadd.s32 %s452, %s453
        %s455 = smul.addr %s454, 8
        %s456 = scalar_lea.vmem %s1, %s455
        %s457 = sadd.s32 %s26, 1
        %p458 = scmp.lt.s32.totalorder %s457, 1
        %s459 = scalar_select %p458, %s457, 1
        %p460 = scmp.lt.s32.totalorder %s25, 1
        %s461 = scalar_select %p460, %s25, 1
        %p462 = scmp.lt.s32.totalorder %s459, 1
        %s463 = scalar_select %p462, %s459, 1
        %s464 = smul.addr %s463, 8
        %s465 = smul.addr %s461, 16
        %s466 = sadd.s32 %s464, %s465
        %s467 = smul.addr %s466, 8
        %s468 = scalar_lea.vmem %s2, %s467
        %s469 = sadd.s32 %s26, 1
        %p470 = scmp.lt.s32.totalorder %s469, 1
        %s471 = scalar_select %p470, %s469, 1
        %p472 = scmp.lt.s32.totalorder %s25, 1
        %s473 = scalar_select %p472, %s25, 1
        %p474 = scmp.lt.s32.totalorder %s26, 1
        %s475 = scalar_select %p474, %s26, 1
        %s476 = smul.addr %s475, 8
        %s477 = smul.addr %s473, 16
        %s478 = sadd.s32 %s476, %s477
        %s479 = smul.addr %s478, 8
        %s480 = scalar_lea.vmem %s7, %s479
        %p481 = scmp.lt.s32.totalorder %s25, 1
        %s482 = scalar_select %p481, %s25, 1
        %p483 = scmp.lt.s32.totalorder %s26, 1
        %s484 = scalar_select %p483, %s26, 1
        %s485 = smul.addr %s484, 8
        %s486 = smul.addr %s482, 16
        %s487 = sadd.s32 %s485, %s486
        %s488 = smul.addr %s487, 8
        %s489 = scalar_lea.vmem %s8, %s488
        %v490 = vld [vmem:[%s5] sm:$0xff]
        %v491 = vld [vmem:[%s5 + $0x8] sm:$0xff]
        %v492 = vld [vmem:[%s5 + $0x10] sm:$0xff]
        %v493 = vld [vmem:[%s5 + $0x18] sm:$0xff]
        %v494 = vld [vmem:[%s5 + $0x20] sm:$0xff]
        %v495 = vld [vmem:[%s5 + $0x28] sm:$0xff]
        %v496 = vld [vmem:[%s5 + $0x30] sm:$0xff]
        %v497 = vld [vmem:[%s5 + $0x38] sm:$0xff]
        %v498 = vld [vmem:[%s6] sm:$0xff]
        %v499 = vld [vmem:[%s6 + $0x8] sm:$0xff]
        %v500 = vld [vmem:[%s6 + $0x10] sm:$0xff]
        %v501 = vld [vmem:[%s6 + $0x18] sm:$0xff]
        %v502 = vld [vmem:[%s6 + $0x20] sm:$0xff]
        %v503 = vld [vmem:[%s6 + $0x28] sm:$0xff]
        %v504 = vld [vmem:[%s6 + $0x30] sm:$0xff]
        %v505 = vld [vmem:[%s6 + $0x38] sm:$0xff]
        %v506 = vlaneseq
        %v507 = vand.u32 %v506, 127
        %vm508 = vcmp.gt.s32.totalorder %v507, 0
        %v509 = vsel %vm508, 1, 0
        %v510 = vcvt.s32.f32 %v509
        %512 = vrot.lane.b32.xlu0 %v510, 2
        %v513 = vpop.permute.xlu0 %512
        %vm515 = vcmask 15360
        %v516 = vsel %vm515, %v510, %v513
        %vm517 = vcmp.lt.s32.totalorder %v507, 1
        %v518 = vsel %vm517, 1, 0
        %v519 = vcvt.s32.f32 %v518
        %521 = vrot.lane.b32.xlu0 %v519, 2
        %v522 = vpop.permute.xlu0 %521
        %v524 = vsel %vm515, %v519, %v522
        %v525 = vld [vmem:[%s444] sm:$0xff]
        %v526 = vld [vmem:[%s444 + $0x8] sm:$0xff]
        %v527 = vld [vmem:[%s444 + $0x10] sm:$0xff]
        %v528 = vld [vmem:[%s444 + $0x18] sm:$0xff]
        %v529 = vld [vmem:[%s444 + $0x20] sm:$0xff]
        %v530 = vld [vmem:[%s444 + $0x28] sm:$0xff]
        %v531 = vld [vmem:[%s444 + $0x30] sm:$0xff]
        %v532 = vld [vmem:[%s444 + $0x38] sm:$0xff]
        %534 = vset.pattern.permute.xlu0 0
        %535 = vperm.xlu0 %534, %v490
        %v536 = vpop.permute.xlu0 %535
        %539 = vset.pattern.permute.xlu0 0
        %540 = vperm.xlu0 %539, %v491
        %v541 = vpop.permute.xlu0 %540
        %544 = vset.pattern.permute.xlu0 0
        %545 = vperm.xlu0 %544, %v492
        %v546 = vpop.permute.xlu0 %545
        %549 = vset.pattern.permute.xlu0 0
        %550 = vperm.xlu0 %549, %v493
        %v551 = vpop.permute.xlu0 %550
        %554 = vset.pattern.permute.xlu0 0
        %555 = vperm.xlu0 %554, %v494
        %v556 = vpop.permute.xlu0 %555
        %559 = vset.pattern.permute.xlu0 0
        %560 = vperm.xlu0 %559, %v495
        %v561 = vpop.permute.xlu0 %560
        %564 = vset.pattern.permute.xlu0 0
        %565 = vperm.xlu0 %564, %v496
        %v566 = vpop.permute.xlu0 %565
        %569 = vset.pattern.permute.xlu0 0
        %570 = vperm.xlu0 %569, %v497
        %v571 = vpop.permute.xlu0 %570
        %v573 = vmul.f32 %v525, %v536
        %v574 = vmul.f32 %v526, %v541
        %v575 = vmul.f32 %v527, %v546
        %v576 = vmul.f32 %v528, %v551
        %v577 = vmul.f32 %v529, %v556
        %v578 = vmul.f32 %v530, %v561
        %v579 = vmul.f32 %v531, %v566
        %v580 = vmul.f32 %v532, %v571
        %582 = vset.pattern.permute.xlu0 0
        %583 = vperm.xlu0 %582, %v498
        %v584 = vpop.permute.xlu0 %583
        %587 = vset.pattern.permute.xlu0 0
        %588 = vperm.xlu0 %587, %v499
        %v589 = vpop.permute.xlu0 %588
        %592 = vset.pattern.permute.xlu0 0
        %593 = vperm.xlu0 %592, %v500
        %v594 = vpop.permute.xlu0 %593
        %597 = vset.pattern.permute.xlu0 0
        %598 = vperm.xlu0 %597, %v501
        %v599 = vpop.permute.xlu0 %598
        %602 = vset.pattern.permute.xlu0 0
        %603 = vperm.xlu0 %602, %v502
        %v604 = vpop.permute.xlu0 %603
        %607 = vset.pattern.permute.xlu0 0
        %608 = vperm.xlu0 %607, %v503
        %v609 = vpop.permute.xlu0 %608
        %612 = vset.pattern.permute.xlu0 0
        %613 = vperm.xlu0 %612, %v504
        %v614 = vpop.permute.xlu0 %613
        %617 = vset.pattern.permute.xlu0 0
        %618 = vperm.xlu0 %617, %v505
        %v619 = vpop.permute.xlu0 %618
        %v621 = vadd.f32 %v573, %v584
        %v622 = vadd.f32 %v574, %v589
        %v623 = vadd.f32 %v575, %v594
        %v624 = vadd.f32 %v576, %v599
        %v625 = vadd.f32 %v577, %v604
        %v626 = vadd.f32 %v578, %v609
        %v627 = vadd.f32 %v579, %v614
        %v628 = vadd.f32 %v580, %v619
        %s629 = sadd.s32 %s26, 4294967295
        %p630 = scmp.ge.s32.totalorder %s629, 0
        %p631 = scmp.lt.s32.totalorder %s629, 2
        %p632 = pnand %p630, %p631
        %p633 = pneg %p632
        %s634 = scalar_select %p633, 1, 0
        %s635 = scvt.s32.f32 %s634
        %v636 = vstv %s635
        %v637 = vmul.f32 %v621, %v636
        %v638 = vmul.f32 %v622, %v636
        %v639 = vmul.f32 %v623, %v636
        %v640 = vmul.f32 %v624, %v636
        %v641 = vmul.f32 %v625, %v636
        %v642 = vmul.f32 %v626, %v636
        %v643 = vmul.f32 %v627, %v636
        %v644 = vmul.f32 %v628, %v636
        %653 = vrot.lane.b32.xlu0 %v637, 3
        %v654 = vpop.permute.xlu0 %653
        %655 = vrot.lane.b32.xlu0 %v638, 3
        %v656 = vpop.permute.xlu0 %655
        %657 = vrot.lane.b32.xlu0 %v639, 3
        %v658 = vpop.permute.xlu0 %657
        %659 = vrot.lane.b32.xlu0 %v640, 3
        %v660 = vpop.permute.xlu0 %659
        %661 = vrot.lane.b32.xlu0 %v641, 3
        %v662 = vpop.permute.xlu0 %661
        %663 = vrot.lane.b32.xlu0 %v642, 3
        %v664 = vpop.permute.xlu0 %663
        %665 = vrot.lane.b32.xlu0 %v643, 3
        %v666 = vpop.permute.xlu0 %665
        %667 = vrot.lane.b32.xlu0 %v644, 3
        %v668 = vpop.permute.xlu0 %667
        %vm677 = vcmask 23552
        %v678 = vsel %vm677, 0.0, %v654
        %v679 = vsel %vm677, 0.0, %v656
        %v680 = vsel %vm677, 0.0, %v658
        %v681 = vsel %vm677, 0.0, %v660
        %v682 = vsel %vm677, 0.0, %v662
        %v683 = vsel %vm677, 0.0, %v664
        %v684 = vsel %vm677, 0.0, %v666
        %v685 = vsel %vm677, 0.0, %v668
        %vm686 = vcmask 56320
        %v687 = vsel %vm686, %v678, 0.0
        %v688 = vsel %vm686, %v679, 0.0
        %v689 = vsel %vm686, %v680, 0.0
        %v690 = vsel %vm686, %v681, 0.0
        %v691 = vsel %vm686, %v682, 0.0
        %v692 = vsel %vm686, %v683, 0.0
        %v693 = vsel %vm686, %v684, 0.0
        %v694 = vsel %vm686, %v685, 0.0
        %v695 = vld [vmem:[%s456] sm:$0xff]
        %v696 = vld [vmem:[%s456 + $0x8] sm:$0xff]
        %v697 = vld [vmem:[%s456 + $0x10] sm:$0xff]
        %v698 = vld [vmem:[%s456 + $0x18] sm:$0xff]
        %v699 = vld [vmem:[%s456 + $0x20] sm:$0xff]
        %v700 = vld [vmem:[%s456 + $0x28] sm:$0xff]
        %v701 = vld [vmem:[%s456 + $0x30] sm:$0xff]
        %v702 = vld [vmem:[%s456 + $0x38] sm:$0xff]
        %v703 = vmul.f32 %v695, %v536
        %v704 = vmul.f32 %v696, %v541
        %v705 = vmul.f32 %v697, %v546
        %v706 = vmul.f32 %v698, %v551
        %v707 = vmul.f32 %v699, %v556
        %v708 = vmul.f32 %v700, %v561
        %v709 = vmul.f32 %v701, %v566
        %v710 = vmul.f32 %v702, %v571
        %v711 = vadd.f32 %v703, %v584
        %v712 = vadd.f32 %v704, %v589
        %v713 = vadd.f32 %v705, %v594
        %v714 = vadd.f32 %v706, %v599
        %v715 = vadd.f32 %v707, %v604
        %v716 = vadd.f32 %v708, %v609
        %v717 = vadd.f32 %v709, %v614
        %v718 = vadd.f32 %v710, %v619
        %p719 = scmp.ge.s32.totalorder %s26, 0
        %p720 = scmp.lt.s32.totalorder %s26, 2
        %p721 = pnand %p719, %p720
        %p722 = pneg %p721
        %s723 = scalar_select %p722, 1, 0
        %s724 = scvt.s32.f32 %s723
        %v725 = vstv %s724
        %v726 = vmul.f32 %v711, %v725
        %v727 = vmul.f32 %v712, %v725
        %v728 = vmul.f32 %v713, %v725
        %v729 = vmul.f32 %v714, %v725
        %v730 = vmul.f32 %v715, %v725
        %v731 = vmul.f32 %v716, %v725
        %v732 = vmul.f32 %v717, %v725
        %v733 = vmul.f32 %v718, %v725
        %742 = vrot.lane.b32.xlu0 %v726, 3
        %v743 = vpop.permute.xlu0 %742
        %744 = vrot.lane.b32.xlu0 %v727, 3
        %v745 = vpop.permute.xlu0 %744
        %746 = vrot.lane.b32.xlu0 %v728, 3
        %v747 = vpop.permute.xlu0 %746
        %748 = vrot.lane.b32.xlu0 %v729, 3
        %v749 = vpop.permute.xlu0 %748
        %750 = vrot.lane.b32.xlu0 %v730, 3
        %v751 = vpop.permute.xlu0 %750
        %752 = vrot.lane.b32.xlu0 %v731, 3
        %v753 = vpop.permute.xlu0 %752
        %754 = vrot.lane.b32.xlu0 %v732, 3
        %v755 = vpop.permute.xlu0 %754
        %756 = vrot.lane.b32.xlu0 %v733, 3
        %v757 = vpop.permute.xlu0 %756
        %v766 = vsel %vm677, 0.0, %v743
        %v767 = vsel %vm677, 0.0, %v745
        %v768 = vsel %vm677, 0.0, %v747
        %v769 = vsel %vm677, 0.0, %v749
        %v770 = vsel %vm677, 0.0, %v751
        %v771 = vsel %vm677, 0.0, %v753
        %v772 = vsel %vm677, 0.0, %v755
        %v773 = vsel %vm677, 0.0, %v757
        %v774 = vsel %vm686, %v766, 0.0
        %v775 = vsel %vm686, %v767, 0.0
        %v776 = vsel %vm686, %v768, 0.0
        %v777 = vsel %vm686, %v769, 0.0
        %v778 = vsel %vm686, %v770, 0.0
        %v779 = vsel %vm686, %v771, 0.0
        %v780 = vsel %vm686, %v772, 0.0
        %v781 = vsel %vm686, %v773, 0.0
        %v782 = vld [vmem:[%s468] sm:$0xff]
        %v783 = vld [vmem:[%s468 + $0x8] sm:$0xff]
        %v784 = vld [vmem:[%s468 + $0x10] sm:$0xff]
        %v785 = vld [vmem:[%s468 + $0x18] sm:$0xff]
        %v786 = vld [vmem:[%s468 + $0x20] sm:$0xff]
        %v787 = vld [vmem:[%s468 + $0x28] sm:$0xff]
        %v788 = vld [vmem:[%s468 + $0x30] sm:$0xff]
        %v789 = vld [vmem:[%s468 + $0x38] sm:$0xff]
        %v790 = vmul.f32 %v782, %v536
        %v791 = vmul.f32 %v783, %v541
        %v792 = vmul.f32 %v784, %v546
        %v793 = vmul.f32 %v785, %v551
        %v794 = vmul.f32 %v786, %v556
        %v795 = vmul.f32 %v787, %v561
        %v796 = vmul.f32 %v788, %v566
        %v797 = vmul.f32 %v789, %v571
        %v798 = vadd.f32 %v790, %v584
        %v799 = vadd.f32 %v791, %v589
        %v800 = vadd.f32 %v792, %v594
        %v801 = vadd.f32 %v793, %v599
        %v802 = vadd.f32 %v794, %v604
        %v803 = vadd.f32 %v795, %v609
        %v804 = vadd.f32 %v796, %v614
        %v805 = vadd.f32 %v797, %v619
        %s806 = sadd.s32 %s26, 1
        %p807 = scmp.ge.s32.totalorder %s806, 0
        %p808 = scmp.lt.s32.totalorder %s806, 2
        %p809 = pnand %p807, %p808
        %p810 = pneg %p809
        %s811 = scalar_select %p810, 1, 0
        %s812 = scvt.s32.f32 %s811
        %v813 = vstv %s812
        %v814 = vmul.f32 %v798, %v813
        %v815 = vmul.f32 %v799, %v813
        %v816 = vmul.f32 %v800, %v813
        %v817 = vmul.f32 %v801, %v813
        %v818 = vmul.f32 %v802, %v813
        %v819 = vmul.f32 %v803, %v813
        %v820 = vmul.f32 %v804, %v813
        %v821 = vmul.f32 %v805, %v813
        %830 = vrot.lane.b32.xlu0 %v814, 3
        %v831 = vpop.permute.xlu0 %830
        %832 = vrot.lane.b32.xlu0 %v815, 3
        %v833 = vpop.permute.xlu0 %832
        %834 = vrot.lane.b32.xlu0 %v816, 3
        %v835 = vpop.permute.xlu0 %834
        %836 = vrot.lane.b32.xlu0 %v817, 3
        %v837 = vpop.permute.xlu0 %836
        %838 = vrot.lane.b32.xlu0 %v818, 3
        %v839 = vpop.permute.xlu0 %838
        %840 = vrot.lane.b32.xlu0 %v819, 3
        %v841 = vpop.permute.xlu0 %840
        %842 = vrot.lane.b32.xlu0 %v820, 3
        %v843 = vpop.permute.xlu0 %842
        %844 = vrot.lane.b32.xlu0 %v821, 3
        %v845 = vpop.permute.xlu0 %844
        %v854 = vsel %vm677, 0.0, %v831
        %v855 = vsel %vm677, 0.0, %v833
        %v856 = vsel %vm677, 0.0, %v835
        %v857 = vsel %vm677, 0.0, %v837
        %v858 = vsel %vm677, 0.0, %v839
        %v859 = vsel %vm677, 0.0, %v841
        %v860 = vsel %vm677, 0.0, %v843
        %v861 = vsel %vm677, 0.0, %v845
        %v862 = vsel %vm686, %v854, 0.0
        %v863 = vsel %vm686, %v855, 0.0
        %v864 = vsel %vm686, %v856, 0.0
        %v865 = vsel %vm686, %v857, 0.0
        %v866 = vsel %vm686, %v858, 0.0
        %v867 = vsel %vm686, %v859, 0.0
        %v868 = vsel %vm686, %v860, 0.0
        %v869 = vsel %vm686, %v861, 0.0
        %v870 = vlaneseq
        %v871 = vshrl.u32 %v870, 7
        %v872 = vsub.s32 0, %v871
        %v873 = vrot.slane %v516, %v872
        %v874 = vmul.f32 %v687, %v873
        %v875 = vmul.f32 %v688, %v873
        %v876 = vmul.f32 %v689, %v873
        %v877 = vmul.f32 %v690, %v873
        %v878 = vmul.f32 %v691, %v873
        %v879 = vmul.f32 %v692, %v873
        %v880 = vmul.f32 %v693, %v873
        %v881 = vmul.f32 %v694, %v873
        %v882 = vlaneseq
        %v883 = vshrl.u32 %v882, 7
        %v884 = vsub.s32 0, %v883
        %v885 = vrot.slane %v524, %v884
        %887 = vrot.lane.b32.xlu0 %v885, 2
        %v888 = vpop.permute.xlu0 %887
        %v890 = vmul.f32 %v687, %v888
        %v891 = vmul.f32 %v688, %v888
        %v892 = vmul.f32 %v689, %v888
        %v893 = vmul.f32 %v690, %v888
        %v894 = vmul.f32 %v691, %v888
        %v895 = vmul.f32 %v692, %v888
        %v896 = vmul.f32 %v693, %v888
        %v897 = vmul.f32 %v694, %v888
        %906 = vrot.lane.b32.xlu0 %v687, 127
        %v907 = vpop.permute.xlu0 %906
        %908 = vrot.lane.b32.xlu0 %v688, 127
        %v909 = vpop.permute.xlu0 %908
        %910 = vrot.lane.b32.xlu0 %v689, 127
        %v911 = vpop.permute.xlu0 %910
        %912 = vrot.lane.b32.xlu0 %v690, 127
        %v913 = vpop.permute.xlu0 %912
        %914 = vrot.lane.b32.xlu0 %v691, 127
        %v915 = vpop.permute.xlu0 %914
        %916 = vrot.lane.b32.xlu0 %v692, 127
        %v917 = vpop.permute.xlu0 %916
        %918 = vrot.lane.b32.xlu0 %v693, 127
        %v919 = vpop.permute.xlu0 %918
        %920 = vrot.lane.b32.xlu0 %v694, 127
        %v921 = vpop.permute.xlu0 %920
        %938 = vrot.lane.b32.xlu0 %v890, 126
        %v939 = vpop.permute.xlu0 %938
        %940 = vrot.lane.b32.xlu0 %v891, 126
        %v941 = vpop.permute.xlu0 %940
        %942 = vrot.lane.b32.xlu0 %v892, 126
        %v943 = vpop.permute.xlu0 %942
        %944 = vrot.lane.b32.xlu0 %v893, 126
        %v945 = vpop.permute.xlu0 %944
        %946 = vrot.lane.b32.xlu0 %v894, 126
        %v947 = vpop.permute.xlu0 %946
        %948 = vrot.lane.b32.xlu0 %v895, 126
        %v949 = vpop.permute.xlu0 %948
        %950 = vrot.lane.b32.xlu0 %v896, 126
        %v951 = vpop.permute.xlu0 %950
        %952 = vrot.lane.b32.xlu0 %v897, 126
        %v953 = vpop.permute.xlu0 %952
        %v962 = vld [vmem:[#allocation2] sm:$0xff]
        %v963 = vld [vmem:[#allocation2 + $0x8] sm:$0xff]
        %v964 = vld [vmem:[#allocation2 + $0x10] sm:$0xff]
        %v965 = vld [vmem:[#allocation2 + $0x18] sm:$0xff]
        %v966 = vld [vmem:[#allocation2 + $0x20] sm:$0xff]
        %v967 = vld [vmem:[#allocation2 + $0x28] sm:$0xff]
        %v968 = vld [vmem:[#allocation2 + $0x30] sm:$0xff]
        %v969 = vld [vmem:[#allocation2 + $0x38] sm:$0xff]
        %v970 = vld [vmem:[#allocation2 + $0x40] sm:$0xff]
        %v971 = vld [vmem:[#allocation2 + $0x48] sm:$0xff]
        %v972 = vld [vmem:[#allocation2 + $0x50] sm:$0xff]
        %v973 = vld [vmem:[#allocation2 + $0x58] sm:$0xff]
        %v974 = vld [vmem:[#allocation2 + $0x60] sm:$0xff]
        %v975 = vld [vmem:[#allocation2 + $0x68] sm:$0xff]
        %v976 = vld [vmem:[#allocation2 + $0x70] sm:$0xff]
        %v977 = vld [vmem:[#allocation2 + $0x78] sm:$0xff]
        %979 = vrot.lane.b32.xlu0 %v873, 2
        %v980 = vpop.permute.xlu0 %979
        %v982 = vmul.f32 %v687, %v980
        %v983 = vmul.f32 %v688, %v980
        %v984 = vmul.f32 %v689, %v980
        %v985 = vmul.f32 %v690, %v980
        %v986 = vmul.f32 %v691, %v980
        %v987 = vmul.f32 %v692, %v980
        %v988 = vmul.f32 %v693, %v980
        %v989 = vmul.f32 %v694, %v980
        %990 = vrot.lane.b32.xlu0 %v885, 4
        %v991 = vpop.permute.xlu0 %990
        %v993 = vmul.f32 %v687, %v991
        %v994 = vmul.f32 %v688, %v991
        %v995 = vmul.f32 %v689, %v991
        %v996 = vmul.f32 %v690, %v991
        %v997 = vmul.f32 %v691, %v991
        %v998 = vmul.f32 %v692, %v991
        %v999 = vmul.f32 %v693, %v991
        %v1000 = vmul.f32 %v694, %v991
        %1009 = vrot.lane.b32.xlu0 %v993, 126
        %v1010 = vpop.permute.xlu0 %1009
        %1011 = vrot.lane.b32.xlu0 %v994, 126
        %v1012 = vpop.permute.xlu0 %1011
        %1013 = vrot.lane.b32.xlu0 %v995, 126
        %v1014 = vpop.permute.xlu0 %1013
        %1015 = vrot.lane.b32.xlu0 %v996, 126
        %v1016 = vpop.permute.xlu0 %1015
        %1017 = vrot.lane.b32.xlu0 %v997, 126
        %v1018 = vpop.permute.xlu0 %1017
        %1019 = vrot.lane.b32.xlu0 %v998, 126
        %v1020 = vpop.permute.xlu0 %1019
        %1021 = vrot.lane.b32.xlu0 %v999, 126
        %v1022 = vpop.permute.xlu0 %1021
        %1023 = vrot.lane.b32.xlu0 %v1000, 126
        %v1024 = vpop.permute.xlu0 %1023
        %s1025 = scalar_lea.vmem [#allocation2], 128
        %v1026 = vld [vmem:[%s1025] sm:$0xff]
        %v1027 = vld [vmem:[%s1025 + $0x8] sm:$0xff]
        %v1028 = vld [vmem:[%s1025 + $0x10] sm:$0xff]
        %v1029 = vld [vmem:[%s1025 + $0x18] sm:$0xff]
        %v1030 = vld [vmem:[%s1025 + $0x20] sm:$0xff]
        %v1031 = vld [vmem:[%s1025 + $0x28] sm:$0xff]
        %v1032 = vld [vmem:[%s1025 + $0x30] sm:$0xff]
        %v1033 = vld [vmem:[%s1025 + $0x38] sm:$0xff]
        %v1034 = vld [vmem:[%s1025 + $0x40] sm:$0xff]
        %v1035 = vld [vmem:[%s1025 + $0x48] sm:$0xff]
        %v1036 = vld [vmem:[%s1025 + $0x50] sm:$0xff]
        %v1037 = vld [vmem:[%s1025 + $0x58] sm:$0xff]
        %v1038 = vld [vmem:[%s1025 + $0x60] sm:$0xff]
        %v1039 = vld [vmem:[%s1025 + $0x68] sm:$0xff]
        %v1040 = vld [vmem:[%s1025 + $0x70] sm:$0xff]
        %v1041 = vld [vmem:[%s1025 + $0x78] sm:$0xff]
        %1050 = vrot.lane.b32.xlu0 %v982, 126
        %v1051 = vpop.permute.xlu0 %1050
        %1052 = vrot.lane.b32.xlu0 %v983, 126
        %v1053 = vpop.permute.xlu0 %1052
        %1054 = vrot.lane.b32.xlu0 %v984, 126
        %v1055 = vpop.permute.xlu0 %1054
        %1056 = vrot.lane.b32.xlu0 %v985, 126
        %v1057 = vpop.permute.xlu0 %1056
        %1058 = vrot.lane.b32.xlu0 %v986, 126
        %v1059 = vpop.permute.xlu0 %1058
        %1060 = vrot.lane.b32.xlu0 %v987, 126
        %v1061 = vpop.permute.xlu0 %1060
        %1062 = vrot.lane.b32.xlu0 %v988, 126
        %v1063 = vpop.permute.xlu0 %1062
        %1064 = vrot.lane.b32.xlu0 %v989, 126
        %v1065 = vpop.permute.xlu0 %1064
        %1066 = vrot.lane.b32.xlu0 %v907, 126
        %v1067 = vpop.permute.xlu0 %1066
        %1068 = vrot.lane.b32.xlu0 %v909, 126
        %v1069 = vpop.permute.xlu0 %1068
        %1070 = vrot.lane.b32.xlu0 %v911, 126
        %v1071 = vpop.permute.xlu0 %1070
        %1072 = vrot.lane.b32.xlu0 %v913, 126
        %v1073 = vpop.permute.xlu0 %1072
        %1074 = vrot.lane.b32.xlu0 %v915, 126
        %v1075 = vpop.permute.xlu0 %1074
        %1076 = vrot.lane.b32.xlu0 %v917, 126
        %v1077 = vpop.permute.xlu0 %1076
        %1078 = vrot.lane.b32.xlu0 %v919, 126
        %v1079 = vpop.permute.xlu0 %1078
        %1080 = vrot.lane.b32.xlu0 %v921, 126
        %v1081 = vpop.permute.xlu0 %1080
        %1082 = vrot.lane.b32.xlu0 %v1010, 126
        %v1083 = vpop.permute.xlu0 %1082
        %1084 = vrot.lane.b32.xlu0 %v1012, 126
        %v1085 = vpop.permute.xlu0 %1084
        %1086 = vrot.lane.b32.xlu0 %v1014, 126
        %v1087 = vpop.permute.xlu0 %1086
        %1088 = vrot.lane.b32.xlu0 %v1016, 126
        %v1089 = vpop.permute.xlu0 %1088
        %1090 = vrot.lane.b32.xlu0 %v1018, 126
        %v1091 = vpop.permute.xlu0 %1090
        %1092 = vrot.lane.b32.xlu0 %v1020, 126
        %v1093 = vpop.permute.xlu0 %1092
        %1094 = vrot.lane.b32.xlu0 %v1022, 126
        %v1095 = vpop.permute.xlu0 %1094
        %1096 = vrot.lane.b32.xlu0 %v1024, 126
        %v1097 = vpop.permute.xlu0 %1096
        %vm1122 = vcmask 523264
        %v1124 = vsel %vm1122, %v1027, 0
        %v1127 = vsel %vm1122, %v1029, 0
        %v1130 = vsel %vm1122, %v1031, 0
        %v1133 = vsel %vm1122, %v1033, 0
        %v1136 = vsel %vm1122, %v1035, 0
        %v1139 = vsel %vm1122, %v1037, 0
        %v1142 = vsel %vm1122, %v1039, 0
        %v1145 = vsel %vm1122, %v1041, 0
        %1147 = vmatprep.subr.mxu0 0.0
        %1148 = vmatpush1.msra.mxu0 %v1081
        %1149 = vmatprep.subr.mxu0 0.0
        %1150 = vmatpush1.msra.mxu0 %v1079
        %1151 = vmatprep.subr.mxu0 0.0
        %1152 = vmatpush1.msra.mxu0 %v1077
        %1153 = vmatprep.subr.mxu0 0.0
        %1154 = vmatpush1.msra.mxu0 %v1075
        %1155 = vmatprep.subr.mxu0 0.0
        %1156 = vmatpush1.msra.mxu0 %v1073
        %1157 = vmatprep.subr.mxu0 0.0
        %1158 = vmatpush1.msra.mxu0 %v1071
        %1159 = vmatprep.subr.mxu0 0.0
        %1160 = vmatpush1.msra.mxu0 %v1069
        %1161 = vmatprep.subr.mxu0 0.0
        %1162 = vmatpush1.msra.mxu0 %v1067
        %1163 = vmatprep.subr.mxu0 0.0
        %1164 = vmatpush1.msra.mxu0 %v1065
        %1165 = vmatprep.subr.mxu0 0.0
        %1166 = vmatpush1.msra.mxu0 %v1063
        %1167 = vmatprep.subr.mxu0 0.0
        %1168 = vmatpush1.msra.mxu0 %v1061
        %1169 = vmatprep.subr.mxu0 0.0
        %1170 = vmatpush1.msra.mxu0 %v1059
        %1171 = vmatprep.subr.mxu0 0.0
        %1172 = vmatpush1.msra.mxu0 %v1057
        %1173 = vmatprep.subr.mxu0 0.0
        %1174 = vmatpush1.msra.mxu0 %v1055
        %1175 = vmatprep.subr.mxu0 0.0
        %1176 = vmatpush1.msra.mxu0 %v1053
        %1177 = vmatprep.subr.mxu0 0.0
        %1178 = vmatpush1.msra.mxu0 %v1051
        %1179 = vmatprep.subr.mxu0 0.0
        %1180 = vmatpush2.msra.mxu0 0.0
        %1181 = vmatprep.subr.mxu0 0.0
        %1182 = vmatpush2.msra.mxu0 0.0
        %1183 = vmatprep.subr.mxu0 0.0
        %1184 = vmatpush2.msra.mxu0 0.0
        %1185 = vmatprep.subr.mxu0 0.0
        %1186 = vmatpush2.msra.mxu0 0.0
        %1187 = vmatprep.subr.mxu0 0.0
        %1188 = vmatpush2.msra.mxu0 0.0
        %1189 = vmatprep.subr.mxu0 0.0
        %1190 = vmatpush2.msra.mxu0 0.0
        %1191 = vmatprep.subr.mxu0 0.0
        %1192 = vmatpush2.msra.mxu0 0.0
        %1193 = vmatprep.subr.mxu0 0.0
        %1194 = vmatpush2.msra.mxu0 0.0
        %1195 = vmatprep.subr.mxu0 0.0
        %1196 = vmatpush2.msra.mxu0 %v1097
        %1197 = vmatprep.subr.mxu0 0.0
        %1198 = vmatpush2.msra.mxu0 %v1095
        %1199 = vmatprep.subr.mxu0 0.0
        %1200 = vmatpush2.msra.mxu0 %v1093
        %1201 = vmatprep.subr.mxu0 0.0
        %1202 = vmatpush2.msra.mxu0 %v1091
        %1203 = vmatprep.subr.mxu0 0.0
        %1204 = vmatpush2.msra.mxu0 %v1089
        %1205 = vmatprep.subr.mxu0 0.0
        %1206 = vmatpush2.msra.mxu0 %v1087
        %1207 = vmatprep.subr.mxu0 0.0
        %1208 = vmatpush2.msra.mxu0 %v1085
        %1209 = vmatprep.subr.mxu0 0.0
        %1210 = vmatpush2.msra.mxu0 %v1083
        %1211 = vmatprep.mubr.f32.mxu0 %v1124
        %1212 = vmatmul.mubr.f32.gmra.mxu0 %v1026
        %v1213 = vpop.f32.mrf.mxu0
        %v1214 = vadd.f32 0.0, %v1213
        %v1215 = vpop.f32.mrf.mxu0
        %1216 = vmatprep.mubr.f32.mxu0 %v1127
        %1217 = vmatmul.mubr.f32.gmra.mxu0 %v1028
        %v1218 = vpop.f32.mrf.mxu0
        %v1219 = vadd.f32 0.0, %v1218
        %v1220 = vpop.f32.mrf.mxu0
        %1221 = vmatprep.mubr.f32.mxu0 %v1130
        %1222 = vmatmul.mubr.f32.gmra.mxu0 %v1030
        %v1223 = vpop.f32.mrf.mxu0
        %v1224 = vadd.f32 0.0, %v1223
        %v1225 = vpop.f32.mrf.mxu0
        %1226 = vmatprep.mubr.f32.mxu0 %v1133
        %1227 = vmatmul.mubr.f32.gmra.mxu0 %v1032
        %v1228 = vpop.f32.mrf.mxu0
        %v1229 = vadd.f32 0.0, %v1228
        %v1230 = vpop.f32.mrf.mxu0
        %1231 = vmatprep.mubr.f32.mxu0 %v1136
        %1232 = vmatmul.mubr.f32.gmra.mxu0 %v1034
        %v1233 = vpop.f32.mrf.mxu0
        %v1234 = vadd.f32 0.0, %v1233
        %v1235 = vpop.f32.mrf.mxu0
        %1236 = vmatprep.mubr.f32.mxu0 %v1139
        %1237 = vmatmul.mubr.f32.gmra.mxu0 %v1036
        %v1238 = vpop.f32.mrf.mxu0
        %v1239 = vadd.f32 0.0, %v1238
        %v1240 = vpop.f32.mrf.mxu0
        %1241 = vmatprep.mubr.f32.mxu0 %v1142
        %1242 = vmatmul.mubr.f32.gmra.mxu0 %v1038
        %v1243 = vpop.f32.mrf.mxu0
        %v1244 = vadd.f32 0.0, %v1243
        %v1245 = vpop.f32.mrf.mxu0
        %1246 = vmatprep.mubr.f32.mxu0 %v1145
        %1247 = vmatmul.mubr.f32.gmra.mxu0 %v1040
        %v1248 = vpop.f32.mrf.mxu0
        %v1249 = vadd.f32 0.0, %v1248
        %v1250 = vpop.f32.mrf.mxu0
        %1251 = vdwg.mxu0
        %v1253 = vsel %vm1122, %v963, 0
        %v1256 = vsel %vm1122, %v965, 0
        %v1259 = vsel %vm1122, %v967, 0
        %v1262 = vsel %vm1122, %v969, 0
        %v1265 = vsel %vm1122, %v971, 0
        %v1268 = vsel %vm1122, %v973, 0
        %v1271 = vsel %vm1122, %v975, 0
        %v1274 = vsel %vm1122, %v977, 0
        %1276 = vmatprep.subr.mxu0 0.0
        %1277 = vmatpush1.msra.mxu0 %v921
        %1278 = vmatprep.subr.mxu0 0.0
        %1279 = vmatpush1.msra.mxu0 %v919
        %1280 = vmatprep.subr.mxu0 0.0
        %1281 = vmatpush1.msra.mxu0 %v917
        %1282 = vmatprep.subr.mxu0 0.0
        %1283 = vmatpush1.msra.mxu0 %v915
        %1284 = vmatprep.subr.mxu0 0.0
        %1285 = vmatpush1.msra.mxu0 %v913
        %1286 = vmatprep.subr.mxu0 0.0
        %1287 = vmatpush1.msra.mxu0 %v911
        %1288 = vmatprep.subr.mxu0 0.0
        %1289 = vmatpush1.msra.mxu0 %v909
        %1290 = vmatprep.subr.mxu0 0.0
        %1291 = vmatpush1.msra.mxu0 %v907
        %1292 = vmatprep.subr.mxu0 0.0
        %1293 = vmatpush1.msra.mxu0 %v881
        %1294 = vmatprep.subr.mxu0 0.0
        %1295 = vmatpush1.msra.mxu0 %v880
        %1296 = vmatprep.subr.mxu0 0.0
        %1297 = vmatpush1.msra.mxu0 %v879
        %1298 = vmatprep.subr.mxu0 0.0
        %1299 = vmatpush1.msra.mxu0 %v878
        %1300 = vmatprep.subr.mxu0 0.0
        %1301 = vmatpush1.msra.mxu0 %v877
        %1302 = vmatprep.subr.mxu0 0.0
        %1303 = vmatpush1.msra.mxu0 %v876
        %1304 = vmatprep.subr.mxu0 0.0
        %1305 = vmatpush1.msra.mxu0 %v875
        %1306 = vmatprep.subr.mxu0 0.0
        %1307 = vmatpush1.msra.mxu0 %v874
        %1308 = vmatprep.subr.mxu0 0.0
        %1309 = vmatpush2.msra.mxu0 0.0
        %1310 = vmatprep.subr.mxu0 0.0
        %1311 = vmatpush2.msra.mxu0 0.0
        %1312 = vmatprep.subr.mxu0 0.0
        %1313 = vmatpush2.msra.mxu0 0.0
        %1314 = vmatprep.subr.mxu0 0.0
        %1315 = vmatpush2.msra.mxu0 0.0
        %1316 = vmatprep.subr.mxu0 0.0
        %1317 = vmatpush2.msra.mxu0 0.0
        %1318 = vmatprep.subr.mxu0 0.0
        %1319 = vmatpush2.msra.mxu0 0.0
        %1320 = vmatprep.subr.mxu0 0.0
        %1321 = vmatpush2.msra.mxu0 0.0
        %1322 = vmatprep.subr.mxu0 0.0
        %1323 = vmatpush2.msra.mxu0 0.0
        %1324 = vmatprep.subr.mxu0 0.0
        %1325 = vmatpush2.msra.mxu0 %v953
        %1326 = vmatprep.subr.mxu0 0.0
        %1327 = vmatpush2.msra.mxu0 %v951
        %1328 = vmatprep.subr.mxu0 0.0
        %1329 = vmatpush2.msra.mxu0 %v949
        %1330 = vmatprep.subr.mxu0 0.0
        %1331 = vmatpush2.msra.mxu0 %v947
        %1332 = vmatprep.subr.mxu0 0.0
        %1333 = vmatpush2.msra.mxu0 %v945
        %1334 = vmatprep.subr.mxu0 0.0
        %1335 = vmatpush2.msra.mxu0 %v943
        %1336 = vmatprep.subr.mxu0 0.0
        %1337 = vmatpush2.msra.mxu0 %v941
        %1338 = vmatprep.subr.mxu0 0.0
        %1339 = vmatpush2.msra.mxu0 %v939
        %1340 = vmatprep.mubr.f32.mxu0 %v1253
        %1341 = vmatmul.mubr.f32.gmra.mxu0 %v962
        %v1342 = vpop.f32.mrf.mxu0
        %v1343 = vadd.f32 %v1214, %v1342
        %v1344 = vpop.f32.mrf.mxu0
        %1345 = vmatprep.mubr.f32.mxu0 %v1256
        %1346 = vmatmul.mubr.f32.gmra.mxu0 %v964
        %v1347 = vpop.f32.mrf.mxu0
        %v1348 = vadd.f32 %v1219, %v1347
        %v1349 = vpop.f32.mrf.mxu0
        %1350 = vmatprep.mubr.f32.mxu0 %v1259
        %1351 = vmatmul.mubr.f32.gmra.mxu0 %v966
        %v1352 = vpop.f32.mrf.mxu0
        %v1353 = vadd.f32 %v1224, %v1352
        %v1354 = vpop.f32.mrf.mxu0
        %1355 = vmatprep.mubr.f32.mxu0 %v1262
        %1356 = vmatmul.mubr.f32.gmra.mxu0 %v968
        %v1357 = vpop.f32.mrf.mxu0
        %v1358 = vadd.f32 %v1229, %v1357
        %v1359 = vpop.f32.mrf.mxu0
        %1360 = vmatprep.mubr.f32.mxu0 %v1265
        %1361 = vmatmul.mubr.f32.gmra.mxu0 %v970
        %v1362 = vpop.f32.mrf.mxu0
        %v1363 = vadd.f32 %v1234, %v1362
        %v1364 = vpop.f32.mrf.mxu0
        %1365 = vmatprep.mubr.f32.mxu0 %v1268
        %1366 = vmatmul.mubr.f32.gmra.mxu0 %v972
        %v1367 = vpop.f32.mrf.mxu0
        %v1368 = vadd.f32 %v1239, %v1367
        %v1369 = vpop.f32.mrf.mxu0
        %1370 = vmatprep.mubr.f32.mxu0 %v1271
        %1371 = vmatmul.mubr.f32.gmra.mxu0 %v974
        %v1372 = vpop.f32.mrf.mxu0
        %v1373 = vadd.f32 %v1244, %v1372
        %v1374 = vpop.f32.mrf.mxu0
        %1375 = vmatprep.mubr.f32.mxu0 %v1274
        %1376 = vmatmul.mubr.f32.gmra.mxu0 %v976
        %v1377 = vpop.f32.mrf.mxu0
        %v1378 = vadd.f32 %v1249, %v1377
        %v1379 = vpop.f32.mrf.mxu0
        %1380 = vdwg.mxu0
        %1381 = vrot.lane.b32.xlu0 %v873, 4
        %v1382 = vpop.permute.xlu0 %1381
        %v1384 = vmul.f32 %v687, %v1382
        %v1385 = vmul.f32 %v688, %v1382
        %v1386 = vmul.f32 %v689, %v1382
        %v1387 = vmul.f32 %v690, %v1382
        %v1388 = vmul.f32 %v691, %v1382
        %v1389 = vmul.f32 %v692, %v1382
        %v1390 = vmul.f32 %v693, %v1382
        %v1391 = vmul.f32 %v694, %v1382
        %1392 = vrot.lane.b32.xlu0 %v885, 6
        %v1393 = vpop.permute.xlu0 %1392
        %v1395 = vmul.f32 %v687, %v1393
        %v1396 = vmul.f32 %v688, %v1393
        %v1397 = vmul.f32 %v689, %v1393
        %v1398 = vmul.f32 %v690, %v1393
        %v1399 = vmul.f32 %v691, %v1393
        %v1400 = vmul.f32 %v692, %v1393
        %v1401 = vmul.f32 %v693, %v1393
        %v1402 = vmul.f32 %v694, %v1393
        %1411 = vrot.lane.b32.xlu0 %v1395, 126
        %v1412 = vpop.permute.xlu0 %1411
        %1413 = vrot.lane.b32.xlu0 %v1396, 126
        %v1414 = vpop.permute.xlu0 %1413
        %1415 = vrot.lane.b32.xlu0 %v1397, 126
        %v1416 = vpop.permute.xlu0 %1415
        %1417 = vrot.lane.b32.xlu0 %v1398, 126
        %v1418 = vpop.permute.xlu0 %1417
        %1419 = vrot.lane.b32.xlu0 %v1399, 126
        %v1420 = vpop.permute.xlu0 %1419
        %1421 = vrot.lane.b32.xlu0 %v1400, 126
        %v1422 = vpop.permute.xlu0 %1421
        %1423 = vrot.lane.b32.xlu0 %v1401, 126
        %v1424 = vpop.permute.xlu0 %1423
        %1425 = vrot.lane.b32.xlu0 %v1402, 126
        %v1426 = vpop.permute.xlu0 %1425
        %s1427 = scalar_lea.vmem [#allocation2], 256
        %v1428 = vld [vmem:[%s1427] sm:$0xff]
        %v1429 = vld [vmem:[%s1427 + $0x8] sm:$0xff]
        %v1430 = vld [vmem:[%s1427 + $0x10] sm:$0xff]
        %v1431 = vld [vmem:[%s1427 + $0x18] sm:$0xff]
        %v1432 = vld [vmem:[%s1427 + $0x20] sm:$0xff]
        %v1433 = vld [vmem:[%s1427 + $0x28] sm:$0xff]
        %v1434 = vld [vmem:[%s1427 + $0x30] sm:$0xff]
        %v1435 = vld [vmem:[%s1427 + $0x38] sm:$0xff]
        %v1436 = vld [vmem:[%s1427 + $0x40] sm:$0xff]
        %v1437 = vld [vmem:[%s1427 + $0x48] sm:$0xff]
        %v1438 = vld [vmem:[%s1427 + $0x50] sm:$0xff]
        %v1439 = vld [vmem:[%s1427 + $0x58] sm:$0xff]
        %v1440 = vld [vmem:[%s1427 + $0x60] sm:$0xff]
        %v1441 = vld [vmem:[%s1427 + $0x68] sm:$0xff]
        %v1442 = vld [vmem:[%s1427 + $0x70] sm:$0xff]
        %v1443 = vld [vmem:[%s1427 + $0x78] sm:$0xff]
        %1452 = vrot.lane.b32.xlu0 %v1384, 124
        %v1453 = vpop.permute.xlu0 %1452
        %1454 = vrot.lane.b32.xlu0 %v1385, 124
        %v1455 = vpop.permute.xlu0 %1454
        %1456 = vrot.lane.b32.xlu0 %v1386, 124
        %v1457 = vpop.permute.xlu0 %1456
        %1458 = vrot.lane.b32.xlu0 %v1387, 124
        %v1459 = vpop.permute.xlu0 %1458
        %1460 = vrot.lane.b32.xlu0 %v1388, 124
        %v1461 = vpop.permute.xlu0 %1460
        %1462 = vrot.lane.b32.xlu0 %v1389, 124
        %v1463 = vpop.permute.xlu0 %1462
        %1464 = vrot.lane.b32.xlu0 %v1390, 124
        %v1465 = vpop.permute.xlu0 %1464
        %1466 = vrot.lane.b32.xlu0 %v1391, 124
        %v1467 = vpop.permute.xlu0 %1466
        %1468 = vrot.lane.b32.xlu0 %v907, 124
        %v1469 = vpop.permute.xlu0 %1468
        %1470 = vrot.lane.b32.xlu0 %v909, 124
        %v1471 = vpop.permute.xlu0 %1470
        %1472 = vrot.lane.b32.xlu0 %v911, 124
        %v1473 = vpop.permute.xlu0 %1472
        %1474 = vrot.lane.b32.xlu0 %v913, 124
        %v1475 = vpop.permute.xlu0 %1474
        %1476 = vrot.lane.b32.xlu0 %v915, 124
        %v1477 = vpop.permute.xlu0 %1476
        %1478 = vrot.lane.b32.xlu0 %v917, 124
        %v1479 = vpop.permute.xlu0 %1478
        %1480 = vrot.lane.b32.xlu0 %v919, 124
        %v1481 = vpop.permute.xlu0 %1480
        %1482 = vrot.lane.b32.xlu0 %v921, 124
        %v1483 = vpop.permute.xlu0 %1482
        %1484 = vrot.lane.b32.xlu0 %v1412, 124
        %v1485 = vpop.permute.xlu0 %1484
        %1486 = vrot.lane.b32.xlu0 %v1414, 124
        %v1487 = vpop.permute.xlu0 %1486
        %1488 = vrot.lane.b32.xlu0 %v1416, 124
        %v1489 = vpop.permute.xlu0 %1488
        %1490 = vrot.lane.b32.xlu0 %v1418, 124
        %v1491 = vpop.permute.xlu0 %1490
        %1492 = vrot.lane.b32.xlu0 %v1420, 124
        %v1493 = vpop.permute.xlu0 %1492
        %1494 = vrot.lane.b32.xlu0 %v1422, 124
        %v1495 = vpop.permute.xlu0 %1494
        %1496 = vrot.lane.b32.xlu0 %v1424, 124
        %v1497 = vpop.permute.xlu0 %1496
        %1498 = vrot.lane.b32.xlu0 %v1426, 124
        %v1499 = vpop.permute.xlu0 %1498
        %v1525 = vsel %vm1122, %v1429, 0
        %v1528 = vsel %vm1122, %v1431, 0
        %v1531 = vsel %vm1122, %v1433, 0
        %v1534 = vsel %vm1122, %v1435, 0
        %v1537 = vsel %vm1122, %v1437, 0
        %v1540 = vsel %vm1122, %v1439, 0
        %v1543 = vsel %vm1122, %v1441, 0
        %v1546 = vsel %vm1122, %v1443, 0
        %1548 = vmatprep.subr.mxu0 0.0
        %1549 = vmatpush1.msra.mxu0 %v1483
        %1550 = vmatprep.subr.mxu0 0.0
        %1551 = vmatpush1.msra.mxu0 %v1481
        %1552 = vmatprep.subr.mxu0 0.0
        %1553 = vmatpush1.msra.mxu0 %v1479
        %1554 = vmatprep.subr.mxu0 0.0
        %1555 = vmatpush1.msra.mxu0 %v1477
        %1556 = vmatprep.subr.mxu0 0.0
        %1557 = vmatpush1.msra.mxu0 %v1475
        %1558 = vmatprep.subr.mxu0 0.0
        %1559 = vmatpush1.msra.mxu0 %v1473
        %1560 = vmatprep.subr.mxu0 0.0
        %1561 = vmatpush1.msra.mxu0 %v1471
        %1562 = vmatprep.subr.mxu0 0.0
        %1563 = vmatpush1.msra.mxu0 %v1469
        %1564 = vmatprep.subr.mxu0 0.0
        %1565 = vmatpush1.msra.mxu0 %v1467
        %1566 = vmatprep.subr.mxu0 0.0
        %1567 = vmatpush1.msra.mxu0 %v1465
        %1568 = vmatprep.subr.mxu0 0.0
        %1569 = vmatpush1.msra.mxu0 %v1463
        %1570 = vmatprep.subr.mxu0 0.0
        %1571 = vmatpush1.msra.mxu0 %v1461
        %1572 = vmatprep.subr.mxu0 0.0
        %1573 = vmatpush1.msra.mxu0 %v1459
        %1574 = vmatprep.subr.mxu0 0.0
        %1575 = vmatpush1.msra.mxu0 %v1457
        %1576 = vmatprep.subr.mxu0 0.0
        %1577 = vmatpush1.msra.mxu0 %v1455
        %1578 = vmatprep.subr.mxu0 0.0
        %1579 = vmatpush1.msra.mxu0 %v1453
        %1580 = vmatprep.subr.mxu0 0.0
        %1581 = vmatpush2.msra.mxu0 0.0
        %1582 = vmatprep.subr.mxu0 0.0
        %1583 = vmatpush2.msra.mxu0 0.0
        %1584 = vmatprep.subr.mxu0 0.0
        %1585 = vmatpush2.msra.mxu0 0.0
        %1586 = vmatprep.subr.mxu0 0.0
        %1587 = vmatpush2.msra.mxu0 0.0
        %1588 = vmatprep.subr.mxu0 0.0
        %1589 = vmatpush2.msra.mxu0 0.0
        %1590 = vmatprep.subr.mxu0 0.0
        %1591 = vmatpush2.msra.mxu0 0.0
        %1592 = vmatprep.subr.mxu0 0.0
        %1593 = vmatpush2.msra.mxu0 0.0
        %1594 = vmatprep.subr.mxu0 0.0
        %1595 = vmatpush2.msra.mxu0 0.0
        %1596 = vmatprep.subr.mxu0 0.0
        %1597 = vmatpush2.msra.mxu0 %v1499
        %1598 = vmatprep.subr.mxu0 0.0
        %1599 = vmatpush2.msra.mxu0 %v1497
        %1600 = vmatprep.subr.mxu0 0.0
        %1601 = vmatpush2.msra.mxu0 %v1495
        %1602 = vmatprep.subr.mxu0 0.0
        %1603 = vmatpush2.msra.mxu0 %v1493
        %1604 = vmatprep.subr.mxu0 0.0
        %1605 = vmatpush2.msra.mxu0 %v1491
        %1606 = vmatprep.subr.mxu0 0.0
        %1607 = vmatpush2.msra.mxu0 %v1489
        %1608 = vmatprep.subr.mxu0 0.0
        %1609 = vmatpush2.msra.mxu0 %v1487
        %1610 = vmatprep.subr.mxu0 0.0
        %1611 = vmatpush2.msra.mxu0 %v1485
        %1612 = vmatprep.mubr.f32.mxu0 %v1525
        %1613 = vmatmul.mubr.f32.gmra.mxu0 %v1428
        %v1614 = vpop.f32.mrf.mxu0
        %v1615 = vadd.f32 0.0, %v1614
        %v1616 = vpop.f32.mrf.mxu0
        %1617 = vmatprep.mubr.f32.mxu0 %v1528
        %1618 = vmatmul.mubr.f32.gmra.mxu0 %v1430
        %v1619 = vpop.f32.mrf.mxu0
        %v1620 = vadd.f32 0.0, %v1619
        %v1621 = vpop.f32.mrf.mxu0
        %1622 = vmatprep.mubr.f32.mxu0 %v1531
        %1623 = vmatmul.mubr.f32.gmra.mxu0 %v1432
        %v1624 = vpop.f32.mrf.mxu0
        %v1625 = vadd.f32 0.0, %v1624
        %v1626 = vpop.f32.mrf.mxu0
        %1627 = vmatprep.mubr.f32.mxu0 %v1534
        %1628 = vmatmul.mubr.f32.gmra.mxu0 %v1434
        %v1629 = vpop.f32.mrf.mxu0
        %v1630 = vadd.f32 0.0, %v1629
        %v1631 = vpop.f32.mrf.mxu0
        %1632 = vmatprep.mubr.f32.mxu0 %v1537
        %1633 = vmatmul.mubr.f32.gmra.mxu0 %v1436
        %v1634 = vpop.f32.mrf.mxu0
        %v1635 = vadd.f32 0.0, %v1634
        %v1636 = vpop.f32.mrf.mxu0
        %1637 = vmatprep.mubr.f32.mxu0 %v1540
        %1638 = vmatmul.mubr.f32.gmra.mxu0 %v1438
        %v1639 = vpop.f32.mrf.mxu0
        %v1640 = vadd.f32 0.0, %v1639
        %v1641 = vpop.f32.mrf.mxu0
        %1642 = vmatprep.mubr.f32.mxu0 %v1543
        %1643 = vmatmul.mubr.f32.gmra.mxu0 %v1440
        %v1644 = vpop.f32.mrf.mxu0
        %v1645 = vadd.f32 0.0, %v1644
        %v1646 = vpop.f32.mrf.mxu0
        %1647 = vmatprep.mubr.f32.mxu0 %v1546
        %1648 = vmatmul.mubr.f32.gmra.mxu0 %v1442
        %v1649 = vpop.f32.mrf.mxu0
        %v1650 = vadd.f32 0.0, %v1649
        %v1651 = vpop.f32.mrf.mxu0
        %1652 = vdwg.mxu0
        %v1653 = vadd.f32 %v1343, %v1615
        %v1654 = vadd.f32 %v1348, %v1620
        %v1655 = vadd.f32 %v1353, %v1625
        %v1656 = vadd.f32 %v1358, %v1630
        %v1657 = vadd.f32 %v1363, %v1635
        %v1658 = vadd.f32 %v1368, %v1640
        %v1659 = vadd.f32 %v1373, %v1645
        %v1660 = vadd.f32 %v1378, %v1650
        %v1661 = vmul.f32 %v774, %v873
        %v1662 = vmul.f32 %v775, %v873
        %v1663 = vmul.f32 %v776, %v873
        %v1664 = vmul.f32 %v777, %v873
        %v1665 = vmul.f32 %v778, %v873
        %v1666 = vmul.f32 %v779, %v873
        %v1667 = vmul.f32 %v780, %v873
        %v1668 = vmul.f32 %v781, %v873
        %v1669 = vmul.f32 %v774, %v888
        %v1670 = vmul.f32 %v775, %v888
        %v1671 = vmul.f32 %v776, %v888
        %v1672 = vmul.f32 %v777, %v888
        %v1673 = vmul.f32 %v778, %v888
        %v1674 = vmul.f32 %v779, %v888
        %v1675 = vmul.f32 %v780, %v888
        %v1676 = vmul.f32 %v781, %v888
        %1685 = vrot.lane.b32.xlu0 %v774, 127
        %v1686 = vpop.permute.xlu0 %1685
        %1687 = vrot.lane.b32.xlu0 %v775, 127
        %v1688 = vpop.permute.xlu0 %1687
        %1689 = vrot.lane.b32.xlu0 %v776, 127
        %v1690 = vpop.permute.xlu0 %1689
        %1691 = vrot.lane.b32.xlu0 %v777, 127
        %v1692 = vpop.permute.xlu0 %1691
        %1693 = vrot.lane.b32.xlu0 %v778, 127
        %v1694 = vpop.permute.xlu0 %1693
        %1695 = vrot.lane.b32.xlu0 %v779, 127
        %v1696 = vpop.permute.xlu0 %1695
        %1697 = vrot.lane.b32.xlu0 %v780, 127
        %v1698 = vpop.permute.xlu0 %1697
        %1699 = vrot.lane.b32.xlu0 %v781, 127
        %v1700 = vpop.permute.xlu0 %1699
        %1717 = vrot.lane.b32.xlu0 %v1669, 126
        %v1718 = vpop.permute.xlu0 %1717
        %1719 = vrot.lane.b32.xlu0 %v1670, 126
        %v1720 = vpop.permute.xlu0 %1719
        %1721 = vrot.lane.b32.xlu0 %v1671, 126
        %v1722 = vpop.permute.xlu0 %1721
        %1723 = vrot.lane.b32.xlu0 %v1672, 126
        %v1724 = vpop.permute.xlu0 %1723
        %1725 = vrot.lane.b32.xlu0 %v1673, 126
        %v1726 = vpop.permute.xlu0 %1725
        %1727 = vrot.lane.b32.xlu0 %v1674, 126
        %v1728 = vpop.permute.xlu0 %1727
        %1729 = vrot.lane.b32.xlu0 %v1675, 126
        %v1730 = vpop.permute.xlu0 %1729
        %1731 = vrot.lane.b32.xlu0 %v1676, 126
        %v1732 = vpop.permute.xlu0 %1731
        %s1741 = scalar_lea.vmem [#allocation2], 384
        %v1742 = vld [vmem:[%s1741] sm:$0xff]
        %v1743 = vld [vmem:[%s1741 + $0x8] sm:$0xff]
        %v1744 = vld [vmem:[%s1741 + $0x10] sm:$0xff]
        %v1745 = vld [vmem:[%s1741 + $0x18] sm:$0xff]
        %v1746 = vld [vmem:[%s1741 + $0x20] sm:$0xff]
        %v1747 = vld [vmem:[%s1741 + $0x28] sm:$0xff]
        %v1748 = vld [vmem:[%s1741 + $0x30] sm:$0xff]
        %v1749 = vld [vmem:[%s1741 + $0x38] sm:$0xff]
        %v1750 = vld [vmem:[%s1741 + $0x40] sm:$0xff]
        %v1751 = vld [vmem:[%s1741 + $0x48] sm:$0xff]
        %v1752 = vld [vmem:[%s1741 + $0x50] sm:$0xff]
        %v1753 = vld [vmem:[%s1741 + $0x58] sm:$0xff]
        %v1754 = vld [vmem:[%s1741 + $0x60] sm:$0xff]
        %v1755 = vld [vmem:[%s1741 + $0x68] sm:$0xff]
        %v1756 = vld [vmem:[%s1741 + $0x70] sm:$0xff]
        %v1757 = vld [vmem:[%s1741 + $0x78] sm:$0xff]
        %v1759 = vsel %vm1122, %v1743, 0
        %v1762 = vsel %vm1122, %v1745, 0
        %v1765 = vsel %vm1122, %v1747, 0
        %v1768 = vsel %vm1122, %v1749, 0
        %v1771 = vsel %vm1122, %v1751, 0
        %v1774 = vsel %vm1122, %v1753, 0
        %v1777 = vsel %vm1122, %v1755, 0
        %v1780 = vsel %vm1122, %v1757, 0
        %1782 = vmatprep.subr.mxu0 0.0
        %1783 = vmatpush1.msra.mxu0 %v1700
        %1784 = vmatprep.subr.mxu0 0.0
        %1785 = vmatpush1.msra.mxu0 %v1698
        %1786 = vmatprep.subr.mxu0 0.0
        %1787 = vmatpush1.msra.mxu0 %v1696
        %1788 = vmatprep.subr.mxu0 0.0
        %1789 = vmatpush1.msra.mxu0 %v1694
        %1790 = vmatprep.subr.mxu0 0.0
        %1791 = vmatpush1.msra.mxu0 %v1692
        %1792 = vmatprep.subr.mxu0 0.0
        %1793 = vmatpush1.msra.mxu0 %v1690
        %1794 = vmatprep.subr.mxu0 0.0
        %1795 = vmatpush1.msra.mxu0 %v1688
        %1796 = vmatprep.subr.mxu0 0.0
        %1797 = vmatpush1.msra.mxu0 %v1686
        %1798 = vmatprep.subr.mxu0 0.0
        %1799 = vmatpush1.msra.mxu0 %v1668
        %1800 = vmatprep.subr.mxu0 0.0
        %1801 = vmatpush1.msra.mxu0 %v1667
        %1802 = vmatprep.subr.mxu0 0.0
        %1803 = vmatpush1.msra.mxu0 %v1666
        %1804 = vmatprep.subr.mxu0 0.0
        %1805 = vmatpush1.msra.mxu0 %v1665
        %1806 = vmatprep.subr.mxu0 0.0
        %1807 = vmatpush1.msra.mxu0 %v1664
        %1808 = vmatprep.subr.mxu0 0.0
        %1809 = vmatpush1.msra.mxu0 %v1663
        %1810 = vmatprep.subr.mxu0 0.0
        %1811 = vmatpush1.msra.mxu0 %v1662
        %1812 = vmatprep.subr.mxu0 0.0
        %1813 = vmatpush1.msra.mxu0 %v1661
        %1814 = vmatprep.subr.mxu0 0.0
        %1815 = vmatpush2.msra.mxu0 0.0
        %1816 = vmatprep.subr.mxu0 0.0
        %1817 = vmatpush2.msra.mxu0 0.0
        %1818 = vmatprep.subr.mxu0 0.0
        %1819 = vmatpush2.msra.mxu0 0.0
        %1820 = vmatprep.subr.mxu0 0.0
        %1821 = vmatpush2.msra.mxu0 0.0
        %1822 = vmatprep.subr.mxu0 0.0
        %1823 = vmatpush2.msra.mxu0 0.0
        %1824 = vmatprep.subr.mxu0 0.0
        %1825 = vmatpush2.msra.mxu0 0.0
        %1826 = vmatprep.subr.mxu0 0.0
        %1827 = vmatpush2.msra.mxu0 0.0
        %1828 = vmatprep.subr.mxu0 0.0
        %1829 = vmatpush2.msra.mxu0 0.0
        %1830 = vmatprep.subr.mxu0 0.0
        %1831 = vmatpush2.msra.mxu0 %v1732
        %1832 = vmatprep.subr.mxu0 0.0
        %1833 = vmatpush2.msra.mxu0 %v1730
        %1834 = vmatprep.subr.mxu0 0.0
        %1835 = vmatpush2.msra.mxu0 %v1728
        %1836 = vmatprep.subr.mxu0 0.0
        %1837 = vmatpush2.msra.mxu0 %v1726
        %1838 = vmatprep.subr.mxu0 0.0
        %1839 = vmatpush2.msra.mxu0 %v1724
        %1840 = vmatprep.subr.mxu0 0.0
        %1841 = vmatpush2.msra.mxu0 %v1722
        %1842 = vmatprep.subr.mxu0 0.0
        %1843 = vmatpush2.msra.mxu0 %v1720
        %1844 = vmatprep.subr.mxu0 0.0
        %1845 = vmatpush2.msra.mxu0 %v1718
        %1846 = vmatprep.mubr.f32.mxu0 %v1759
        %1847 = vmatmul.mubr.f32.gmra.mxu0 %v1742
        %v1848 = vpop.f32.mrf.mxu0
        %v1849 = vadd.f32 0.0, %v1848
        %v1850 = vpop.f32.mrf.mxu0
        %1851 = vmatprep.mubr.f32.mxu0 %v1762
        %1852 = vmatmul.mubr.f32.gmra.mxu0 %v1744
        %v1853 = vpop.f32.mrf.mxu0
        %v1854 = vadd.f32 0.0, %v1853
        %v1855 = vpop.f32.mrf.mxu0
        %1856 = vmatprep.mubr.f32.mxu0 %v1765
        %1857 = vmatmul.mubr.f32.gmra.mxu0 %v1746
        %v1858 = vpop.f32.mrf.mxu0
        %v1859 = vadd.f32 0.0, %v1858
        %v1860 = vpop.f32.mrf.mxu0
        %1861 = vmatprep.mubr.f32.mxu0 %v1768
        %1862 = vmatmul.mubr.f32.gmra.mxu0 %v1748
        %v1863 = vpop.f32.mrf.mxu0
        %v1864 = vadd.f32 0.0, %v1863
        %v1865 = vpop.f32.mrf.mxu0
        %1866 = vmatprep.mubr.f32.mxu0 %v1771
        %1867 = vmatmul.mubr.f32.gmra.mxu0 %v1750
        %v1868 = vpop.f32.mrf.mxu0
        %v1869 = vadd.f32 0.0, %v1868
        %v1870 = vpop.f32.mrf.mxu0
        %1871 = vmatprep.mubr.f32.mxu0 %v1774
        %1872 = vmatmul.mubr.f32.gmra.mxu0 %v1752
        %v1873 = vpop.f32.mrf.mxu0
        %v1874 = vadd.f32 0.0, %v1873
        %v1875 = vpop.f32.mrf.mxu0
        %1876 = vmatprep.mubr.f32.mxu0 %v1777
        %1877 = vmatmul.mubr.f32.gmra.mxu0 %v1754
        %v1878 = vpop.f32.mrf.mxu0
        %v1879 = vadd.f32 0.0, %v1878
        %v1880 = vpop.f32.mrf.mxu0
        %1881 = vmatprep.mubr.f32.mxu0 %v1780
        %1882 = vmatmul.mubr.f32.gmra.mxu0 %v1756
        %v1883 = vpop.f32.mrf.mxu0
        %v1884 = vadd.f32 0.0, %v1883
        %v1885 = vpop.f32.mrf.mxu0
        %1886 = vdwg.mxu0
        %v1887 = vadd.f32 %v1653, %v1849
        %v1888 = vadd.f32 %v1654, %v1854
        %v1889 = vadd.f32 %v1655, %v1859
        %v1890 = vadd.f32 %v1656, %v1864
        %v1891 = vadd.f32 %v1657, %v1869
        %v1892 = vadd.f32 %v1658, %v1874
        %v1893 = vadd.f32 %v1659, %v1879
        %v1894 = vadd.f32 %v1660, %v1884
        %v1895 = vmul.f32 %v774, %v980
        %v1896 = vmul.f32 %v775, %v980
        %v1897 = vmul.f32 %v776, %v980
        %v1898 = vmul.f32 %v777, %v980
        %v1899 = vmul.f32 %v778, %v980
        %v1900 = vmul.f32 %v779, %v980
        %v1901 = vmul.f32 %v780, %v980
        %v1902 = vmul.f32 %v781, %v980
        %v1903 = vmul.f32 %v774, %v991
        %v1904 = vmul.f32 %v775, %v991
        %v1905 = vmul.f32 %v776, %v991
        %v1906 = vmul.f32 %v777, %v991
        %v1907 = vmul.f32 %v778, %v991
        %v1908 = vmul.f32 %v779, %v991
        %v1909 = vmul.f32 %v780, %v991
        %v1910 = vmul.f32 %v781, %v991
        %1919 = vrot.lane.b32.xlu0 %v1903, 126
        %v1920 = vpop.permute.xlu0 %1919
        %1921 = vrot.lane.b32.xlu0 %v1904, 126
        %v1922 = vpop.permute.xlu0 %1921
        %1923 = vrot.lane.b32.xlu0 %v1905, 126
        %v1924 = vpop.permute.xlu0 %1923
        %1925 = vrot.lane.b32.xlu0 %v1906, 126
        %v1926 = vpop.permute.xlu0 %1925
        %1927 = vrot.lane.b32.xlu0 %v1907, 126
        %v1928 = vpop.permute.xlu0 %1927
        %1929 = vrot.lane.b32.xlu0 %v1908, 126
        %v1930 = vpop.permute.xlu0 %1929
        %1931 = vrot.lane.b32.xlu0 %v1909, 126
        %v1932 = vpop.permute.xlu0 %1931
        %1933 = vrot.lane.b32.xlu0 %v1910, 126
        %v1934 = vpop.permute.xlu0 %1933
        %s1935 = scalar_lea.vmem [#allocation2], 512
        %v1936 = vld [vmem:[%s1935] sm:$0xff]
        %v1937 = vld [vmem:[%s1935 + $0x8] sm:$0xff]
        %v1938 = vld [vmem:[%s1935 + $0x10] sm:$0xff]
        %v1939 = vld [vmem:[%s1935 + $0x18] sm:$0xff]
        %v1940 = vld [vmem:[%s1935 + $0x20] sm:$0xff]
        %v1941 = vld [vmem:[%s1935 + $0x28] sm:$0xff]
        %v1942 = vld [vmem:[%s1935 + $0x30] sm:$0xff]
        %v1943 = vld [vmem:[%s1935 + $0x38] sm:$0xff]
        %v1944 = vld [vmem:[%s1935 + $0x40] sm:$0xff]
        %v1945 = vld [vmem:[%s1935 + $0x48] sm:$0xff]
        %v1946 = vld [vmem:[%s1935 + $0x50] sm:$0xff]
        %v1947 = vld [vmem:[%s1935 + $0x58] sm:$0xff]
        %v1948 = vld [vmem:[%s1935 + $0x60] sm:$0xff]
        %v1949 = vld [vmem:[%s1935 + $0x68] sm:$0xff]
        %v1950 = vld [vmem:[%s1935 + $0x70] sm:$0xff]
        %v1951 = vld [vmem:[%s1935 + $0x78] sm:$0xff]
        %1960 = vrot.lane.b32.xlu0 %v1895, 126
        %v1961 = vpop.permute.xlu0 %1960
        %1962 = vrot.lane.b32.xlu0 %v1896, 126
        %v1963 = vpop.permute.xlu0 %1962
        %1964 = vrot.lane.b32.xlu0 %v1897, 126
        %v1965 = vpop.permute.xlu0 %1964
        %1966 = vrot.lane.b32.xlu0 %v1898, 126
        %v1967 = vpop.permute.xlu0 %1966
        %1968 = vrot.lane.b32.xlu0 %v1899, 126
        %v1969 = vpop.permute.xlu0 %1968
        %1970 = vrot.lane.b32.xlu0 %v1900, 126
        %v1971 = vpop.permute.xlu0 %1970
        %1972 = vrot.lane.b32.xlu0 %v1901, 126
        %v1973 = vpop.permute.xlu0 %1972
        %1974 = vrot.lane.b32.xlu0 %v1902, 126
        %v1975 = vpop.permute.xlu0 %1974
        %1976 = vrot.lane.b32.xlu0 %v1686, 126
        %v1977 = vpop.permute.xlu0 %1976
        %1978 = vrot.lane.b32.xlu0 %v1688, 126
        %v1979 = vpop.permute.xlu0 %1978
        %1980 = vrot.lane.b32.xlu0 %v1690, 126
        %v1981 = vpop.permute.xlu0 %1980
        %1982 = vrot.lane.b32.xlu0 %v1692, 126
        %v1983 = vpop.permute.xlu0 %1982
        %1984 = vrot.lane.b32.xlu0 %v1694, 126
        %v1985 = vpop.permute.xlu0 %1984
        %1986 = vrot.lane.b32.xlu0 %v1696, 126
        %v1987 = vpop.permute.xlu0 %1986
        %1988 = vrot.lane.b32.xlu0 %v1698, 126
        %v1989 = vpop.permute.xlu0 %1988
        %1990 = vrot.lane.b32.xlu0 %v1700, 126
        %v1991 = vpop.permute.xlu0 %1990
        %1992 = vrot.lane.b32.xlu0 %v1920, 126
        %v1993 = vpop.permute.xlu0 %1992
        %1994 = vrot.lane.b32.xlu0 %v1922, 126
        %v1995 = vpop.permute.xlu0 %1994
        %1996 = vrot.lane.b32.xlu0 %v1924, 126
        %v1997 = vpop.permute.xlu0 %1996
        %1998 = vrot.lane.b32.xlu0 %v1926, 126
        %v1999 = vpop.permute.xlu0 %1998
        %2000 = vrot.lane.b32.xlu0 %v1928, 126
        %v2001 = vpop.permute.xlu0 %2000
        %2002 = vrot.lane.b32.xlu0 %v1930, 126
        %v2003 = vpop.permute.xlu0 %2002
        %2004 = vrot.lane.b32.xlu0 %v1932, 126
        %v2005 = vpop.permute.xlu0 %2004
        %2006 = vrot.lane.b32.xlu0 %v1934, 126
        %v2007 = vpop.permute.xlu0 %2006
        %v2033 = vsel %vm1122, %v1937, 0
        %v2036 = vsel %vm1122, %v1939, 0
        %v2039 = vsel %vm1122, %v1941, 0
        %v2042 = vsel %vm1122, %v1943, 0
        %v2045 = vsel %vm1122, %v1945, 0
        %v2048 = vsel %vm1122, %v1947, 0
        %v2051 = vsel %vm1122, %v1949, 0
        %v2054 = vsel %vm1122, %v1951, 0
        %2056 = vmatprep.subr.mxu0 0.0
        %2057 = vmatpush1.msra.mxu0 %v1991
        %2058 = vmatprep.subr.mxu0 0.0
        %2059 = vmatpush1.msra.mxu0 %v1989
        %2060 = vmatprep.subr.mxu0 0.0
        %2061 = vmatpush1.msra.mxu0 %v1987
        %2062 = vmatprep.subr.mxu0 0.0
        %2063 = vmatpush1.msra.mxu0 %v1985
        %2064 = vmatprep.subr.mxu0 0.0
        %2065 = vmatpush1.msra.mxu0 %v1983
        %2066 = vmatprep.subr.mxu0 0.0
        %2067 = vmatpush1.msra.mxu0 %v1981
        %2068 = vmatprep.subr.mxu0 0.0
        %2069 = vmatpush1.msra.mxu0 %v1979
        %2070 = vmatprep.subr.mxu0 0.0
        %2071 = vmatpush1.msra.mxu0 %v1977
        %2072 = vmatprep.subr.mxu0 0.0
        %2073 = vmatpush1.msra.mxu0 %v1975
        %2074 = vmatprep.subr.mxu0 0.0
        %2075 = vmatpush1.msra.mxu0 %v1973
        %2076 = vmatprep.subr.mxu0 0.0
        %2077 = vmatpush1.msra.mxu0 %v1971
        %2078 = vmatprep.subr.mxu0 0.0
        %2079 = vmatpush1.msra.mxu0 %v1969
        %2080 = vmatprep.subr.mxu0 0.0
        %2081 = vmatpush1.msra.mxu0 %v1967
        %2082 = vmatprep.subr.mxu0 0.0
        %2083 = vmatpush1.msra.mxu0 %v1965
        %2084 = vmatprep.subr.mxu0 0.0
        %2085 = vmatpush1.msra.mxu0 %v1963
        %2086 = vmatprep.subr.mxu0 0.0
        %2087 = vmatpush1.msra.mxu0 %v1961
        %2088 = vmatprep.subr.mxu0 0.0
        %2089 = vmatpush2.msra.mxu0 0.0
        %2090 = vmatprep.subr.mxu0 0.0
        %2091 = vmatpush2.msra.mxu0 0.0
        %2092 = vmatprep.subr.mxu0 0.0
        %2093 = vmatpush2.msra.mxu0 0.0
        %2094 = vmatprep.subr.mxu0 0.0
        %2095 = vmatpush2.msra.mxu0 0.0
        %2096 = vmatprep.subr.mxu0 0.0
        %2097 = vmatpush2.msra.mxu0 0.0
        %2098 = vmatprep.subr.mxu0 0.0
        %2099 = vmatpush2.msra.mxu0 0.0
        %2100 = vmatprep.subr.mxu0 0.0
        %2101 = vmatpush2.msra.mxu0 0.0
        %2102 = vmatprep.subr.mxu0 0.0
        %2103 = vmatpush2.msra.mxu0 0.0
        %2104 = vmatprep.subr.mxu0 0.0
        %2105 = vmatpush2.msra.mxu0 %v2007
        %2106 = vmatprep.subr.mxu0 0.0
        %2107 = vmatpush2.msra.mxu0 %v2005
        %2108 = vmatprep.subr.mxu0 0.0
        %2109 = vmatpush2.msra.mxu0 %v2003
        %2110 = vmatprep.subr.mxu0 0.0
        %2111 = vmatpush2.msra.mxu0 %v2001
        %2112 = vmatprep.subr.mxu0 0.0
        %2113 = vmatpush2.msra.mxu0 %v1999
        %2114 = vmatprep.subr.mxu0 0.0
        %2115 = vmatpush2.msra.mxu0 %v1997
        %2116 = vmatprep.subr.mxu0 0.0
        %2117 = vmatpush2.msra.mxu0 %v1995
        %2118 = vmatprep.subr.mxu0 0.0
        %2119 = vmatpush2.msra.mxu0 %v1993
        %2120 = vmatprep.mubr.f32.mxu0 %v2033
        %2121 = vmatmul.mubr.f32.gmra.mxu0 %v1936
        %v2122 = vpop.f32.mrf.mxu0
        %v2123 = vadd.f32 0.0, %v2122
        %v2124 = vpop.f32.mrf.mxu0
        %2125 = vmatprep.mubr.f32.mxu0 %v2036
        %2126 = vmatmul.mubr.f32.gmra.mxu0 %v1938
        %v2127 = vpop.f32.mrf.mxu0
        %v2128 = vadd.f32 0.0, %v2127
        %v2129 = vpop.f32.mrf.mxu0
        %2130 = vmatprep.mubr.f32.mxu0 %v2039
        %2131 = vmatmul.mubr.f32.gmra.mxu0 %v1940
        %v2132 = vpop.f32.mrf.mxu0
        %v2133 = vadd.f32 0.0, %v2132
        %v2134 = vpop.f32.mrf.mxu0
        %2135 = vmatprep.mubr.f32.mxu0 %v2042
        %2136 = vmatmul.mubr.f32.gmra.mxu0 %v1942
        %v2137 = vpop.f32.mrf.mxu0
        %v2138 = vadd.f32 0.0, %v2137
        %v2139 = vpop.f32.mrf.mxu0
        %2140 = vmatprep.mubr.f32.mxu0 %v2045
        %2141 = vmatmul.mubr.f32.gmra.mxu0 %v1944
        %v2142 = vpop.f32.mrf.mxu0
        %v2143 = vadd.f32 0.0, %v2142
        %v2144 = vpop.f32.mrf.mxu0
        %2145 = vmatprep.mubr.f32.mxu0 %v2048
        %2146 = vmatmul.mubr.f32.gmra.mxu0 %v1946
        %v2147 = vpop.f32.mrf.mxu0
        %v2148 = vadd.f32 0.0, %v2147
        %v2149 = vpop.f32.mrf.mxu0
        %2150 = vmatprep.mubr.f32.mxu0 %v2051
        %2151 = vmatmul.mubr.f32.gmra.mxu0 %v1948
        %v2152 = vpop.f32.mrf.mxu0
        %v2153 = vadd.f32 0.0, %v2152
        %v2154 = vpop.f32.mrf.mxu0
        %2155 = vmatprep.mubr.f32.mxu0 %v2054
        %2156 = vmatmul.mubr.f32.gmra.mxu0 %v1950
        %v2157 = vpop.f32.mrf.mxu0
        %v2158 = vadd.f32 0.0, %v2157
        %v2159 = vpop.f32.mrf.mxu0
        %2160 = vdwg.mxu0
        %v2161 = vadd.f32 %v1887, %v2123
        %v2162 = vadd.f32 %v1888, %v2128
        %v2163 = vadd.f32 %v1889, %v2133
        %v2164 = vadd.f32 %v1890, %v2138
        %v2165 = vadd.f32 %v1891, %v2143
        %v2166 = vadd.f32 %v1892, %v2148
        %v2167 = vadd.f32 %v1893, %v2153
        %v2168 = vadd.f32 %v1894, %v2158
        %v2169 = vmul.f32 %v774, %v1382
        %v2170 = vmul.f32 %v775, %v1382
        %v2171 = vmul.f32 %v776, %v1382
        %v2172 = vmul.f32 %v777, %v1382
        %v2173 = vmul.f32 %v778, %v1382
        %v2174 = vmul.f32 %v779, %v1382
        %v2175 = vmul.f32 %v780, %v1382
        %v2176 = vmul.f32 %v781, %v1382
        %v2177 = vmul.f32 %v774, %v1393
        %v2178 = vmul.f32 %v775, %v1393
        %v2179 = vmul.f32 %v776, %v1393
        %v2180 = vmul.f32 %v777, %v1393
        %v2181 = vmul.f32 %v778, %v1393
        %v2182 = vmul.f32 %v779, %v1393
        %v2183 = vmul.f32 %v780, %v1393
        %v2184 = vmul.f32 %v781, %v1393
        %2193 = vrot.lane.b32.xlu0 %v2177, 126
        %v2194 = vpop.permute.xlu0 %2193
        %2195 = vrot.lane.b32.xlu0 %v2178, 126
        %v2196 = vpop.permute.xlu0 %2195
        %2197 = vrot.lane.b32.xlu0 %v2179, 126
        %v2198 = vpop.permute.xlu0 %2197
        %2199 = vrot.lane.b32.xlu0 %v2180, 126
        %v2200 = vpop.permute.xlu0 %2199
        %2201 = vrot.lane.b32.xlu0 %v2181, 126
        %v2202 = vpop.permute.xlu0 %2201
        %2203 = vrot.lane.b32.xlu0 %v2182, 126
        %v2204 = vpop.permute.xlu0 %2203
        %2205 = vrot.lane.b32.xlu0 %v2183, 126
        %v2206 = vpop.permute.xlu0 %2205
        %2207 = vrot.lane.b32.xlu0 %v2184, 126
        %v2208 = vpop.permute.xlu0 %2207
        %s2209 = scalar_lea.vmem [#allocation2], 640
        %v2210 = vld [vmem:[%s2209] sm:$0xff]
        %v2211 = vld [vmem:[%s2209 + $0x8] sm:$0xff]
        %v2212 = vld [vmem:[%s2209 + $0x10] sm:$0xff]
        %v2213 = vld [vmem:[%s2209 + $0x18] sm:$0xff]
        %v2214 = vld [vmem:[%s2209 + $0x20] sm:$0xff]
        %v2215 = vld [vmem:[%s2209 + $0x28] sm:$0xff]
        %v2216 = vld [vmem:[%s2209 + $0x30] sm:$0xff]
        %v2217 = vld [vmem:[%s2209 + $0x38] sm:$0xff]
        %v2218 = vld [vmem:[%s2209 + $0x40] sm:$0xff]
        %v2219 = vld [vmem:[%s2209 + $0x48] sm:$0xff]
        %v2220 = vld [vmem:[%s2209 + $0x50] sm:$0xff]
        %v2221 = vld [vmem:[%s2209 + $0x58] sm:$0xff]
        %v2222 = vld [vmem:[%s2209 + $0x60] sm:$0xff]
        %v2223 = vld [vmem:[%s2209 + $0x68] sm:$0xff]
        %v2224 = vld [vmem:[%s2209 + $0x70] sm:$0xff]
        %v2225 = vld [vmem:[%s2209 + $0x78] sm:$0xff]
        %2234 = vrot.lane.b32.xlu0 %v2169, 124
        %v2235 = vpop.permute.xlu0 %2234
        %2236 = vrot.lane.b32.xlu0 %v2170, 124
        %v2237 = vpop.permute.xlu0 %2236
        %2238 = vrot.lane.b32.xlu0 %v2171, 124
        %v2239 = vpop.permute.xlu0 %2238
        %2240 = vrot.lane.b32.xlu0 %v2172, 124
        %v2241 = vpop.permute.xlu0 %2240
        %2242 = vrot.lane.b32.xlu0 %v2173, 124
        %v2243 = vpop.permute.xlu0 %2242
        %2244 = vrot.lane.b32.xlu0 %v2174, 124
        %v2245 = vpop.permute.xlu0 %2244
        %2246 = vrot.lane.b32.xlu0 %v2175, 124
        %v2247 = vpop.permute.xlu0 %2246
        %2248 = vrot.lane.b32.xlu0 %v2176, 124
        %v2249 = vpop.permute.xlu0 %2248
        %2250 = vrot.lane.b32.xlu0 %v1686, 124
        %v2251 = vpop.permute.xlu0 %2250
        %2252 = vrot.lane.b32.xlu0 %v1688, 124
        %v2253 = vpop.permute.xlu0 %2252
        %2254 = vrot.lane.b32.xlu0 %v1690, 124
        %v2255 = vpop.permute.xlu0 %2254
        %2256 = vrot.lane.b32.xlu0 %v1692, 124
        %v2257 = vpop.permute.xlu0 %2256
        %2258 = vrot.lane.b32.xlu0 %v1694, 124
        %v2259 = vpop.permute.xlu0 %2258
        %2260 = vrot.lane.b32.xlu0 %v1696, 124
        %v2261 = vpop.permute.xlu0 %2260
        %2262 = vrot.lane.b32.xlu0 %v1698, 124
        %v2263 = vpop.permute.xlu0 %2262
        %2264 = vrot.lane.b32.xlu0 %v1700, 124
        %v2265 = vpop.permute.xlu0 %2264
        %2266 = vrot.lane.b32.xlu0 %v2194, 124
        %v2267 = vpop.permute.xlu0 %2266
        %2268 = vrot.lane.b32.xlu0 %v2196, 124
        %v2269 = vpop.permute.xlu0 %2268
        %2270 = vrot.lane.b32.xlu0 %v2198, 124
        %v2271 = vpop.permute.xlu0 %2270
        %2272 = vrot.lane.b32.xlu0 %v2200, 124
        %v2273 = vpop.permute.xlu0 %2272
        %2274 = vrot.lane.b32.xlu0 %v2202, 124
        %v2275 = vpop.permute.xlu0 %2274
        %2276 = vrot.lane.b32.xlu0 %v2204, 124
        %v2277 = vpop.permute.xlu0 %2276
        %2278 = vrot.lane.b32.xlu0 %v2206, 124
        %v2279 = vpop.permute.xlu0 %2278
        %2280 = vrot.lane.b32.xlu0 %v2208, 124
        %v2281 = vpop.permute.xlu0 %2280
        %v2307 = vsel %vm1122, %v2211, 0
        %v2310 = vsel %vm1122, %v2213, 0
        %v2313 = vsel %vm1122, %v2215, 0
        %v2316 = vsel %vm1122, %v2217, 0
        %v2319 = vsel %vm1122, %v2219, 0
        %v2322 = vsel %vm1122, %v2221, 0
        %v2325 = vsel %vm1122, %v2223, 0
        %v2328 = vsel %vm1122, %v2225, 0
        %2330 = vmatprep.subr.mxu0 0.0
        %2331 = vmatpush1.msra.mxu0 %v2265
        %2332 = vmatprep.subr.mxu0 0.0
        %2333 = vmatpush1.msra.mxu0 %v2263
        %2334 = vmatprep.subr.mxu0 0.0
        %2335 = vmatpush1.msra.mxu0 %v2261
        %2336 = vmatprep.subr.mxu0 0.0
        %2337 = vmatpush1.msra.mxu0 %v2259
        %2338 = vmatprep.subr.mxu0 0.0
        %2339 = vmatpush1.msra.mxu0 %v2257
        %2340 = vmatprep.subr.mxu0 0.0
        %2341 = vmatpush1.msra.mxu0 %v2255
        %2342 = vmatprep.subr.mxu0 0.0
        %2343 = vmatpush1.msra.mxu0 %v2253
        %2344 = vmatprep.subr.mxu0 0.0
        %2345 = vmatpush1.msra.mxu0 %v2251
        %2346 = vmatprep.subr.mxu0 0.0
        %2347 = vmatpush1.msra.mxu0 %v2249
        %2348 = vmatprep.subr.mxu0 0.0
        %2349 = vmatpush1.msra.mxu0 %v2247
        %2350 = vmatprep.subr.mxu0 0.0
        %2351 = vmatpush1.msra.mxu0 %v2245
        %2352 = vmatprep.subr.mxu0 0.0
        %2353 = vmatpush1.msra.mxu0 %v2243
        %2354 = vmatprep.subr.mxu0 0.0
        %2355 = vmatpush1.msra.mxu0 %v2241
        %2356 = vmatprep.subr.mxu0 0.0
        %2357 = vmatpush1.msra.mxu0 %v2239
        %2358 = vmatprep.subr.mxu0 0.0
        %2359 = vmatpush1.msra.mxu0 %v2237
        %2360 = vmatprep.subr.mxu0 0.0
        %2361 = vmatpush1.msra.mxu0 %v2235
        %2362 = vmatprep.subr.mxu0 0.0
        %2363 = vmatpush2.msra.mxu0 0.0
        %2364 = vmatprep.subr.mxu0 0.0
        %2365 = vmatpush2.msra.mxu0 0.0
        %2366 = vmatprep.subr.mxu0 0.0
        %2367 = vmatpush2.msra.mxu0 0.0
        %2368 = vmatprep.subr.mxu0 0.0
        %2369 = vmatpush2.msra.mxu0 0.0
        %2370 = vmatprep.subr.mxu0 0.0
        %2371 = vmatpush2.msra.mxu0 0.0
        %2372 = vmatprep.subr.mxu0 0.0
        %2373 = vmatpush2.msra.mxu0 0.0
        %2374 = vmatprep.subr.mxu0 0.0
        %2375 = vmatpush2.msra.mxu0 0.0
        %2376 = vmatprep.subr.mxu0 0.0
        %2377 = vmatpush2.msra.mxu0 0.0
        %2378 = vmatprep.subr.mxu0 0.0
        %2379 = vmatpush2.msra.mxu0 %v2281
        %2380 = vmatprep.subr.mxu0 0.0
        %2381 = vmatpush2.msra.mxu0 %v2279
        %2382 = vmatprep.subr.mxu0 0.0
        %2383 = vmatpush2.msra.mxu0 %v2277
        %2384 = vmatprep.subr.mxu0 0.0
        %2385 = vmatpush2.msra.mxu0 %v2275
        %2386 = vmatprep.subr.mxu0 0.0
        %2387 = vmatpush2.msra.mxu0 %v2273
        %2388 = vmatprep.subr.mxu0 0.0
        %2389 = vmatpush2.msra.mxu0 %v2271
        %2390 = vmatprep.subr.mxu0 0.0
        %2391 = vmatpush2.msra.mxu0 %v2269
        %2392 = vmatprep.subr.mxu0 0.0
        %2393 = vmatpush2.msra.mxu0 %v2267
        %2394 = vmatprep.mubr.f32.mxu0 %v2307
        %2395 = vmatmul.mubr.f32.gmra.mxu0 %v2210
        %v2396 = vpop.f32.mrf.mxu0
        %v2397 = vadd.f32 0.0, %v2396
        %v2398 = vpop.f32.mrf.mxu0
        %2399 = vmatprep.mubr.f32.mxu0 %v2310
        %2400 = vmatmul.mubr.f32.gmra.mxu0 %v2212
        %v2401 = vpop.f32.mrf.mxu0
        %v2402 = vadd.f32 0.0, %v2401
        %v2403 = vpop.f32.mrf.mxu0
        %2404 = vmatprep.mubr.f32.mxu0 %v2313
        %2405 = vmatmul.mubr.f32.gmra.mxu0 %v2214
        %v2406 = vpop.f32.mrf.mxu0
        %v2407 = vadd.f32 0.0, %v2406
        %v2408 = vpop.f32.mrf.mxu0
        %2409 = vmatprep.mubr.f32.mxu0 %v2316
        %2410 = vmatmul.mubr.f32.gmra.mxu0 %v2216
        %v2411 = vpop.f32.mrf.mxu0
        %v2412 = vadd.f32 0.0, %v2411
        %v2413 = vpop.f32.mrf.mxu0
        %2414 = vmatprep.mubr.f32.mxu0 %v2319
        %2415 = vmatmul.mubr.f32.gmra.mxu0 %v2218
        %v2416 = vpop.f32.mrf.mxu0
        %v2417 = vadd.f32 0.0, %v2416
        %v2418 = vpop.f32.mrf.mxu0
        %2419 = vmatprep.mubr.f32.mxu0 %v2322
        %2420 = vmatmul.mubr.f32.gmra.mxu0 %v2220
        %v2421 = vpop.f32.mrf.mxu0
        %v2422 = vadd.f32 0.0, %v2421
        %v2423 = vpop.f32.mrf.mxu0
        %2424 = vmatprep.mubr.f32.mxu0 %v2325
        %2425 = vmatmul.mubr.f32.gmra.mxu0 %v2222
        %v2426 = vpop.f32.mrf.mxu0
        %v2427 = vadd.f32 0.0, %v2426
        %v2428 = vpop.f32.mrf.mxu0
        %2429 = vmatprep.mubr.f32.mxu0 %v2328
        %2430 = vmatmul.mubr.f32.gmra.mxu0 %v2224
        %v2431 = vpop.f32.mrf.mxu0
        %v2432 = vadd.f32 0.0, %v2431
        %v2433 = vpop.f32.mrf.mxu0
        %2434 = vdwg.mxu0
        %v2435 = vadd.f32 %v2161, %v2397
        %v2436 = vadd.f32 %v2162, %v2402
        %v2437 = vadd.f32 %v2163, %v2407
        %v2438 = vadd.f32 %v2164, %v2412
        %v2439 = vadd.f32 %v2165, %v2417
        %v2440 = vadd.f32 %v2166, %v2422
        %v2441 = vadd.f32 %v2167, %v2427
        %v2442 = vadd.f32 %v2168, %v2432
        %v2443 = vmul.f32 %v862, %v873
        %v2444 = vmul.f32 %v863, %v873
        %v2445 = vmul.f32 %v864, %v873
        %v2446 = vmul.f32 %v865, %v873
        %v2447 = vmul.f32 %v866, %v873
        %v2448 = vmul.f32 %v867, %v873
        %v2449 = vmul.f32 %v868, %v873
        %v2450 = vmul.f32 %v869, %v873
        %v2451 = vmul.f32 %v862, %v888
        %v2452 = vmul.f32 %v863, %v888
        %v2453 = vmul.f32 %v864, %v888
        %v2454 = vmul.f32 %v865, %v888
        %v2455 = vmul.f32 %v866, %v888
        %v2456 = vmul.f32 %v867, %v888
        %v2457 = vmul.f32 %v868, %v888
        %v2458 = vmul.f32 %v869, %v888
        %2467 = vrot.lane.b32.xlu0 %v862, 127
        %v2468 = vpop.permute.xlu0 %2467
        %2469 = vrot.lane.b32.xlu0 %v863, 127
        %v2470 = vpop.permute.xlu0 %2469
        %2471 = vrot.lane.b32.xlu0 %v864, 127
        %v2472 = vpop.permute.xlu0 %2471
        %2473 = vrot.lane.b32.xlu0 %v865, 127
        %v2474 = vpop.permute.xlu0 %2473
        %2475 = vrot.lane.b32.xlu0 %v866, 127
        %v2476 = vpop.permute.xlu0 %2475
        %2477 = vrot.lane.b32.xlu0 %v867, 127
        %v2478 = vpop.permute.xlu0 %2477
        %2479 = vrot.lane.b32.xlu0 %v868, 127
        %v2480 = vpop.permute.xlu0 %2479
        %2481 = vrot.lane.b32.xlu0 %v869, 127
        %v2482 = vpop.permute.xlu0 %2481
        %2499 = vrot.lane.b32.xlu0 %v2451, 126
        %v2500 = vpop.permute.xlu0 %2499
        %2501 = vrot.lane.b32.xlu0 %v2452, 126
        %v2502 = vpop.permute.xlu0 %2501
        %2503 = vrot.lane.b32.xlu0 %v2453, 126
        %v2504 = vpop.permute.xlu0 %2503
        %2505 = vrot.lane.b32.xlu0 %v2454, 126
        %v2506 = vpop.permute.xlu0 %2505
        %2507 = vrot.lane.b32.xlu0 %v2455, 126
        %v2508 = vpop.permute.xlu0 %2507
        %2509 = vrot.lane.b32.xlu0 %v2456, 126
        %v2510 = vpop.permute.xlu0 %2509
        %2511 = vrot.lane.b32.xlu0 %v2457, 126
        %v2512 = vpop.permute.xlu0 %2511
        %2513 = vrot.lane.b32.xlu0 %v2458, 126
        %v2514 = vpop.permute.xlu0 %2513
        %s2523 = scalar_lea.vmem [#allocation2], 768
        %v2524 = vld [vmem:[%s2523] sm:$0xff]
        %v2525 = vld [vmem:[%s2523 + $0x8] sm:$0xff]
        %v2526 = vld [vmem:[%s2523 + $0x10] sm:$0xff]
        %v2527 = vld [vmem:[%s2523 + $0x18] sm:$0xff]
        %v2528 = vld [vmem:[%s2523 + $0x20] sm:$0xff]
        %v2529 = vld [vmem:[%s2523 + $0x28] sm:$0xff]
        %v2530 = vld [vmem:[%s2523 + $0x30] sm:$0xff]
        %v2531 = vld [vmem:[%s2523 + $0x38] sm:$0xff]
        %v2532 = vld [vmem:[%s2523 + $0x40] sm:$0xff]
        %v2533 = vld [vmem:[%s2523 + $0x48] sm:$0xff]
        %v2534 = vld [vmem:[%s2523 + $0x50] sm:$0xff]
        %v2535 = vld [vmem:[%s2523 + $0x58] sm:$0xff]
        %v2536 = vld [vmem:[%s2523 + $0x60] sm:$0xff]
        %v2537 = vld [vmem:[%s2523 + $0x68] sm:$0xff]
        %v2538 = vld [vmem:[%s2523 + $0x70] sm:$0xff]
        %v2539 = vld [vmem:[%s2523 + $0x78] sm:$0xff]
        %v2541 = vsel %vm1122, %v2525, 0
        %v2544 = vsel %vm1122, %v2527, 0
        %v2547 = vsel %vm1122, %v2529, 0
        %v2550 = vsel %vm1122, %v2531, 0
        %v2553 = vsel %vm1122, %v2533, 0
        %v2556 = vsel %vm1122, %v2535, 0
        %v2559 = vsel %vm1122, %v2537, 0
        %v2562 = vsel %vm1122, %v2539, 0
        %2564 = vmatprep.subr.mxu0 0.0
        %2565 = vmatpush1.msra.mxu0 %v2482
        %2566 = vmatprep.subr.mxu0 0.0
        %2567 = vmatpush1.msra.mxu0 %v2480
        %2568 = vmatprep.subr.mxu0 0.0
        %2569 = vmatpush1.msra.mxu0 %v2478
        %2570 = vmatprep.subr.mxu0 0.0
        %2571 = vmatpush1.msra.mxu0 %v2476
        %2572 = vmatprep.subr.mxu0 0.0
        %2573 = vmatpush1.msra.mxu0 %v2474
        %2574 = vmatprep.subr.mxu0 0.0
        %2575 = vmatpush1.msra.mxu0 %v2472
        %2576 = vmatprep.subr.mxu0 0.0
        %2577 = vmatpush1.msra.mxu0 %v2470
        %2578 = vmatprep.subr.mxu0 0.0
        %2579 = vmatpush1.msra.mxu0 %v2468
        %2580 = vmatprep.subr.mxu0 0.0
        %2581 = vmatpush1.msra.mxu0 %v2450
        %2582 = vmatprep.subr.mxu0 0.0
        %2583 = vmatpush1.msra.mxu0 %v2449
        %2584 = vmatprep.subr.mxu0 0.0
        %2585 = vmatpush1.msra.mxu0 %v2448
        %2586 = vmatprep.subr.mxu0 0.0
        %2587 = vmatpush1.msra.mxu0 %v2447
        %2588 = vmatprep.subr.mxu0 0.0
        %2589 = vmatpush1.msra.mxu0 %v2446
        %2590 = vmatprep.subr.mxu0 0.0
        %2591 = vmatpush1.msra.mxu0 %v2445
        %2592 = vmatprep.subr.mxu0 0.0
        %2593 = vmatpush1.msra.mxu0 %v2444
        %2594 = vmatprep.subr.mxu0 0.0
        %2595 = vmatpush1.msra.mxu0 %v2443
        %2596 = vmatprep.subr.mxu0 0.0
        %2597 = vmatpush2.msra.mxu0 0.0
        %2598 = vmatprep.subr.mxu0 0.0
        %2599 = vmatpush2.msra.mxu0 0.0
        %2600 = vmatprep.subr.mxu0 0.0
        %2601 = vmatpush2.msra.mxu0 0.0
        %2602 = vmatprep.subr.mxu0 0.0
        %2603 = vmatpush2.msra.mxu0 0.0
        %2604 = vmatprep.subr.mxu0 0.0
        %2605 = vmatpush2.msra.mxu0 0.0
        %2606 = vmatprep.subr.mxu0 0.0
        %2607 = vmatpush2.msra.mxu0 0.0
        %2608 = vmatprep.subr.mxu0 0.0
        %2609 = vmatpush2.msra.mxu0 0.0
        %2610 = vmatprep.subr.mxu0 0.0
        %2611 = vmatpush2.msra.mxu0 0.0
        %2612 = vmatprep.subr.mxu0 0.0
        %2613 = vmatpush2.msra.mxu0 %v2514
        %2614 = vmatprep.subr.mxu0 0.0
        %2615 = vmatpush2.msra.mxu0 %v2512
        %2616 = vmatprep.subr.mxu0 0.0
        %2617 = vmatpush2.msra.mxu0 %v2510
        %2618 = vmatprep.subr.mxu0 0.0
        %2619 = vmatpush2.msra.mxu0 %v2508
        %2620 = vmatprep.subr.mxu0 0.0
        %2621 = vmatpush2.msra.mxu0 %v2506
        %2622 = vmatprep.subr.mxu0 0.0
        %2623 = vmatpush2.msra.mxu0 %v2504
        %2624 = vmatprep.subr.mxu0 0.0
        %2625 = vmatpush2.msra.mxu0 %v2502
        %2626 = vmatprep.subr.mxu0 0.0
        %2627 = vmatpush2.msra.mxu0 %v2500
        %2628 = vmatprep.mubr.f32.mxu0 %v2541
        %2629 = vmatmul.mubr.f32.gmra.mxu0 %v2524
        %v2630 = vpop.f32.mrf.mxu0
        %v2631 = vadd.f32 0.0, %v2630
        %v2632 = vpop.f32.mrf.mxu0
        %2633 = vmatprep.mubr.f32.mxu0 %v2544
        %2634 = vmatmul.mubr.f32.gmra.mxu0 %v2526
        %v2635 = vpop.f32.mrf.mxu0
        %v2636 = vadd.f32 0.0, %v2635
        %v2637 = vpop.f32.mrf.mxu0
        %2638 = vmatprep.mubr.f32.mxu0 %v2547
        %2639 = vmatmul.mubr.f32.gmra.mxu0 %v2528
        %v2640 = vpop.f32.mrf.mxu0
        %v2641 = vadd.f32 0.0, %v2640
        %v2642 = vpop.f32.mrf.mxu0
        %2643 = vmatprep.mubr.f32.mxu0 %v2550
        %2644 = vmatmul.mubr.f32.gmra.mxu0 %v2530
        %v2645 = vpop.f32.mrf.mxu0
        %v2646 = vadd.f32 0.0, %v2645
        %v2647 = vpop.f32.mrf.mxu0
        %2648 = vmatprep.mubr.f32.mxu0 %v2553
        %2649 = vmatmul.mubr.f32.gmra.mxu0 %v2532
        %v2650 = vpop.f32.mrf.mxu0
        %v2651 = vadd.f32 0.0, %v2650
        %v2652 = vpop.f32.mrf.mxu0
        %2653 = vmatprep.mubr.f32.mxu0 %v2556
        %2654 = vmatmul.mubr.f32.gmra.mxu0 %v2534
        %v2655 = vpop.f32.mrf.mxu0
        %v2656 = vadd.f32 0.0, %v2655
        %v2657 = vpop.f32.mrf.mxu0
        %2658 = vmatprep.mubr.f32.mxu0 %v2559
        %2659 = vmatmul.mubr.f32.gmra.mxu0 %v2536
        %v2660 = vpop.f32.mrf.mxu0
        %v2661 = vadd.f32 0.0, %v2660
        %v2662 = vpop.f32.mrf.mxu0
        %2663 = vmatprep.mubr.f32.mxu0 %v2562
        %2664 = vmatmul.mubr.f32.gmra.mxu0 %v2538
        %v2665 = vpop.f32.mrf.mxu0
        %v2666 = vadd.f32 0.0, %v2665
        %v2667 = vpop.f32.mrf.mxu0
        %2668 = vdwg.mxu0
        %v2669 = vadd.f32 %v2435, %v2631
        %v2670 = vadd.f32 %v2436, %v2636
        %v2671 = vadd.f32 %v2437, %v2641
        %v2672 = vadd.f32 %v2438, %v2646
        %v2673 = vadd.f32 %v2439, %v2651
        %v2674 = vadd.f32 %v2440, %v2656
        %v2675 = vadd.f32 %v2441, %v2661
        %v2676 = vadd.f32 %v2442, %v2666
        %v2677 = vmul.f32 %v862, %v980
        %v2678 = vmul.f32 %v863, %v980
        %v2679 = vmul.f32 %v864, %v980
        %v2680 = vmul.f32 %v865, %v980
        %v2681 = vmul.f32 %v866, %v980
        %v2682 = vmul.f32 %v867, %v980
        %v2683 = vmul.f32 %v868, %v980
        %v2684 = vmul.f32 %v869, %v980
        %v2685 = vmul.f32 %v862, %v991
        %v2686 = vmul.f32 %v863, %v991
        %v2687 = vmul.f32 %v864, %v991
        %v2688 = vmul.f32 %v865, %v991
        %v2689 = vmul.f32 %v866, %v991
        %v2690 = vmul.f32 %v867, %v991
        %v2691 = vmul.f32 %v868, %v991
        %v2692 = vmul.f32 %v869, %v991
        %2701 = vrot.lane.b32.xlu0 %v2685, 126
        %v2702 = vpop.permute.xlu0 %2701
        %2703 = vrot.lane.b32.xlu0 %v2686, 126
        %v2704 = vpop.permute.xlu0 %2703
        %2705 = vrot.lane.b32.xlu0 %v2687, 126
        %v2706 = vpop.permute.xlu0 %2705
        %2707 = vrot.lane.b32.xlu0 %v2688, 126
        %v2708 = vpop.permute.xlu0 %2707
        %2709 = vrot.lane.b32.xlu0 %v2689, 126
        %v2710 = vpop.permute.xlu0 %2709
        %2711 = vrot.lane.b32.xlu0 %v2690, 126
        %v2712 = vpop.permute.xlu0 %2711
        %2713 = vrot.lane.b32.xlu0 %v2691, 126
        %v2714 = vpop.permute.xlu0 %2713
        %2715 = vrot.lane.b32.xlu0 %v2692, 126
        %v2716 = vpop.permute.xlu0 %2715
        %s2717 = scalar_lea.vmem [#allocation2], 896
        %v2718 = vld [vmem:[%s2717] sm:$0xff]
        %v2719 = vld [vmem:[%s2717 + $0x8] sm:$0xff]
        %v2720 = vld [vmem:[%s2717 + $0x10] sm:$0xff]
        %v2721 = vld [vmem:[%s2717 + $0x18] sm:$0xff]
        %v2722 = vld [vmem:[%s2717 + $0x20] sm:$0xff]
        %v2723 = vld [vmem:[%s2717 + $0x28] sm:$0xff]
        %v2724 = vld [vmem:[%s2717 + $0x30] sm:$0xff]
        %v2725 = vld [vmem:[%s2717 + $0x38] sm:$0xff]
        %v2726 = vld [vmem:[%s2717 + $0x40] sm:$0xff]
        %v2727 = vld [vmem:[%s2717 + $0x48] sm:$0xff]
        %v2728 = vld [vmem:[%s2717 + $0x50] sm:$0xff]
        %v2729 = vld [vmem:[%s2717 + $0x58] sm:$0xff]
        %v2730 = vld [vmem:[%s2717 + $0x60] sm:$0xff]
        %v2731 = vld [vmem:[%s2717 + $0x68] sm:$0xff]
        %v2732 = vld [vmem:[%s2717 + $0x70] sm:$0xff]
        %v2733 = vld [vmem:[%s2717 + $0x78] sm:$0xff]
        %2742 = vrot.lane.b32.xlu0 %v2677, 126
        %v2743 = vpop.permute.xlu0 %2742
        %2744 = vrot.lane.b32.xlu0 %v2678, 126
        %v2745 = vpop.permute.xlu0 %2744
        %2746 = vrot.lane.b32.xlu0 %v2679, 126
        %v2747 = vpop.permute.xlu0 %2746
        %2748 = vrot.lane.b32.xlu0 %v2680, 126
        %v2749 = vpop.permute.xlu0 %2748
        %2750 = vrot.lane.b32.xlu0 %v2681, 126
        %v2751 = vpop.permute.xlu0 %2750
        %2752 = vrot.lane.b32.xlu0 %v2682, 126
        %v2753 = vpop.permute.xlu0 %2752
        %2754 = vrot.lane.b32.xlu0 %v2683, 126
        %v2755 = vpop.permute.xlu0 %2754
        %2756 = vrot.lane.b32.xlu0 %v2684, 126
        %v2757 = vpop.permute.xlu0 %2756
        %2758 = vrot.lane.b32.xlu0 %v2468, 126
        %v2759 = vpop.permute.xlu0 %2758
        %2760 = vrot.lane.b32.xlu0 %v2470, 126
        %v2761 = vpop.permute.xlu0 %2760
        %2762 = vrot.lane.b32.xlu0 %v2472, 126
        %v2763 = vpop.permute.xlu0 %2762
        %2764 = vrot.lane.b32.xlu0 %v2474, 126
        %v2765 = vpop.permute.xlu0 %2764
        %2766 = vrot.lane.b32.xlu0 %v2476, 126
        %v2767 = vpop.permute.xlu0 %2766
        %2768 = vrot.lane.b32.xlu0 %v2478, 126
        %v2769 = vpop.permute.xlu0 %2768
        %2770 = vrot.lane.b32.xlu0 %v2480, 126
        %v2771 = vpop.permute.xlu0 %2770
        %2772 = vrot.lane.b32.xlu0 %v2482, 126
        %v2773 = vpop.permute.xlu0 %2772
        %2774 = vrot.lane.b32.xlu0 %v2702, 126
        %v2775 = vpop.permute.xlu0 %2774
        %2776 = vrot.lane.b32.xlu0 %v2704, 126
        %v2777 = vpop.permute.xlu0 %2776
        %2778 = vrot.lane.b32.xlu0 %v2706, 126
        %v2779 = vpop.permute.xlu0 %2778
        %2780 = vrot.lane.b32.xlu0 %v2708, 126
        %v2781 = vpop.permute.xlu0 %2780
        %2782 = vrot.lane.b32.xlu0 %v2710, 126
        %v2783 = vpop.permute.xlu0 %2782
        %2784 = vrot.lane.b32.xlu0 %v2712, 126
        %v2785 = vpop.permute.xlu0 %2784
        %2786 = vrot.lane.b32.xlu0 %v2714, 126
        %v2787 = vpop.permute.xlu0 %2786
        %2788 = vrot.lane.b32.xlu0 %v2716, 126
        %v2789 = vpop.permute.xlu0 %2788
        %v2815 = vsel %vm1122, %v2719, 0
        %v2818 = vsel %vm1122, %v2721, 0
        %v2821 = vsel %vm1122, %v2723, 0
        %v2824 = vsel %vm1122, %v2725, 0
        %v2827 = vsel %vm1122, %v2727, 0
        %v2830 = vsel %vm1122, %v2729, 0
        %v2833 = vsel %vm1122, %v2731, 0
        %v2836 = vsel %vm1122, %v2733, 0
        %2838 = vmatprep.subr.mxu0 0.0
        %2839 = vmatpush1.msra.mxu0 %v2773
        %2840 = vmatprep.subr.mxu0 0.0
        %2841 = vmatpush1.msra.mxu0 %v2771
        %2842 = vmatprep.subr.mxu0 0.0
        %2843 = vmatpush1.msra.mxu0 %v2769
        %2844 = vmatprep.subr.mxu0 0.0
        %2845 = vmatpush1.msra.mxu0 %v2767
        %2846 = vmatprep.subr.mxu0 0.0
        %2847 = vmatpush1.msra.mxu0 %v2765
        %2848 = vmatprep.subr.mxu0 0.0
        %2849 = vmatpush1.msra.mxu0 %v2763
        %2850 = vmatprep.subr.mxu0 0.0
        %2851 = vmatpush1.msra.mxu0 %v2761
        %2852 = vmatprep.subr.mxu0 0.0
        %2853 = vmatpush1.msra.mxu0 %v2759
        %2854 = vmatprep.subr.mxu0 0.0
        %2855 = vmatpush1.msra.mxu0 %v2757
        %2856 = vmatprep.subr.mxu0 0.0
        %2857 = vmatpush1.msra.mxu0 %v2755
        %2858 = vmatprep.subr.mxu0 0.0
        %2859 = vmatpush1.msra.mxu0 %v2753
        %2860 = vmatprep.subr.mxu0 0.0
        %2861 = vmatpush1.msra.mxu0 %v2751
        %2862 = vmatprep.subr.mxu0 0.0
        %2863 = vmatpush1.msra.mxu0 %v2749
        %2864 = vmatprep.subr.mxu0 0.0
        %2865 = vmatpush1.msra.mxu0 %v2747
        %2866 = vmatprep.subr.mxu0 0.0
        %2867 = vmatpush1.msra.mxu0 %v2745
        %2868 = vmatprep.subr.mxu0 0.0
        %2869 = vmatpush1.msra.mxu0 %v2743
        %2870 = vmatprep.subr.mxu0 0.0
        %2871 = vmatpush2.msra.mxu0 0.0
        %2872 = vmatprep.subr.mxu0 0.0
        %2873 = vmatpush2.msra.mxu0 0.0
        %2874 = vmatprep.subr.mxu0 0.0
        %2875 = vmatpush2.msra.mxu0 0.0
        %2876 = vmatprep.subr.mxu0 0.0
        %2877 = vmatpush2.msra.mxu0 0.0
        %2878 = vmatprep.subr.mxu0 0.0
        %2879 = vmatpush2.msra.mxu0 0.0
        %2880 = vmatprep.subr.mxu0 0.0
        %2881 = vmatpush2.msra.mxu0 0.0
        %2882 = vmatprep.subr.mxu0 0.0
        %2883 = vmatpush2.msra.mxu0 0.0
        %2884 = vmatprep.subr.mxu0 0.0
        %2885 = vmatpush2.msra.mxu0 0.0
        %2886 = vmatprep.subr.mxu0 0.0
        %2887 = vmatpush2.msra.mxu0 %v2789
        %2888 = vmatprep.subr.mxu0 0.0
        %2889 = vmatpush2.msra.mxu0 %v2787
        %2890 = vmatprep.subr.mxu0 0.0
        %2891 = vmatpush2.msra.mxu0 %v2785
        %2892 = vmatprep.subr.mxu0 0.0
        %2893 = vmatpush2.msra.mxu0 %v2783
        %2894 = vmatprep.subr.mxu0 0.0
        %2895 = vmatpush2.msra.mxu0 %v2781
        %2896 = vmatprep.subr.mxu0 0.0
        %2897 = vmatpush2.msra.mxu0 %v2779
        %2898 = vmatprep.subr.mxu0 0.0
        %2899 = vmatpush2.msra.mxu0 %v2777
        %2900 = vmatprep.subr.mxu0 0.0
        %2901 = vmatpush2.msra.mxu0 %v2775
        %2902 = vmatprep.mubr.f32.mxu0 %v2815
        %2903 = vmatmul.mubr.f32.gmra.mxu0 %v2718
        %v2904 = vpop.f32.mrf.mxu0
        %v2905 = vadd.f32 0.0, %v2904
        %v2906 = vpop.f32.mrf.mxu0
        %2907 = vmatprep.mubr.f32.mxu0 %v2818
        %2908 = vmatmul.mubr.f32.gmra.mxu0 %v2720
        %v2909 = vpop.f32.mrf.mxu0
        %v2910 = vadd.f32 0.0, %v2909
        %v2911 = vpop.f32.mrf.mxu0
        %2912 = vmatprep.mubr.f32.mxu0 %v2821
        %2913 = vmatmul.mubr.f32.gmra.mxu0 %v2722
        %v2914 = vpop.f32.mrf.mxu0
        %v2915 = vadd.f32 0.0, %v2914
        %v2916 = vpop.f32.mrf.mxu0
        %2917 = vmatprep.mubr.f32.mxu0 %v2824
        %2918 = vmatmul.mubr.f32.gmra.mxu0 %v2724
        %v2919 = vpop.f32.mrf.mxu0
        %v2920 = vadd.f32 0.0, %v2919
        %v2921 = vpop.f32.mrf.mxu0
        %2922 = vmatprep.mubr.f32.mxu0 %v2827
        %2923 = vmatmul.mubr.f32.gmra.mxu0 %v2726
        %v2924 = vpop.f32.mrf.mxu0
        %v2925 = vadd.f32 0.0, %v2924
        %v2926 = vpop.f32.mrf.mxu0
        %2927 = vmatprep.mubr.f32.mxu0 %v2830
        %2928 = vmatmul.mubr.f32.gmra.mxu0 %v2728
        %v2929 = vpop.f32.mrf.mxu0
        %v2930 = vadd.f32 0.0, %v2929
        %v2931 = vpop.f32.mrf.mxu0
        %2932 = vmatprep.mubr.f32.mxu0 %v2833
        %2933 = vmatmul.mubr.f32.gmra.mxu0 %v2730
        %v2934 = vpop.f32.mrf.mxu0
        %v2935 = vadd.f32 0.0, %v2934
        %v2936 = vpop.f32.mrf.mxu0
        %2937 = vmatprep.mubr.f32.mxu0 %v2836
        %2938 = vmatmul.mubr.f32.gmra.mxu0 %v2732
        %v2939 = vpop.f32.mrf.mxu0
        %v2940 = vadd.f32 0.0, %v2939
        %v2941 = vpop.f32.mrf.mxu0
        %2942 = vdwg.mxu0
        %v2943 = vadd.f32 %v2669, %v2905
        %v2944 = vadd.f32 %v2670, %v2910
        %v2945 = vadd.f32 %v2671, %v2915
        %v2946 = vadd.f32 %v2672, %v2920
        %v2947 = vadd.f32 %v2673, %v2925
        %v2948 = vadd.f32 %v2674, %v2930
        %v2949 = vadd.f32 %v2675, %v2935
        %v2950 = vadd.f32 %v2676, %v2940
        %v2951 = vmul.f32 %v862, %v1382
        %v2952 = vmul.f32 %v863, %v1382
        %v2953 = vmul.f32 %v864, %v1382
        %v2954 = vmul.f32 %v865, %v1382
        %v2955 = vmul.f32 %v866, %v1382
        %v2956 = vmul.f32 %v867, %v1382
        %v2957 = vmul.f32 %v868, %v1382
        %v2958 = vmul.f32 %v869, %v1382
        %v2959 = vmul.f32 %v862, %v1393
        %v2960 = vmul.f32 %v863, %v1393
        %v2961 = vmul.f32 %v864, %v1393
        %v2962 = vmul.f32 %v865, %v1393
        %v2963 = vmul.f32 %v866, %v1393
        %v2964 = vmul.f32 %v867, %v1393
        %v2965 = vmul.f32 %v868, %v1393
        %v2966 = vmul.f32 %v869, %v1393
        %2975 = vrot.lane.b32.xlu0 %v2959, 126
        %v2976 = vpop.permute.xlu0 %2975
        %2977 = vrot.lane.b32.xlu0 %v2960, 126
        %v2978 = vpop.permute.xlu0 %2977
        %2979 = vrot.lane.b32.xlu0 %v2961, 126
        %v2980 = vpop.permute.xlu0 %2979
        %2981 = vrot.lane.b32.xlu0 %v2962, 126
        %v2982 = vpop.permute.xlu0 %2981
        %2983 = vrot.lane.b32.xlu0 %v2963, 126
        %v2984 = vpop.permute.xlu0 %2983
        %2985 = vrot.lane.b32.xlu0 %v2964, 126
        %v2986 = vpop.permute.xlu0 %2985
        %2987 = vrot.lane.b32.xlu0 %v2965, 126
        %v2988 = vpop.permute.xlu0 %2987
        %2989 = vrot.lane.b32.xlu0 %v2966, 126
        %v2990 = vpop.permute.xlu0 %2989
        %s2991 = scalar_lea.vmem [#allocation2], 1024
        %v2992 = vld [vmem:[%s2991] sm:$0xff]
        %v2993 = vld [vmem:[%s2991 + $0x8] sm:$0xff]
        %v2994 = vld [vmem:[%s2991 + $0x10] sm:$0xff]
        %v2995 = vld [vmem:[%s2991 + $0x18] sm:$0xff]
        %v2996 = vld [vmem:[%s2991 + $0x20] sm:$0xff]
        %v2997 = vld [vmem:[%s2991 + $0x28] sm:$0xff]
        %v2998 = vld [vmem:[%s2991 + $0x30] sm:$0xff]
        %v2999 = vld [vmem:[%s2991 + $0x38] sm:$0xff]
        %v3000 = vld [vmem:[%s2991 + $0x40] sm:$0xff]
        %v3001 = vld [vmem:[%s2991 + $0x48] sm:$0xff]
        %v3002 = vld [vmem:[%s2991 + $0x50] sm:$0xff]
        %v3003 = vld [vmem:[%s2991 + $0x58] sm:$0xff]
        %v3004 = vld [vmem:[%s2991 + $0x60] sm:$0xff]
        %v3005 = vld [vmem:[%s2991 + $0x68] sm:$0xff]
        %v3006 = vld [vmem:[%s2991 + $0x70] sm:$0xff]
        %v3007 = vld [vmem:[%s2991 + $0x78] sm:$0xff]
        %3016 = vrot.lane.b32.xlu0 %v2951, 124
        %v3017 = vpop.permute.xlu0 %3016
        %3018 = vrot.lane.b32.xlu0 %v2952, 124
        %v3019 = vpop.permute.xlu0 %3018
        %3020 = vrot.lane.b32.xlu0 %v2953, 124
        %v3021 = vpop.permute.xlu0 %3020
        %3022 = vrot.lane.b32.xlu0 %v2954, 124
        %v3023 = vpop.permute.xlu0 %3022
        %3024 = vrot.lane.b32.xlu0 %v2955, 124
        %v3025 = vpop.permute.xlu0 %3024
        %3026 = vrot.lane.b32.xlu0 %v2956, 124
        %v3027 = vpop.permute.xlu0 %3026
        %3028 = vrot.lane.b32.xlu0 %v2957, 124
        %v3029 = vpop.permute.xlu0 %3028
        %3030 = vrot.lane.b32.xlu0 %v2958, 124
        %v3031 = vpop.permute.xlu0 %3030
        %3032 = vrot.lane.b32.xlu0 %v2468, 124
        %v3033 = vpop.permute.xlu0 %3032
        %3034 = vrot.lane.b32.xlu0 %v2470, 124
        %v3035 = vpop.permute.xlu0 %3034
        %3036 = vrot.lane.b32.xlu0 %v2472, 124
        %v3037 = vpop.permute.xlu0 %3036
        %3038 = vrot.lane.b32.xlu0 %v2474, 124
        %v3039 = vpop.permute.xlu0 %3038
        %3040 = vrot.lane.b32.xlu0 %v2476, 124
        %v3041 = vpop.permute.xlu0 %3040
        %3042 = vrot.lane.b32.xlu0 %v2478, 124
        %v3043 = vpop.permute.xlu0 %3042
        %3044 = vrot.lane.b32.xlu0 %v2480, 124
        %v3045 = vpop.permute.xlu0 %3044
        %3046 = vrot.lane.b32.xlu0 %v2482, 124
        %v3047 = vpop.permute.xlu0 %3046
        %3048 = vrot.lane.b32.xlu0 %v2976, 124
        %v3049 = vpop.permute.xlu0 %3048
        %3050 = vrot.lane.b32.xlu0 %v2978, 124
        %v3051 = vpop.permute.xlu0 %3050
        %3052 = vrot.lane.b32.xlu0 %v2980, 124
        %v3053 = vpop.permute.xlu0 %3052
        %3054 = vrot.lane.b32.xlu0 %v2982, 124
        %v3055 = vpop.permute.xlu0 %3054
        %3056 = vrot.lane.b32.xlu0 %v2984, 124
        %v3057 = vpop.permute.xlu0 %3056
        %3058 = vrot.lane.b32.xlu0 %v2986, 124
        %v3059 = vpop.permute.xlu0 %3058
        %3060 = vrot.lane.b32.xlu0 %v2988, 124
        %v3061 = vpop.permute.xlu0 %3060
        %3062 = vrot.lane.b32.xlu0 %v2990, 124
        %v3063 = vpop.permute.xlu0 %3062
        %v3089 = vsel %vm1122, %v2993, 0
        %v3092 = vsel %vm1122, %v2995, 0
        %v3095 = vsel %vm1122, %v2997, 0
        %v3098 = vsel %vm1122, %v2999, 0
        %v3101 = vsel %vm1122, %v3001, 0
        %v3104 = vsel %vm1122, %v3003, 0
        %v3107 = vsel %vm1122, %v3005, 0
        %v3110 = vsel %vm1122, %v3007, 0
        %3112 = vmatprep.subr.mxu0 0.0
        %3113 = vmatpush1.msra.mxu0 %v3047
        %3114 = vmatprep.subr.mxu0 0.0
        %3115 = vmatpush1.msra.mxu0 %v3045
        %3116 = vmatprep.subr.mxu0 0.0
        %3117 = vmatpush1.msra.mxu0 %v3043
        %3118 = vmatprep.subr.mxu0 0.0
        %3119 = vmatpush1.msra.mxu0 %v3041
        %3120 = vmatprep.subr.mxu0 0.0
        %3121 = vmatpush1.msra.mxu0 %v3039
        %3122 = vmatprep.subr.mxu0 0.0
        %3123 = vmatpush1.msra.mxu0 %v3037
        %3124 = vmatprep.subr.mxu0 0.0
        %3125 = vmatpush1.msra.mxu0 %v3035
        %3126 = vmatprep.subr.mxu0 0.0
        %3127 = vmatpush1.msra.mxu0 %v3033
        %3128 = vmatprep.subr.mxu0 0.0
        %3129 = vmatpush1.msra.mxu0 %v3031
        %3130 = vmatprep.subr.mxu0 0.0
        %3131 = vmatpush1.msra.mxu0 %v3029
        %3132 = vmatprep.subr.mxu0 0.0
        %3133 = vmatpush1.msra.mxu0 %v3027
        %3134 = vmatprep.subr.mxu0 0.0
        %3135 = vmatpush1.msra.mxu0 %v3025
        %3136 = vmatprep.subr.mxu0 0.0
        %3137 = vmatpush1.msra.mxu0 %v3023
        %3138 = vmatprep.subr.mxu0 0.0
        %3139 = vmatpush1.msra.mxu0 %v3021
        %3140 = vmatprep.subr.mxu0 0.0
        %3141 = vmatpush1.msra.mxu0 %v3019
        %3142 = vmatprep.subr.mxu0 0.0
        %3143 = vmatpush1.msra.mxu0 %v3017
        %3144 = vmatprep.subr.mxu0 0.0
        %3145 = vmatpush2.msra.mxu0 0.0
        %3146 = vmatprep.subr.mxu0 0.0
        %3147 = vmatpush2.msra.mxu0 0.0
        %3148 = vmatprep.subr.mxu0 0.0
        %3149 = vmatpush2.msra.mxu0 0.0
        %3150 = vmatprep.subr.mxu0 0.0
        %3151 = vmatpush2.msra.mxu0 0.0
        %3152 = vmatprep.subr.mxu0 0.0
        %3153 = vmatpush2.msra.mxu0 0.0
        %3154 = vmatprep.subr.mxu0 0.0
        %3155 = vmatpush2.msra.mxu0 0.0
        %3156 = vmatprep.subr.mxu0 0.0
        %3157 = vmatpush2.msra.mxu0 0.0
        %3158 = vmatprep.subr.mxu0 0.0
        %3159 = vmatpush2.msra.mxu0 0.0
        %3160 = vmatprep.subr.mxu0 0.0
        %3161 = vmatpush2.msra.mxu0 %v3063
        %3162 = vmatprep.subr.mxu0 0.0
        %3163 = vmatpush2.msra.mxu0 %v3061
        %3164 = vmatprep.subr.mxu0 0.0
        %3165 = vmatpush2.msra.mxu0 %v3059
        %3166 = vmatprep.subr.mxu0 0.0
        %3167 = vmatpush2.msra.mxu0 %v3057
        %3168 = vmatprep.subr.mxu0 0.0
        %3169 = vmatpush2.msra.mxu0 %v3055
        %3170 = vmatprep.subr.mxu0 0.0
        %3171 = vmatpush2.msra.mxu0 %v3053
        %3172 = vmatprep.subr.mxu0 0.0
        %3173 = vmatpush2.msra.mxu0 %v3051
        %3174 = vmatprep.subr.mxu0 0.0
        %3175 = vmatpush2.msra.mxu0 %v3049
        %3176 = vmatprep.mubr.f32.mxu0 %v3089
        %3177 = vmatmul.mubr.f32.gmra.mxu0 %v2992
        %v3178 = vpop.f32.mrf.mxu0
        %v3179 = vadd.f32 0.0, %v3178
        %v3180 = vpop.f32.mrf.mxu0
        %3181 = vmatprep.mubr.f32.mxu0 %v3092
        %3182 = vmatmul.mubr.f32.gmra.mxu0 %v2994
        %v3183 = vpop.f32.mrf.mxu0
        %v3184 = vadd.f32 0.0, %v3183
        %v3185 = vpop.f32.mrf.mxu0
        %3186 = vmatprep.mubr.f32.mxu0 %v3095
        %3187 = vmatmul.mubr.f32.gmra.mxu0 %v2996
        %v3188 = vpop.f32.mrf.mxu0
        %v3189 = vadd.f32 0.0, %v3188
        %v3190 = vpop.f32.mrf.mxu0
        %3191 = vmatprep.mubr.f32.mxu0 %v3098
        %3192 = vmatmul.mubr.f32.gmra.mxu0 %v2998
        %v3193 = vpop.f32.mrf.mxu0
        %v3194 = vadd.f32 0.0, %v3193
        %v3195 = vpop.f32.mrf.mxu0
        %3196 = vmatprep.mubr.f32.mxu0 %v3101
        %3197 = vmatmul.mubr.f32.gmra.mxu0 %v3000
        %v3198 = vpop.f32.mrf.mxu0
        %v3199 = vadd.f32 0.0, %v3198
        %v3200 = vpop.f32.mrf.mxu0
        %3201 = vmatprep.mubr.f32.mxu0 %v3104
        %3202 = vmatmul.mubr.f32.gmra.mxu0 %v3002
        %v3203 = vpop.f32.mrf.mxu0
        %v3204 = vadd.f32 0.0, %v3203
        %v3205 = vpop.f32.mrf.mxu0
        %3206 = vmatprep.mubr.f32.mxu0 %v3107
        %3207 = vmatmul.mubr.f32.gmra.mxu0 %v3004
        %v3208 = vpop.f32.mrf.mxu0
        %v3209 = vadd.f32 0.0, %v3208
        %v3210 = vpop.f32.mrf.mxu0
        %3211 = vmatprep.mubr.f32.mxu0 %v3110
        %3212 = vmatmul.mubr.f32.gmra.mxu0 %v3006
        %v3213 = vpop.f32.mrf.mxu0
        %v3214 = vadd.f32 0.0, %v3213
        %v3215 = vpop.f32.mrf.mxu0
        %3216 = vdwg.mxu0
        %v3217 = vadd.f32 %v2943, %v3179
        %v3218 = vadd.f32 %v2944, %v3184
        %v3219 = vadd.f32 %v2945, %v3189
        %v3220 = vadd.f32 %v2946, %v3194
        %v3221 = vadd.f32 %v2947, %v3199
        %v3222 = vadd.f32 %v2948, %v3204
        %v3223 = vadd.f32 %v2949, %v3209
        %v3224 = vadd.f32 %v2950, %v3214
        %v3225 = vld [vmem:[%s4] sm:$0xff]
        %v3226 = vld [vmem:[%s4 + $0x8] sm:$0xff]
        %v3227 = vld [vmem:[%s4 + $0x10] sm:$0xff]
        %v3228 = vld [vmem:[%s4 + $0x18] sm:$0xff]
        %v3229 = vld [vmem:[%s4 + $0x20] sm:$0xff]
        %v3230 = vld [vmem:[%s4 + $0x28] sm:$0xff]
        %v3231 = vld [vmem:[%s4 + $0x30] sm:$0xff]
        %v3232 = vld [vmem:[%s4 + $0x38] sm:$0xff]
        %3234 = vset.pattern.permute.xlu0 0
        %3235 = vperm.xlu0 %3234, %v3225
        %v3236 = vpop.permute.xlu0 %3235
        %3239 = vset.pattern.permute.xlu0 0
        %3240 = vperm.xlu0 %3239, %v3226
        %v3241 = vpop.permute.xlu0 %3240
        %3244 = vset.pattern.permute.xlu0 0
        %3245 = vperm.xlu0 %3244, %v3227
        %v3246 = vpop.permute.xlu0 %3245
        %3249 = vset.pattern.permute.xlu0 0
        %3250 = vperm.xlu0 %3249, %v3228
        %v3251 = vpop.permute.xlu0 %3250
        %3254 = vset.pattern.permute.xlu0 0
        %3255 = vperm.xlu0 %3254, %v3229
        %v3256 = vpop.permute.xlu0 %3255
        %3259 = vset.pattern.permute.xlu0 0
        %3260 = vperm.xlu0 %3259, %v3230
        %v3261 = vpop.permute.xlu0 %3260
        %3264 = vset.pattern.permute.xlu0 0
        %3265 = vperm.xlu0 %3264, %v3231
        %v3266 = vpop.permute.xlu0 %3265
        %3269 = vset.pattern.permute.xlu0 0
        %3270 = vperm.xlu0 %3269, %v3232
        %v3271 = vpop.permute.xlu0 %3270
        %v3273 = vadd.f32 %v3217, %v3236
        %v3274 = vadd.f32 %v3218, %v3241
        %v3275 = vadd.f32 %v3219, %v3246
        %v3276 = vadd.f32 %v3220, %v3251
        %v3277 = vadd.f32 %v3221, %v3256
        %v3278 = vadd.f32 %v3222, %v3261
        %v3279 = vadd.f32 %v3223, %v3266
        %v3280 = vadd.f32 %v3224, %v3271
        %vm3281 = vcmask 31744
        %3282 = vst.msk [vmem:[%s480] sm:$0xff] %vm3281, %v3273
        %3283 = vst.msk [vmem:[%s480 + $0x8] sm:$0xff] %vm3281, %v3274
        %3284 = vst.msk [vmem:[%s480 + $0x10] sm:$0xff] %vm3281, %v3275
        %3285 = vst.msk [vmem:[%s480 + $0x18] sm:$0xff] %vm3281, %v3276
        %3286 = vst.msk [vmem:[%s480 + $0x20] sm:$0xff] %vm3281, %v3277
        %3287 = vst.msk [vmem:[%s480 + $0x28] sm:$0xff] %vm3281, %v3278
        %3288 = vst.msk [vmem:[%s480 + $0x30] sm:$0xff] %vm3281, %v3279
        %3289 = vst.msk [vmem:[%s480 + $0x38] sm:$0xff] %vm3281, %v3280
        %v3290 = vsel %vm3281, %v3273, 0.0
        %3291 = vadd.xlane.f32.xlu0 %v3290
        %v3292 = vpop.xlane.xlu0 %3291
        %v3293 = vsel %vm3281, %v3274, 0.0
        %3294 = vadd.xlane.f32.xlu0 %v3293
        %v3295 = vpop.xlane.xlu0 %3294
        %v3296 = vsel %vm3281, %v3275, 0.0
        %3297 = vadd.xlane.f32.xlu0 %v3296
        %v3298 = vpop.xlane.xlu0 %3297
        %v3299 = vsel %vm3281, %v3276, 0.0
        %3300 = vadd.xlane.f32.xlu0 %v3299
        %v3301 = vpop.xlane.xlu0 %3300
        %v3302 = vsel %vm3281, %v3277, 0.0
        %3303 = vadd.xlane.f32.xlu0 %v3302
        %v3304 = vpop.xlane.xlu0 %3303
        %v3305 = vsel %vm3281, %v3278, 0.0
        %3306 = vadd.xlane.f32.xlu0 %v3305
        %v3307 = vpop.xlane.xlu0 %3306
        %v3308 = vsel %vm3281, %v3279, 0.0
        %3309 = vadd.xlane.f32.xlu0 %v3308
        %v3310 = vpop.xlane.xlu0 %3309
        %v3311 = vsel %vm3281, %v3280, 0.0
        %3312 = vadd.xlane.f32.xlu0 %v3311
        %v3313 = vpop.xlane.xlu0 %3312
        %v3314 = vadd.f32 %v3292, 0.0
        %v3315 = vadd.f32 %v3295, 0.0
        %v3316 = vadd.f32 %v3298, 0.0
        %v3317 = vadd.f32 %v3301, 0.0
        %v3318 = vadd.f32 %v3304, 0.0
        %v3319 = vadd.f32 %v3307, 0.0
        %v3320 = vadd.f32 %v3310, 0.0
        %v3321 = vadd.f32 %v3313, 0.0
        %v3322 = vmul.f32 %v3273, %v3273
        %v3323 = vmul.f32 %v3274, %v3274
        %v3324 = vmul.f32 %v3275, %v3275
        %v3325 = vmul.f32 %v3276, %v3276
        %v3326 = vmul.f32 %v3277, %v3277
        %v3327 = vmul.f32 %v3278, %v3278
        %v3328 = vmul.f32 %v3279, %v3279
        %v3329 = vmul.f32 %v3280, %v3280
        %v3330 = vsel %vm3281, %v3322, 0.0
        %3331 = vadd.xlane.f32.xlu0 %v3330
        %v3332 = vpop.xlane.xlu0 %3331
        %v3333 = vsel %vm3281, %v3323, 0.0
        %3334 = vadd.xlane.f32.xlu0 %v3333
        %v3335 = vpop.xlane.xlu0 %3334
        %v3336 = vsel %vm3281, %v3324, 0.0
        %3337 = vadd.xlane.f32.xlu0 %v3336
        %v3338 = vpop.xlane.xlu0 %3337
        %v3339 = vsel %vm3281, %v3325, 0.0
        %3340 = vadd.xlane.f32.xlu0 %v3339
        %v3341 = vpop.xlane.xlu0 %3340
        %v3342 = vsel %vm3281, %v3326, 0.0
        %3343 = vadd.xlane.f32.xlu0 %v3342
        %v3344 = vpop.xlane.xlu0 %3343
        %v3345 = vsel %vm3281, %v3327, 0.0
        %3346 = vadd.xlane.f32.xlu0 %v3345
        %v3347 = vpop.xlane.xlu0 %3346
        %v3348 = vsel %vm3281, %v3328, 0.0
        %3349 = vadd.xlane.f32.xlu0 %v3348
        %v3350 = vpop.xlane.xlu0 %3349
        %v3351 = vsel %vm3281, %v3329, 0.0
        %3352 = vadd.xlane.f32.xlu0 %v3351
        %v3353 = vpop.xlane.xlu0 %3352
        %v3354 = vadd.f32 %v3332, 0.0
        %v3355 = vadd.f32 %v3335, 0.0
        %v3356 = vadd.f32 %v3338, 0.0
        %v3357 = vadd.f32 %v3341, 0.0
        %v3358 = vadd.f32 %v3344, 0.0
        %v3359 = vadd.f32 %v3347, 0.0
        %v3360 = vadd.f32 %v3350, 0.0
        %v3361 = vadd.f32 %v3353, 0.0
        %vm3362 = vcmask 7168
        %v3363 = vsel %vm3362, %v3314, %v3354
        %v3364 = vsel %vm3362, %v3315, %v3355
        %v3365 = vsel %vm3362, %v3316, %v3356
        %v3366 = vsel %vm3362, %v3317, %v3357
        %v3367 = vsel %vm3362, %v3318, %v3358
        %v3368 = vsel %vm3362, %v3319, %v3359
        %v3369 = vsel %vm3362, %v3320, %v3360
        %v3370 = vsel %vm3362, %v3321, %v3361
        %3371 = vst.msk [vmem:[%s489] sm:$0xff] %vm515, %v3363
        %3372 = vst.msk [vmem:[%s489 + $0x8] sm:$0xff] %vm515, %v3364
        %3373 = vst.msk [vmem:[%s489 + $0x10] sm:$0xff] %vm515, %v3365
        %3374 = vst.msk [vmem:[%s489 + $0x18] sm:$0xff] %vm515, %v3366
        %3375 = vst.msk [vmem:[%s489 + $0x20] sm:$0xff] %vm515, %v3367
        %3376 = vst.msk [vmem:[%s489 + $0x28] sm:$0xff] %vm515, %v3368
        %3377 = vst.msk [vmem:[%s489 + $0x30] sm:$0xff] %vm515, %v3369
        %3378 = vst.msk [vmem:[%s489 + $0x38] sm:$0xff] %vm515, %v3370
        %p3379 = scmp.lt.s32.totalorder %s25, 1
        %s3380 = scalar_select %p3379, %s25, 1
        %p3381 = scmp.lt.s32.totalorder %s26, 1
        %s3382 = scalar_select %p3381, %s26, 1
        %s3383 = smul.addr %s3382, 8
        %s3384 = smul.addr %s3380, 16
        %s3385 = sadd.s32 %s3383, %s3384
        %s3386 = smul.addr %s3385, 8
        %s3387 = scalar_lea.vmem %s7, %s3386
        %p3388 = scmp.lt.s32.totalorder %s25, 1
        %s3389 = scalar_select %p3388, %s25, 1
        %p3390 = scmp.lt.s32.totalorder %s26, 1
        %s3391 = scalar_select %p3390, %s26, 1
        %s3392 = smul.addr %s3391, 8
        %s3393 = smul.addr %s3389, 16
        %s3394 = sadd.s32 %s3392, %s3393
        %s3395 = smul.addr %s3394, 8
        %s3396 = scalar_lea.vmem %s8, %s3395
        // Predicated region
        $region53: #{tpu_custom_call.1} parent=47 // pred_check
          %p3397 = pneg %p233
        $region54: #{tpu_custom_call.1} parent=47 // pred_check_branch
          %3399 = sbr.rel (%p3397) target = $region56
        $region55: #{tpu_custom_call.1} parent=47 // pred_region
          _
        $region56: #{tpu_custom_call.1} parent=47 // pred_fallthru
          _
        // Predicated region
        $region57: #{tpu_custom_call.1} parent=47 // pred_check
          %p3400 = pneg %p261
        $region58: #{tpu_custom_call.1} parent=47 // pred_check_branch
          %3402 = sbr.rel (%p3400) target = $region60
        $region59: #{tpu_custom_call.1} parent=47 // pred_region
          _
        $region60: #{tpu_custom_call.1} parent=47 // pred_fallthru
          _
      $region48: #{tpu_custom_call.1} parent=5 // pred_fallthru
        _
      %p3403 = scmp.le.s32.totalorder 2, %s16
      // Predicated region
      $region61: #{tpu_custom_call.1} parent=5 // pred_check
        %p3404 = pneg %p3403
      $region62: #{tpu_custom_call.1} parent=5 // pred_check_branch
        %3406 = sbr.rel (%p3404) target = $region64
      $region63: #{tpu_custom_call.1} parent=5 // pred_region
        %s3407 = ssub.s32 %s16, 2
        // Predicated region
        $region65: #{tpu_custom_call.1} parent=63 // pred_check
          %p3408 = pneg %p239
        $region66: #{tpu_custom_call.1} parent=63 // pred_check_branch
          %3410 = sbr.rel (%p3408) target = $region68
        $region67: #{tpu_custom_call.1} parent=63 // pred_region
          %p3411 = scmp.lt.s32.totalorder %s27, 1
          %s3412 = scalar_select %p3411, %s27, 1
          %p3413 = scmp.lt.s32.totalorder %s28, 1
          %s3414 = scalar_select %p3413, %s28, 1
          %s3415 = smul.addr %s3414, 8
          %s3416 = smul.addr %s3412, 16
          %s3417 = sadd.s32 %s3415, %s3416
          %s3418 = smul.addr %s3417, 8
          %s3419 = scalar_lea.vmem %s7, %s3418
        $region68: #{tpu_custom_call.1} parent=63 // pred_fallthru
          _
        // Predicated region
        $region69: #{tpu_custom_call.1} parent=63 // pred_check
          %p3420 = pneg %p267
        $region70: #{tpu_custom_call.1} parent=63 // pred_check_branch
          %3422 = sbr.rel (%p3420) target = $region72
        $region71: #{tpu_custom_call.1} parent=63 // pred_region
          %p3423 = scmp.lt.s32.totalorder %s27, 1
          %s3424 = scalar_select %p3423, %s27, 1
          %p3425 = scmp.lt.s32.totalorder %s28, 1
          %s3426 = scalar_select %p3425, %s28, 1
          %s3427 = smul.addr %s3426, 8
          %s3428 = smul.addr %s3424, 16
          %s3429 = sadd.s32 %s3427, %s3428
          %s3430 = smul.addr %s3429, 8
          %s3431 = scalar_lea.vmem %s8, %s3430
        $region72: #{tpu_custom_call.1} parent=63 // pred_fallthru
          _
      $region64: #{tpu_custom_call.1} parent=5 // pred_fallthru
        _
    $region6: #{tpu_custom_call.1} parent=1 // loop_footer
      %s20 = sadd.s32 1, %s16
    $region7: #{tpu_custom_call.1} parent=1 // loop_footer_branch
      %15 = sbr.rel target = $region3
    $region8: #{tpu_custom_call.1} parent=1 // loop_exit
      _
    %3432 = vsyncpa [#allocation3], 1
    %s3433 = scalar_lea.sflag [#allocation3], 1
    %3434 = vsyncpa %s3433, 1

</llo_original>
